<compile_context>
chip_gen: v5e
topology: v5e:2x2
jax: 0.10.0
libtpu: 0.0.40
codegen_flags: <defaults>
</compile_context>

<pallas_src>
import jax
import jax.numpy as jnp
from jax.experimental import pallas as pl
from jax.experimental.pallas import tpu as pltpu


# ----------------------------- Pallas kernel --------------------------------
def deepfm_kernel(idx_ref,                  # SMEM  (B_pad*F,) int32   (prefetched)
                  emb_ref,                  # HBM   (V, 1+E)  f32      (manual DMA)
                  whp_ref,                  # VMEM  (F, 1+E, H) f32    (row 0 / field = 0)
                  bh_ref,                   # VMEM  (1, H)    f32
                  w1_ref,                   # VMEM  (H, H)    bf16
                  b1_ref,                   # VMEM  (1, H)    f32
                  w2_ref,                   # VMEM  (H, H)    bf16
                  b2_ref,                   # VMEM  (1, H)    f32
                  wo_ref,                   # VMEM  (1, H)    f32
                  bias_ref,                 # SMEM  (1,)      f32      (bo + global bias)
                  out_ref,                  # VMEM  (block_b, 1) f32
                  gbuf,                     # VMEM  (F*block_b, 1+E) f32  scratch
                  sem):                     # DMA semaphore (1,)
    nf = whp_ref.shape[0]                   # F
    bb = out_ref.shape[0]                   # block_b
    H = bh_ref.shape[1]
    base = pl.program_id(0) * bb * nf       # offset into the flat idx array

    # ---- fused embedding gather: one DMA per (row, field) from HBM --------
    def gather_start(r):
        for f in range(nf):
            tok = idx_ref[base + r * nf + f]
            pltpu.make_async_copy(emb_ref.at[pl.ds(tok, 1)],
                                  gbuf.at[pl.ds(f * bb + r, 1)],
                                  sem.at[0]).start()

    def gather_wait(r):
        for f in range(nf):
            pltpu.make_async_copy(emb_ref.at[pl.ds(0, 1)],
                                  gbuf.at[pl.ds(f * bb + r, 1)],
                                  sem.at[0]).wait()

    if bb <= 32:                             # small tiles (demo): fully unrolled
        for r in range(bb):
            gather_start(r)
        for r in range(bb):
            gather_wait(r)
    else:                                    # large tiles: bounded code size
        pl.loop(0, bb)(gather_start)
        pl.loop(0, bb)(gather_wait)

    g = gbuf[...]                            # (F*bb, 1+E) f32 gathered rows

    # ---- FM part (f32) + first DNN layer, accumulated per field -----------
    logits = jnp.zeros((bb, 1), jnp.float32)
    cross = jnp.zeros((bb, 1), jnp.float32)
    h = jnp.zeros((bb, H), jnp.float32)
    for f in range(nf):
        gf = g[f * bb:(f + 1) * bb, :]       # (bb, 1+E): [fm1 | fm2 field f]
        logits = logits + gf[:, 0:1]         # 1st-order term
        v = gf[:, 1:]                        # (bb, E) 2nd-order embedding
        s = jnp.sum(v, axis=-1, keepdims=True)
        cross = cross + s * s - jnp.sum(v * v, axis=-1, keepdims=True)
        # zero row for the fm1 slot makes this exactly fm2_flat @ wh
        h = h + jnp.dot(gf, whp_ref[f], preferred_element_type=jnp.float32)
    logits = logits + 0.5 * cross

    # ---- MLP: bf16 operands, f32 accumulation on the MXU ------------------
    h = jnp.maximum(h + bh_ref[...], 0.0)
    h = jnp.dot(h.astype(jnp.bfloat16), w1_ref[...],
                preferred_element_type=jnp.float32) + b1_ref[...]
    h = jnp.maximum(h, 0.0)
    h = jnp.dot(h.astype(jnp.bfloat16), w2_ref[...],
                preferred_element_type=jnp.float32) + b2_ref[...]
    h = jnp.maximum(h, 0.0)

    # N=1 output projection: VPU multiply + lane reduce (no MXU push/pop)
    dnn = jnp.sum(h * wo_ref[...], axis=-1, keepdims=True)

    out_ref[...] = logits + dnn + bias_ref[0]


# ------------------------------ wrapper --------------------------------------
def deepfm_forward(x_tokens, offsets, params, *, block_b=None):
    """x_tokens: (B, F) int32 raw per-field token ids."""
    B, F = x_tokens.shape
    E = params["emb2"].shape[1]
    H = params["wh"].shape[1]

    # ---- one-time parameter prep (layout / dtype) --------------------------
    # fm1 + fm2 tables fused into one (V, 1+E) table: one DMA per (row, field)
    emb_cat = jnp.concatenate(
        [params["emb1"].astype(jnp.float32),
         params["emb2"].astype(jnp.float32)], axis=1)                 # (V, 1+E)
    # hidden_proj weight per field, with a zero row for the fm1 slot
    whp = jnp.concatenate(
        [jnp.zeros((F, 1, H), jnp.float32),
         params["wh"].reshape(F, E, H)], axis=1)                      # (F, 1+E, H)
    w1 = params["w1"].astype(jnp.bfloat16)
    w2 = params["w2"].astype(jnp.bfloat16)
    bh = params["bh"].reshape(1, H)
    b1 = params["b1"].reshape(1, H)
    b2 = params["b2"].reshape(1, H)
    wo = params["wo"].reshape(1, H)                                   # (H,1) -> (1,H)
    bias = (params["bo"] + params["gbias"]).reshape(1)                # folded scalar

    # ---- batch tiling: multiple of 8, >=2 blocks when B >= 16 (v7x) --------
    if block_b is None:
        if B < 16:
            block_b = 8
        else:
            block_b = min(512, max(8, ((B // 2) // 8) * 8))
    n_blocks = pl.cdiv(B, block_b)
    B_pad = n_blocks * block_b

    idx = (x_tokens + offsets).astype(jnp.int32)                      # (B, F)
    if B_pad != B:   # pad with token 0 (valid row); padded outputs sliced off
        idx = jnp.concatenate(
            [idx, jnp.zeros((B_pad - B, F), jnp.int32)], axis=0)
    idx_flat = idx.reshape(-1)                                        # -> SMEM prefetch

    grid_spec = pltpu.PrefetchScalarGridSpec(
        num_scalar_prefetch=1,
        grid=(n_blocks,),
        in_specs=[
            pl.BlockSpec(memory_space=pl.ANY),                        # emb_cat (HBM)
            pl.BlockSpec((F, 1 + E, H), lambda i, _: (0, 0, 0)),      # whp
            pl.BlockSpec((1, H), lambda i, _: (0, 0)),                # bh
            pl.BlockSpec((H, H), lambda i, _: (0, 0)),                # w1 (bf16)
            pl.BlockSpec((1, H), lambda i, _: (0, 0)),                # b1
            pl.BlockSpec((H, H), lambda i, _: (0, 0)),                # w2 (bf16)
            pl.BlockSpec((1, H), lambda i, _: (0, 0)),                # b2
            pl.BlockSpec((1, H), lambda i, _: (0, 0)),                # wo row
            pl.BlockSpec(memory_space=pltpu.MemorySpace.SMEM),        # folded bias
        ],
        out_specs=pl.BlockSpec((block_b, 1), lambda i, _: (i, 0)),
        scratch_shapes=[
            pltpu.VMEM((F * block_b, 1 + E), jnp.float32),            # gather staging
            pltpu.SemaphoreType.DMA((1,)),
        ],
    )

    out = pl.pallas_call(
        deepfm_kernel,
        out_shape=jax.ShapeDtypeStruct((B_pad, 1), jnp.float32),
        grid_spec=grid_spec,
        compiler_params=pltpu.CompilerParams(
            dimension_semantics=("parallel",)),
    )(idx_flat, emb_cat, whp, bh, w1, b1, w2, b2, wo, bias)
    return out[:B]


# --------------------------- parameter init ----------------------------------
def xavier_normal(key, fan_in, fan_out):
    std = jnp.sqrt(2.0 / (fan_in + fan_out))
    return jax.random.normal(key, (fan_in, fan_out), jnp.float32) * std


def init_params(key, vocab_total, n_fields, n_embed, n_hidden):
    ks = jax.random.split(key, 8)
    # nn.Embedding init: normal std=1e-4
    emb1 = jax.random.normal(ks[0], (vocab_total, 1), jnp.float32) * 1e-4
    emb2 = jax.random.normal(ks[1], (vocab_total, n_embed), jnp.float32) * 1e-4
    din = n_embed * n_fields
    return {
        "emb1": emb1,
        "emb2": emb2,
        "wh": xavier_normal(ks[2], din, n_hidden),
        "bh": jnp.zeros((n_hidden,), jnp.float32),
        "w1": xavier_normal(ks[3], n_hidden, n_hidden),
        "b1": jnp.zeros((n_hidden,), jnp.float32),
        "w2": xavier_normal(ks[4], n_hidden, n_hidden),
        "b2": jnp.zeros((n_hidden,), jnp.float32),
        "wo": xavier_normal(ks[5], n_hidden, 1),
        "bo": jnp.zeros((1,), jnp.float32),
        "gbias": jnp.zeros((1,), jnp.float32),   # the extra nn.Parameter bias
    }


# ------------------------------ reference ------------------------------------
def reference_forward(fm1_embed, fm2_embed, params):
    B = fm1_embed.shape[0]
    logits = jnp.sum(fm1_embed, axis=1, keepdims=True)
    fm2_out = 0.5 * (jnp.sum(fm2_embed, axis=-1) ** 2
                     - jnp.sum(fm2_embed ** 2, axis=-1))
    logits = logits + jnp.sum(fm2_out, axis=1, keepdims=True)
    h = fm2_embed.reshape(B, -1) @ params["wh"] + params["bh"]
    h = jnp.maximum(h, 0.0)
    h = jnp.maximum(h @ params["w1"] + params["b1"], 0.0)
    h = jnp.maximum(h @ params["w2"] + params["b2"], 0.0)
    dnn = h @ params["wo"] + params["bo"]
    return logits + dnn + params["gbias"]


# -------------------------------- main ----------------------------------------
if __name__ == "__main__":
    # config: n_sparse=3, n_dense=2 -> 5 fields, n_embed=8, n_hidden=32,
    # bias=True, activation=relu, batch=16
    B, E, H = 16, 8, 32
    vocab_sizes = [7, 5, 9, 4, 6]            # one vocab per field
    F = len(vocab_sizes)
    vocab_total = sum(vocab_sizes)
    offsets = jnp.cumsum(jnp.array([0] + vocab_sizes[:-1], jnp.int32))[None, :]

    key = jax.random.PRNGKey(0)
    k_params, k_x = jax.random.split(key)
    params = init_params(k_params, vocab_total, F, E, H)

    # token ids per field in [0, vocab_size_i)
    cols = []
    for f, vs in enumerate(vocab_sizes):
        kf = jax.random.fold_in(k_x, f)
        cols.append(jax.random.randint(kf, (B, 1), 0, vs, jnp.int32))
    x = jnp.concatenate(cols, axis=1)         # (B, F)

    # Pallas kernel: embedding gather fused in-kernel (block_b=8 -> grid=(2,))
    out = deepfm_forward(x, offsets, params)
    out = jax.block_until_ready(out)

    # f32 reference (gather in plain JAX)
    idx = x + offsets
    fm1_embed = params["emb1"][idx][..., 0]   # (B, F)
    fm2_embed = params["emb2"][idx]           # (B, F, E)
    ref = reference_forward(fm1_embed, fm2_embed, params)

    assert out.shape == (B, 1)
    # bf16 operands on the H x H layers (f32 accumulation) -> relaxed tolerance
    assert jnp.allclose(out, ref, atol=1e-5, rtol=1e-2), (out, ref)
    print("KERNEL_OK")
</pallas_src>

<mosaic_0001>
module attributes {stable_mosaic.version = 11 : i64} {
  func.func @deepfm_kernel(%arg0: i32, %arg1: memref<80xi32, #tpu.memory_space<smem>>, %arg2: memref<31x9xf32, #tpu.memory_space<any>>, %arg3: memref<5x9x32xf32, #tpu.memory_space<vmem>>, %arg4: memref<1x32xf32, #tpu.memory_space<vmem>>, %arg5: memref<32x32xbf16, #tpu.memory_space<vmem>>, %arg6: memref<1x32xf32, #tpu.memory_space<vmem>>, %arg7: memref<32x32xbf16, #tpu.memory_space<vmem>>, %arg8: memref<1x32xf32, #tpu.memory_space<vmem>>, %arg9: memref<1x32xf32, #tpu.memory_space<vmem>>, %arg10: memref<1xf32, #tpu.memory_space<smem>>, %arg11: memref<8x1xf32, #tpu.memory_space<vmem>>, %arg12: memref<40x9xf32, #tpu.memory_space<vmem>>, %arg13: memref<1x!tpu.dma_semaphore, #tpu.memory_space<semaphore_mem>>) attributes {dimension_semantics = [#tpu.dimension_semantics<parallel>], iteration_bounds = array<i64: 2>, scalar_prefetch = 1 : i64, scratch_operands = 2 : i64, tpu.core_type = #tpu.core_type<tc>, window_params = [{}, {pipeline_mode = #tpu.pipeline_mode<synchronous>, transform_indices = @transform_1, window_bounds = array<i64: 5, 9, 32>}, {pipeline_mode = #tpu.pipeline_mode<synchronous>, transform_indices = @transform_2, window_bounds = array<i64: 1, 32>}, {pipeline_mode = #tpu.pipeline_mode<synchronous>, transform_indices = @transform_3, window_bounds = array<i64: 32, 32>}, {pipeline_mode = #tpu.pipeline_mode<synchronous>, transform_indices = @transform_4, window_bounds = array<i64: 1, 32>}, {pipeline_mode = #tpu.pipeline_mode<synchronous>, transform_indices = @transform_5, window_bounds = array<i64: 32, 32>}, {pipeline_mode = #tpu.pipeline_mode<synchronous>, transform_indices = @transform_6, window_bounds = array<i64: 1, 32>}, {pipeline_mode = #tpu.pipeline_mode<synchronous>, transform_indices = @transform_7, window_bounds = array<i64: 1, 32>}, {transform_indices = @transform_8, window_bounds = array<i64: 1>}, {transform_indices = @transform_9, window_bounds = array<i64: 8, 1>}]} {
    %c8_i32 = arith.constant 8 : i32
    %0 = arith.muli %arg0, %c8_i32 : i32
    %c5_i32 = arith.constant 5 : i32
    %1 = arith.muli %0, %c5_i32 : i32
    %c0_i32 = arith.constant 0 : i32
    %2 = arith.addi %1, %c0_i32 : i32
    %c0_i32_0 = arith.constant 0 : i32
    %3 = arith.addi %2, %c0_i32_0 : i32
    %4 = arith.index_cast %3 : i32 to index
    %5 = memref.load %arg1[%4] : memref<80xi32, #tpu.memory_space<smem>>
    %c0_i32_1 = arith.constant 0 : i32
    %c0_i32_2 = arith.constant 0 : i32
    %6 = tpu.memref_slice %arg2[%5, %c0_i32_2] : memref<31x9xf32, #tpu.memory_space<any>> -> memref<1x9xf32, #tpu.memory_space<any>>
    %c0_i32_3 = arith.constant 0 : i32
    %c0_i32_4 = arith.constant 0 : i32
    %7 = tpu.memref_slice %arg12[%c0_i32_3, %c0_i32_4] : memref<40x9xf32, #tpu.memory_space<vmem>> -> memref<1x9xf32, #tpu.memory_space<vmem>>
    %8 = tpu.memref_slice %arg13[%c0_i32_1] : memref<1x!tpu.dma_semaphore, #tpu.memory_space<semaphore_mem>> -> memref<1x!tpu.dma_semaphore, #tpu.memory_space<semaphore_mem>>
    %9 = tpu.memref_squeeze %8 : memref<1x!tpu.dma_semaphore, #tpu.memory_space<semaphore_mem>> -> memref<!tpu.dma_semaphore, #tpu.memory_space<semaphore_mem>>
    tpu.enqueue_dma source(%6 : memref<1x9xf32, #tpu.memory_space<any>>) target(%7 : memref<1x9xf32, #tpu.memory_space<vmem>>) target_semaphore(%9 : memref<!tpu.dma_semaphore, #tpu.memory_space<semaphore_mem>>)
    %c0_i32_5 = arith.constant 0 : i32
    %10 = arith.addi %1, %c0_i32_5 : i32
    %c1_i32 = arith.constant 1 : i32
    %11 = arith.addi %10, %c1_i32 : i32
    %12 = arith.index_cast %11 : i32 to index
    %13 = memref.load %arg1[%12] : memref<80xi32, #tpu.memory_space<smem>>
    %c0_i32_6 = arith.constant 0 : i32
    %c0_i32_7 = arith.constant 0 : i32
    %14 = tpu.memref_slice %arg2[%13, %c0_i32_7] : memref<31x9xf32, #tpu.memory_space<any>> -> memref<1x9xf32, #tpu.memory_space<any>>
    %c8_i32_8 = arith.constant 8 : i32
    %c0_i32_9 = arith.constant 0 : i32
    %15 = tpu.memref_slice %arg12[%c8_i32_8, %c0_i32_9] : memref<40x9xf32, #tpu.memory_space<vmem>> -> memref<1x9xf32, #tpu.memory_space<vmem>>
    %16 = tpu.memref_slice %arg13[%c0_i32_6] : memref<1x!tpu.dma_semaphore, #tpu.memory_space<semaphore_mem>> -> memref<1x!tpu.dma_semaphore, #tpu.memory_space<semaphore_mem>>
    %17 = tpu.memref_squeeze %16 : memref<1x!tpu.dma_semaphore, #tpu.memory_space<semaphore_mem>> -> memref<!tpu.dma_semaphore, #tpu.memory_space<semaphore_mem>>
    tpu.enqueue_dma source(%14 : memref<1x9xf32, #tpu.memory_space<any>>) target(%15 : memref<1x9xf32, #tpu.memory_space<vmem>>) target_semaphore(%17 : memref<!tpu.dma_semaphore, #tpu.memory_space<semaphore_mem>>)
    %c0_i32_10 = arith.constant 0 : i32
    %18 = arith.addi %1, %c0_i32_10 : i32
    %c2_i32 = arith.constant 2 : i32
    %19 = arith.addi %18, %c2_i32 : i32
    %20 = arith.index_cast %19 : i32 to index
    %21 = memref.load %arg1[%20] : memref<80xi32, #tpu.memory_space<smem>>
    %c0_i32_11 = arith.constant 0 : i32
    %c0_i32_12 = arith.constant 0 : i32
    %22 = tpu.memref_slice %arg2[%21, %c0_i32_12] : memref<31x9xf32, #tpu.memory_space<any>> -> memref<1x9xf32, #tpu.memory_space<any>>
    %c16_i32 = arith.constant 16 : i32
    %c0_i32_13 = arith.constant 0 : i32
    %23 = tpu.memref_slice %arg12[%c16_i32, %c0_i32_13] : memref<40x9xf32, #tpu.memory_space<vmem>> -> memref<1x9xf32, #tpu.memory_space<vmem>>
    %24 = tpu.memref_slice %arg13[%c0_i32_11] : memref<1x!tpu.dma_semaphore, #tpu.memory_space<semaphore_mem>> -> memref<1x!tpu.dma_semaphore, #tpu.memory_space<semaphore_mem>>
    %25 = tpu.memref_squeeze %24 : memref<1x!tpu.dma_semaphore, #tpu.memory_space<semaphore_mem>> -> memref<!tpu.dma_semaphore, #tpu.memory_space<semaphore_mem>>
    tpu.enqueue_dma source(%22 : memref<1x9xf32, #tpu.memory_space<any>>) target(%23 : memref<1x9xf32, #tpu.memory_space<vmem>>) target_semaphore(%25 : memref<!tpu.dma_semaphore, #tpu.memory_space<semaphore_mem>>)
    %c0_i32_14 = arith.constant 0 : i32
    %26 = arith.addi %1, %c0_i32_14 : i32
    %c3_i32 = arith.constant 3 : i32
    %27 = arith.addi %26, %c3_i32 : i32
    %28 = arith.index_cast %27 : i32 to index
    %29 = memref.load %arg1[%28] : memref<80xi32, #tpu.memory_space<smem>>
    %c0_i32_15 = arith.constant 0 : i32
    %c0_i32_16 = arith.constant 0 : i32
    %30 = tpu.memref_slice %arg2[%29, %c0_i32_16] : memref<31x9xf32, #tpu.memory_space<any>> -> memref<1x9xf32, #tpu.memory_space<any>>
    %c24_i32 = arith.constant 24 : i32
    %c0_i32_17 = arith.constant 0 : i32
    %31 = tpu.memref_slice %arg12[%c24_i32, %c0_i32_17] : memref<40x9xf32, #tpu.memory_space<vmem>> -> memref<1x9xf32, #tpu.memory_space<vmem>>
    %32 = tpu.memref_slice %arg13[%c0_i32_15] : memref<1x!tpu.dma_semaphore, #tpu.memory_space<semaphore_mem>> -> memref<1x!tpu.dma_semaphore, #tpu.memory_space<semaphore_mem>>
    %33 = tpu.memref_squeeze %32 : memref<1x!tpu.dma_semaphore, #tpu.memory_space<semaphore_mem>> -> memref<!tpu.dma_semaphore, #tpu.memory_space<semaphore_mem>>
    tpu.enqueue_dma source(%30 : memref<1x9xf32, #tpu.memory_space<any>>) target(%31 : memref<1x9xf32, #tpu.memory_space<vmem>>) target_semaphore(%33 : memref<!tpu.dma_semaphore, #tpu.memory_space<semaphore_mem>>)
    %c0_i32_18 = arith.constant 0 : i32
    %34 = arith.addi %1, %c0_i32_18 : i32
    %c4_i32 = arith.constant 4 : i32
    %35 = arith.addi %34, %c4_i32 : i32
    %36 = arith.index_cast %35 : i32 to index
    %37 = memref.load %arg1[%36] : memref<80xi32, #tpu.memory_space<smem>>
    %c0_i32_19 = arith.constant 0 : i32
    %c0_i32_20 = arith.constant 0 : i32
    %38 = tpu.memref_slice %arg2[%37, %c0_i32_20] : memref<31x9xf32, #tpu.memory_space<any>> -> memref<1x9xf32, #tpu.memory_space<any>>
    %c32_i32 = arith.constant 32 : i32
    %c0_i32_21 = arith.constant 0 : i32
    %39 = tpu.memref_slice %arg12[%c32_i32, %c0_i32_21] : memref<40x9xf32, #tpu.memory_space<vmem>> -> memref<1x9xf32, #tpu.memory_space<vmem>>
    %40 = tpu.memref_slice %arg13[%c0_i32_19] : memref<1x!tpu.dma_semaphore, #tpu.memory_space<semaphore_mem>> -> memref<1x!tpu.dma_semaphore, #tpu.memory_space<semaphore_mem>>
    %41 = tpu.memref_squeeze %40 : memref<1x!tpu.dma_semaphore, #tpu.memory_space<semaphore_mem>> -> memref<!tpu.dma_semaphore, #tpu.memory_space<semaphore_mem>>
    tpu.enqueue_dma source(%38 : memref<1x9xf32, #tpu.memory_space<any>>) target(%39 : memref<1x9xf32, #tpu.memory_space<vmem>>) target_semaphore(%41 : memref<!tpu.dma_semaphore, #tpu.memory_space<semaphore_mem>>)
    %c5_i32_22 = arith.constant 5 : i32
    %42 = arith.addi %1, %c5_i32_22 : i32
    %c0_i32_23 = arith.constant 0 : i32
    %43 = arith.addi %42, %c0_i32_23 : i32
    %44 = arith.index_cast %43 : i32 to index
    %45 = memref.load %arg1[%44] : memref<80xi32, #tpu.memory_space<smem>>
    %c0_i32_24 = arith.constant 0 : i32
    %c0_i32_25 = arith.constant 0 : i32
    %46 = tpu.memref_slice %arg2[%45, %c0_i32_25] : memref<31x9xf32, #tpu.memory_space<any>> -> memref<1x9xf32, #tpu.memory_space<any>>
    %c1_i32_26 = arith.constant 1 : i32
    %c0_i32_27 = arith.constant 0 : i32
    %47 = tpu.memref_slice %arg12[%c1_i32_26, %c0_i32_27] : memref<40x9xf32, #tpu.memory_space<vmem>> -> memref<1x9xf32, #tpu.memory_space<vmem>>
    %48 = tpu.memref_slice %arg13[%c0_i32_24] : memref<1x!tpu.dma_semaphore, #tpu.memory_space<semaphore_mem>> -> memref<1x!tpu.dma_semaphore, #tpu.memory_space<semaphore_mem>>
    %49 = tpu.memref_squeeze %48 : memref<1x!tpu.dma_semaphore, #tpu.memory_space<semaphore_mem>> -> memref<!tpu.dma_semaphore, #tpu.memory_space<semaphore_mem>>
    tpu.enqueue_dma source(%46 : memref<1x9xf32, #tpu.memory_space<any>>) target(%47 : memref<1x9xf32, #tpu.memory_space<vmem>>) target_semaphore(%49 : memref<!tpu.dma_semaphore, #tpu.memory_space<semaphore_mem>>)
    %c5_i32_28 = arith.constant 5 : i32
    %50 = arith.addi %1, %c5_i32_28 : i32
    %c1_i32_29 = arith.constant 1 : i32
    %51 = arith.addi %50, %c1_i32_29 : i32
    %52 = arith.index_cast %51 : i32 to index
    %53 = memref.load %arg1[%52] : memref<80xi32, #tpu.memory_space<smem>>
    %c0_i32_30 = arith.constant 0 : i32
    %c0_i32_31 = arith.constant 0 : i32
    %54 = tpu.memref_slice %arg2[%53, %c0_i32_31] : memref<31x9xf32, #tpu.memory_space<any>> -> memref<1x9xf32, #tpu.memory_space<any>>
    %c9_i32 = arith.constant 9 : i32
    %c0_i32_32 = arith.constant 0 : i32
    %55 = tpu.memref_slice %arg12[%c9_i32, %c0_i32_32] : memref<40x9xf32, #tpu.memory_space<vmem>> -> memref<1x9xf32, #tpu.memory_space<vmem>>
    %56 = tpu.memref_slice %arg13[%c0_i32_30] : memref<1x!tpu.dma_semaphore, #tpu.memory_space<semaphore_mem>> -> memref<1x!tpu.dma_semaphore, #tpu.memory_space<semaphore_mem>>
    %57 = tpu.memref_squeeze %56 : memref<1x!tpu.dma_semaphore, #tpu.memory_space<semaphore_mem>> -> memref<!tpu.dma_semaphore, #tpu.memory_space<semaphore_mem>>
    tpu.enqueue_dma source(%54 : memref<1x9xf32, #tpu.memory_space<any>>) target(%55 : memref<1x9xf32, #tpu.memory_space<vmem>>) target_semaphore(%57 : memref<!tpu.dma_semaphore, #tpu.memory_space<semaphore_mem>>)
    %c5_i32_33 = arith.constant 5 : i32
    %58 = arith.addi %1, %c5_i32_33 : i32
    %c2_i32_34 = arith.constant 2 : i32
    %59 = arith.addi %58, %c2_i32_34 : i32
    %60 = arith.index_cast %59 : i32 to index
    %61 = memref.load %arg1[%60] : memref<80xi32, #tpu.memory_space<smem>>
    %c0_i32_35 = arith.constant 0 : i32
    %c0_i32_36 = arith.constant 0 : i32
    %62 = tpu.memref_slice %arg2[%61, %c0_i32_36] : memref<31x9xf32, #tpu.memory_space<any>> -> memref<1x9xf32, #tpu.memory_space<any>>
    %c17_i32 = arith.constant 17 : i32
    %c0_i32_37 = arith.constant 0 : i32
    %63 = tpu.memref_slice %arg12[%c17_i32, %c0_i32_37] : memref<40x9xf32, #tpu.memory_space<vmem>> -> memref<1x9xf32, #tpu.memory_space<vmem>>
    %64 = tpu.memref_slice %arg13[%c0_i32_35] : memref<1x!tpu.dma_semaphore, #tpu.memory_space<semaphore_mem>> -> memref<1x!tpu.dma_semaphore, #tpu.memory_space<semaphore_mem>>
    %65 = tpu.memref_squeeze %64 : memref<1x!tpu.dma_semaphore, #tpu.memory_space<semaphore_mem>> -> memref<!tpu.dma_semaphore, #tpu.memory_space<semaphore_mem>>
    tpu.enqueue_dma source(%62 : memref<1x9xf32, #tpu.memory_space<any>>) target(%63 : memref<1x9xf32, #tpu.memory_space<vmem>>) target_semaphore(%65 : memref<!tpu.dma_semaphore, #tpu.memory_space<semaphore_mem>>)
    %c5_i32_38 = arith.constant 5 : i32
    %66 = arith.addi %1, %c5_i32_38 : i32
    %c3_i32_39 = arith.constant 3 : i32
    %67 = arith.addi %66, %c3_i32_39 : i32
    %68 = arith.index_cast %67 : i32 to index
    %69 = memref.load %arg1[%68] : memref<80xi32, #tpu.memory_space<smem>>
    %c0_i32_40 = arith.constant 0 : i32
    %c0_i32_41 = arith.constant 0 : i32
    %70 = tpu.memref_slice %arg2[%69, %c0_i32_41] : memref<31x9xf32, #tpu.memory_space<any>> -> memref<1x9xf32, #tpu.memory_space<any>>
    %c25_i32 = arith.constant 25 : i32
    %c0_i32_42 = arith.constant 0 : i32
    %71 = tpu.memref_slice %arg12[%c25_i32, %c0_i32_42] : memref<40x9xf32, #tpu.memory_space<vmem>> -> memref<1x9xf32, #tpu.memory_space<vmem>>
    %72 = tpu.memref_slice %arg13[%c0_i32_40] : memref<1x!tpu.dma_semaphore, #tpu.memory_space<semaphore_mem>> -> memref<1x!tpu.dma_semaphore, #tpu.memory_space<semaphore_mem>>
    %73 = tpu.memref_squeeze %72 : memref<1x!tpu.dma_semaphore, #tpu.memory_space<semaphore_mem>> -> memref<!tpu.dma_semaphore, #tpu.memory_space<semaphore_mem>>
    tpu.enqueue_dma source(%70 : memref<1x9xf32, #tpu.memory_space<any>>) target(%71 : memref<1x9xf32, #tpu.memory_space<vmem>>) target_semaphore(%73 : memref<!tpu.dma_semaphore, #tpu.memory_space<semaphore_mem>>)
    %c5_i32_43 = arith.constant 5 : i32
    %74 = arith.addi %1, %c5_i32_43 : i32
    %c4_i32_44 = arith.constant 4 : i32
    %75 = arith.addi %74, %c4_i32_44 : i32
    %76 = arith.index_cast %75 : i32 to index
    %77 = memref.load %arg1[%76] : memref<80xi32, #tpu.memory_space<smem>>
    %c0_i32_45 = arith.constant 0 : i32
    %c0_i32_46 = arith.constant 0 : i32
    %78 = tpu.memref_slice %arg2[%77, %c0_i32_46] : memref<31x9xf32, #tpu.memory_space<any>> -> memref<1x9xf32, #tpu.memory_space<any>>
    %c33_i32 = arith.constant 33 : i32
    %c0_i32_47 = arith.constant 0 : i32
    %79 = tpu.memref_slice %arg12[%c33_i32, %c0_i32_47] : memref<40x9xf32, #tpu.memory_space<vmem>> -> memref<1x9xf32, #tpu.memory_space<vmem>>
    %80 = tpu.memref_slice %arg13[%c0_i32_45] : memref<1x!tpu.dma_semaphore, #tpu.memory_space<semaphore_mem>> -> memref<1x!tpu.dma_semaphore, #tpu.memory_space<semaphore_mem>>
    %81 = tpu.memref_squeeze %80 : memref<1x!tpu.dma_semaphore, #tpu.memory_space<semaphore_mem>> -> memref<!tpu.dma_semaphore, #tpu.memory_space<semaphore_mem>>
    tpu.enqueue_dma source(%78 : memref<1x9xf32, #tpu.memory_space<any>>) target(%79 : memref<1x9xf32, #tpu.memory_space<vmem>>) target_semaphore(%81 : memref<!tpu.dma_semaphore, #tpu.memory_space<semaphore_mem>>)
    %c10_i32 = arith.constant 10 : i32
    %82 = arith.addi %1, %c10_i32 : i32
    %c0_i32_48 = arith.constant 0 : i32
    %83 = arith.addi %82, %c0_i32_48 : i32
    %84 = arith.index_cast %83 : i32 to index
    %85 = memref.load %arg1[%84] : memref<80xi32, #tpu.memory_space<smem>>
    %c0_i32_49 = arith.constant 0 : i32
    %c0_i32_50 = arith.constant 0 : i32
    %86 = tpu.memref_slice %arg2[%85, %c0_i32_50] : memref<31x9xf32, #tpu.memory_space<any>> -> memref<1x9xf32, #tpu.memory_space<any>>
    %c2_i32_51 = arith.constant 2 : i32
    %c0_i32_52 = arith.constant 0 : i32
    %87 = tpu.memref_slice %arg12[%c2_i32_51, %c0_i32_52] : memref<40x9xf32, #tpu.memory_space<vmem>> -> memref<1x9xf32, #tpu.memory_space<vmem>>
    %88 = tpu.memref_slice %arg13[%c0_i32_49] : memref<1x!tpu.dma_semaphore, #tpu.memory_space<semaphore_mem>> -> memref<1x!tpu.dma_semaphore, #tpu.memory_space<semaphore_mem>>
    %89 = tpu.memref_squeeze %88 : memref<1x!tpu.dma_semaphore, #tpu.memory_space<semaphore_mem>> -> memref<!tpu.dma_semaphore, #tpu.memory_space<semaphore_mem>>
    tpu.enqueue_dma source(%86 : memref<1x9xf32, #tpu.memory_space<any>>) target(%87 : memref<1x9xf32, #tpu.memory_space<vmem>>) target_semaphore(%89 : memref<!tpu.dma_semaphore, #tpu.memory_space<semaphore_mem>>)
    %c10_i32_53 = arith.constant 10 : i32
    %90 = arith.addi %1, %c10_i32_53 : i32
    %c1_i32_54 = arith.constant 1 : i32
    %91 = arith.addi %90, %c1_i32_54 : i32
    %92 = arith.index_cast %91 : i32 to index
    %93 = memref.load %arg1[%92] : memref<80xi32, #tpu.memory_space<smem>>
    %c0_i32_55 = arith.constant 0 : i32
    %c0_i32_56 = arith.constant 0 : i32
    %94 = tpu.memref_slice %arg2[%93, %c0_i32_56] : memref<31x9xf32, #tpu.memory_space<any>> -> memref<1x9xf32, #tpu.memory_space<any>>
    %c10_i32_57 = arith.constant 10 : i32
    %c0_i32_58 = arith.constant 0 : i32
    %95 = tpu.memref_slice %arg12[%c10_i32_57, %c0_i32_58] : memref<40x9xf32, #tpu.memory_space<vmem>> -> memref<1x9xf32, #tpu.memory_space<vmem>>
    %96 = tpu.memref_slice %arg13[%c0_i32_55] : memref<1x!tpu.dma_semaphore, #tpu.memory_space<semaphore_mem>> -> memref<1x!tpu.dma_semaphore, #tpu.memory_space<semaphore_mem>>
    %97 = tpu.memref_squeeze %96 : memref<1x!tpu.dma_semaphore, #tpu.memory_space<semaphore_mem>> -> memref<!tpu.dma_semaphore, #tpu.memory_space<semaphore_mem>>
    tpu.enqueue_dma source(%94 : memref<1x9xf32, #tpu.memory_space<any>>) target(%95 : memref<1x9xf32, #tpu.memory_space<vmem>>) target_semaphore(%97 : memref<!tpu.dma_semaphore, #tpu.memory_space<semaphore_mem>>)
    %c10_i32_59 = arith.constant 10 : i32
    %98 = arith.addi %1, %c10_i32_59 : i32
    %c2_i32_60 = arith.constant 2 : i32
    %99 = arith.addi %98, %c2_i32_60 : i32
    %100 = arith.index_cast %99 : i32 to index
    %101 = memref.load %arg1[%100] : memref<80xi32, #tpu.memory_space<smem>>
    %c0_i32_61 = arith.constant 0 : i32
    %c0_i32_62 = arith.constant 0 : i32
    %102 = tpu.memref_slice %arg2[%101, %c0_i32_62] : memref<31x9xf32, #tpu.memory_space<any>> -> memref<1x9xf32, #tpu.memory_space<any>>
    %c18_i32 = arith.constant 18 : i32
    %c0_i32_63 = arith.constant 0 : i32
    %103 = tpu.memref_slice %arg12[%c18_i32, %c0_i32_63] : memref<40x9xf32, #tpu.memory_space<vmem>> -> memref<1x9xf32, #tpu.memory_space<vmem>>
    %104 = tpu.memref_slice %arg13[%c0_i32_61] : memref<1x!tpu.dma_semaphore, #tpu.memory_space<semaphore_mem>> -> memref<1x!tpu.dma_semaphore, #tpu.memory_space<semaphore_mem>>
    %105 = tpu.memref_squeeze %104 : memref<1x!tpu.dma_semaphore, #tpu.memory_space<semaphore_mem>> -> memref<!tpu.dma_semaphore, #tpu.memory_space<semaphore_mem>>
    tpu.enqueue_dma source(%102 : memref<1x9xf32, #tpu.memory_space<any>>) target(%103 : memref<1x9xf32, #tpu.memory_space<vmem>>) target_semaphore(%105 : memref<!tpu.dma_semaphore, #tpu.memory_space<semaphore_mem>>)
    %c10_i32_64 = arith.constant 10 : i32
    %106 = arith.addi %1, %c10_i32_64 : i32
    %c3_i32_65 = arith.constant 3 : i32
    %107 = arith.addi %106, %c3_i32_65 : i32
    %108 = arith.index_cast %107 : i32 to index
    %109 = memref.load %arg1[%108] : memref<80xi32, #tpu.memory_space<smem>>
    %c0_i32_66 = arith.constant 0 : i32
    %c0_i32_67 = arith.constant 0 : i32
    %110 = tpu.memref_slice %arg2[%109, %c0_i32_67] : memref<31x9xf32, #tpu.memory_space<any>> -> memref<1x9xf32, #tpu.memory_space<any>>
    %c26_i32 = arith.constant 26 : i32
    %c0_i32_68 = arith.constant 0 : i32
    %111 = tpu.memref_slice %arg12[%c26_i32, %c0_i32_68] : memref<40x9xf32, #tpu.memory_space<vmem>> -> memref<1x9xf32, #tpu.memory_space<vmem>>
    %112 = tpu.memref_slice %arg13[%c0_i32_66] : memref<1x!tpu.dma_semaphore, #tpu.memory_space<semaphore_mem>> -> memref<1x!tpu.dma_semaphore, #tpu.memory_space<semaphore_mem>>
    %113 = tpu.memref_squeeze %112 : memref<1x!tpu.dma_semaphore, #tpu.memory_space<semaphore_mem>> -> memref<!tpu.dma_semaphore, #tpu.memory_space<semaphore_mem>>
    tpu.enqueue_dma source(%110 : memref<1x9xf32, #tpu.memory_space<any>>) target(%111 : memref<1x9xf32, #tpu.memory_space<vmem>>) target_semaphore(%113 : memref<!tpu.dma_semaphore, #tpu.memory_space<semaphore_mem>>)
    %c10_i32_69 = arith.constant 10 : i32
    %114 = arith.addi %1, %c10_i32_69 : i32
    %c4_i32_70 = arith.constant 4 : i32
    %115 = arith.addi %114, %c4_i32_70 : i32
    %116 = arith.index_cast %115 : i32 to index
    %117 = memref.load %arg1[%116] : memref<80xi32, #tpu.memory_space<smem>>
    %c0_i32_71 = arith.constant 0 : i32
    %c0_i32_72 = arith.constant 0 : i32
    %118 = tpu.memref_slice %arg2[%117, %c0_i32_72] : memref<31x9xf32, #tpu.memory_space<any>> -> memref<1x9xf32, #tpu.memory_space<any>>
    %c34_i32 = arith.constant 34 : i32
    %c0_i32_73 = arith.constant 0 : i32
    %119 = tpu.memref_slice %arg12[%c34_i32, %c0_i32_73] : memref<40x9xf32, #tpu.memory_space<vmem>> -> memref<1x9xf32, #tpu.memory_space<vmem>>
    %120 = tpu.memref_slice %arg13[%c0_i32_71] : memref<1x!tpu.dma_semaphore, #tpu.memory_space<semaphore_mem>> -> memref<1x!tpu.dma_semaphore, #tpu.memory_space<semaphore_mem>>
    %121 = tpu.memref_squeeze %120 : memref<1x!tpu.dma_semaphore, #tpu.memory_space<semaphore_mem>> -> memref<!tpu.dma_semaphore, #tpu.memory_space<semaphore_mem>>
    tpu.enqueue_dma source(%118 : memref<1x9xf32, #tpu.memory_space<any>>) target(%119 : memref<1x9xf32, #tpu.memory_space<vmem>>) target_semaphore(%121 : memref<!tpu.dma_semaphore, #tpu.memory_space<semaphore_mem>>)
    %c15_i32 = arith.constant 15 : i32
    %122 = arith.addi %1, %c15_i32 : i32
    %c0_i32_74 = arith.constant 0 : i32
    %123 = arith.addi %122, %c0_i32_74 : i32
    %124 = arith.index_cast %123 : i32 to index
    %125 = memref.load %arg1[%124] : memref<80xi32, #tpu.memory_space<smem>>
    %c0_i32_75 = arith.constant 0 : i32
    %c0_i32_76 = arith.constant 0 : i32
    %126 = tpu.memref_slice %arg2[%125, %c0_i32_76] : memref<31x9xf32, #tpu.memory_space<any>> -> memref<1x9xf32, #tpu.memory_space<any>>
    %c3_i32_77 = arith.constant 3 : i32
    %c0_i32_78 = arith.constant 0 : i32
    %127 = tpu.memref_slice %arg12[%c3_i32_77, %c0_i32_78] : memref<40x9xf32, #tpu.memory_space<vmem>> -> memref<1x9xf32, #tpu.memory_space<vmem>>
    %128 = tpu.memref_slice %arg13[%c0_i32_75] : memref<1x!tpu.dma_semaphore, #tpu.memory_space<semaphore_mem>> -> memref<1x!tpu.dma_semaphore, #tpu.memory_space<semaphore_mem>>
    %129 = tpu.memref_squeeze %128 : memref<1x!tpu.dma_semaphore, #tpu.memory_space<semaphore_mem>> -> memref<!tpu.dma_semaphore, #tpu.memory_space<semaphore_mem>>
    tpu.enqueue_dma source(%126 : memref<1x9xf32, #tpu.memory_space<any>>) target(%127 : memref<1x9xf32, #tpu.memory_space<vmem>>) target_semaphore(%129 : memref<!tpu.dma_semaphore, #tpu.memory_space<semaphore_mem>>)
    %c15_i32_79 = arith.constant 15 : i32
    %130 = arith.addi %1, %c15_i32_79 : i32
    %c1_i32_80 = arith.constant 1 : i32
    %131 = arith.addi %130, %c1_i32_80 : i32
    %132 = arith.index_cast %131 : i32 to index
    %133 = memref.load %arg1[%132] : memref<80xi32, #tpu.memory_space<smem>>
    %c0_i32_81 = arith.constant 0 : i32
    %c0_i32_82 = arith.constant 0 : i32
    %134 = tpu.memref_slice %arg2[%133, %c0_i32_82] : memref<31x9xf32, #tpu.memory_space<any>> -> memref<1x9xf32, #tpu.memory_space<any>>
    %c11_i32 = arith.constant 11 : i32
    %c0_i32_83 = arith.constant 0 : i32
    %135 = tpu.memref_slice %arg12[%c11_i32, %c0_i32_83] : memref<40x9xf32, #tpu.memory_space<vmem>> -> memref<1x9xf32, #tpu.memory_space<vmem>>
    %136 = tpu.memref_slice %arg13[%c0_i32_81] : memref<1x!tpu.dma_semaphore, #tpu.memory_space<semaphore_mem>> -> memref<1x!tpu.dma_semaphore, #tpu.memory_space<semaphore_mem>>
    %137 = tpu.memref_squeeze %136 : memref<1x!tpu.dma_semaphore, #tpu.memory_space<semaphore_mem>> -> memref<!tpu.dma_semaphore, #tpu.memory_space<semaphore_mem>>
    tpu.enqueue_dma source(%134 : memref<1x9xf32, #tpu.memory_space<any>>) target(%135 : memref<1x9xf32, #tpu.memory_space<vmem>>) target_semaphore(%137 : memref<!tpu.dma_semaphore, #tpu.memory_space<semaphore_mem>>)
    %c15_i32_84 = arith.constant 15 : i32
    %138 = arith.addi %1, %c15_i32_84 : i32
    %c2_i32_85 = arith.constant 2 : i32
    %139 = arith.addi %138, %c2_i32_85 : i32
    %140 = arith.index_cast %139 : i32 to index
    %141 = memref.load %arg1[%140] : memref<80xi32, #tpu.memory_space<smem>>
    %c0_i32_86 = arith.constant 0 : i32
    %c0_i32_87 = arith.constant 0 : i32
    %142 = tpu.memref_slice %arg2[%141, %c0_i32_87] : memref<31x9xf32, #tpu.memory_space<any>> -> memref<1x9xf32, #tpu.memory_space<any>>
    %c19_i32 = arith.constant 19 : i32
    %c0_i32_88 = arith.constant 0 : i32
    %143 = tpu.memref_slice %arg12[%c19_i32, %c0_i32_88] : memref<40x9xf32, #tpu.memory_space<vmem>> -> memref<1x9xf32, #tpu.memory_space<vmem>>
    %144 = tpu.memref_slice %arg13[%c0_i32_86] : memref<1x!tpu.dma_semaphore, #tpu.memory_space<semaphore_mem>> -> memref<1x!tpu.dma_semaphore, #tpu.memory_space<semaphore_mem>>
    %145 = tpu.memref_squeeze %144 : memref<1x!tpu.dma_semaphore, #tpu.memory_space<semaphore_mem>> -> memref<!tpu.dma_semaphore, #tpu.memory_space<semaphore_mem>>
    tpu.enqueue_dma source(%142 : memref<1x9xf32, #tpu.memory_space<any>>) target(%143 : memref<1x9xf32, #tpu.memory_space<vmem>>) target_semaphore(%145 : memref<!tpu.dma_semaphore, #tpu.memory_space<semaphore_mem>>)
    %c15_i32_89 = arith.constant 15 : i32
    %146 = arith.addi %1, %c15_i32_89 : i32
    %c3_i32_90 = arith.constant 3 : i32
    %147 = arith.addi %146, %c3_i32_90 : i32
    %148 = arith.index_cast %147 : i32 to index
    %149 = memref.load %arg1[%148] : memref<80xi32, #tpu.memory_space<smem>>
    %c0_i32_91 = arith.constant 0 : i32
    %c0_i32_92 = arith.constant 0 : i32
    %150 = tpu.memref_slice %arg2[%149, %c0_i32_92] : memref<31x9xf32, #tpu.memory_space<any>> -> memref<1x9xf32, #tpu.memory_space<any>>
    %c27_i32 = arith.constant 27 : i32
    %c0_i32_93 = arith.constant 0 : i32
    %151 = tpu.memref_slice %arg12[%c27_i32, %c0_i32_93] : memref<40x9xf32, #tpu.memory_space<vmem>> -> memref<1x9xf32, #tpu.memory_space<vmem>>
    %152 = tpu.memref_slice %arg13[%c0_i32_91] : memref<1x!tpu.dma_semaphore, #tpu.memory_space<semaphore_mem>> -> memref<1x!tpu.dma_semaphore, #tpu.memory_space<semaphore_mem>>
    %153 = tpu.memref_squeeze %152 : memref<1x!tpu.dma_semaphore, #tpu.memory_space<semaphore_mem>> -> memref<!tpu.dma_semaphore, #tpu.memory_space<semaphore_mem>>
    tpu.enqueue_dma source(%150 : memref<1x9xf32, #tpu.memory_space<any>>) target(%151 : memref<1x9xf32, #tpu.memory_space<vmem>>) target_semaphore(%153 : memref<!tpu.dma_semaphore, #tpu.memory_space<semaphore_mem>>)
    %c15_i32_94 = arith.constant 15 : i32
    %154 = arith.addi %1, %c15_i32_94 : i32
    %c4_i32_95 = arith.constant 4 : i32
    %155 = arith.addi %154, %c4_i32_95 : i32
    %156 = arith.index_cast %155 : i32 to index
    %157 = memref.load %arg1[%156] : memref<80xi32, #tpu.memory_space<smem>>
    %c0_i32_96 = arith.constant 0 : i32
    %c0_i32_97 = arith.constant 0 : i32
    %158 = tpu.memref_slice %arg2[%157, %c0_i32_97] : memref<31x9xf32, #tpu.memory_space<any>> -> memref<1x9xf32, #tpu.memory_space<any>>
    %c35_i32 = arith.constant 35 : i32
    %c0_i32_98 = arith.constant 0 : i32
    %159 = tpu.memref_slice %arg12[%c35_i32, %c0_i32_98] : memref<40x9xf32, #tpu.memory_space<vmem>> -> memref<1x9xf32, #tpu.memory_space<vmem>>
    %160 = tpu.memref_slice %arg13[%c0_i32_96] : memref<1x!tpu.dma_semaphore, #tpu.memory_space<semaphore_mem>> -> memref<1x!tpu.dma_semaphore, #tpu.memory_space<semaphore_mem>>
    %161 = tpu.memref_squeeze %160 : memref<1x!tpu.dma_semaphore, #tpu.memory_space<semaphore_mem>> -> memref<!tpu.dma_semaphore, #tpu.memory_space<semaphore_mem>>
    tpu.enqueue_dma source(%158 : memref<1x9xf32, #tpu.memory_space<any>>) target(%159 : memref<1x9xf32, #tpu.memory_space<vmem>>) target_semaphore(%161 : memref<!tpu.dma_semaphore, #tpu.memory_space<semaphore_mem>>)
    %c20_i32 = arith.constant 20 : i32
    %162 = arith.addi %1, %c20_i32 : i32
    %c0_i32_99 = arith.constant 0 : i32
    %163 = arith.addi %162, %c0_i32_99 : i32
    %164 = arith.index_cast %163 : i32 to index
    %165 = memref.load %arg1[%164] : memref<80xi32, #tpu.memory_space<smem>>
    %c0_i32_100 = arith.constant 0 : i32
    %c0_i32_101 = arith.constant 0 : i32
    %166 = tpu.memref_slice %arg2[%165, %c0_i32_101] : memref<31x9xf32, #tpu.memory_space<any>> -> memref<1x9xf32, #tpu.memory_space<any>>
    %c4_i32_102 = arith.constant 4 : i32
    %c0_i32_103 = arith.constant 0 : i32
    %167 = tpu.memref_slice %arg12[%c4_i32_102, %c0_i32_103] : memref<40x9xf32, #tpu.memory_space<vmem>> -> memref<1x9xf32, #tpu.memory_space<vmem>>
    %168 = tpu.memref_slice %arg13[%c0_i32_100] : memref<1x!tpu.dma_semaphore, #tpu.memory_space<semaphore_mem>> -> memref<1x!tpu.dma_semaphore, #tpu.memory_space<semaphore_mem>>
    %169 = tpu.memref_squeeze %168 : memref<1x!tpu.dma_semaphore, #tpu.memory_space<semaphore_mem>> -> memref<!tpu.dma_semaphore, #tpu.memory_space<semaphore_mem>>
    tpu.enqueue_dma source(%166 : memref<1x9xf32, #tpu.memory_space<any>>) target(%167 : memref<1x9xf32, #tpu.memory_space<vmem>>) target_semaphore(%169 : memref<!tpu.dma_semaphore, #tpu.memory_space<semaphore_mem>>)
    %c20_i32_104 = arith.constant 20 : i32
    %170 = arith.addi %1, %c20_i32_104 : i32
    %c1_i32_105 = arith.constant 1 : i32
    %171 = arith.addi %170, %c1_i32_105 : i32
    %172 = arith.index_cast %171 : i32 to index
    %173 = memref.load %arg1[%172] : memref<80xi32, #tpu.memory_space<smem>>
    %c0_i32_106 = arith.constant 0 : i32
    %c0_i32_107 = arith.constant 0 : i32
    %174 = tpu.memref_slice %arg2[%173, %c0_i32_107] : memref<31x9xf32, #tpu.memory_space<any>> -> memref<1x9xf32, #tpu.memory_space<any>>
    %c12_i32 = arith.constant 12 : i32
    %c0_i32_108 = arith.constant 0 : i32
    %175 = tpu.memref_slice %arg12[%c12_i32, %c0_i32_108] : memref<40x9xf32, #tpu.memory_space<vmem>> -> memref<1x9xf32, #tpu.memory_space<vmem>>
    %176 = tpu.memref_slice %arg13[%c0_i32_106] : memref<1x!tpu.dma_semaphore, #tpu.memory_space<semaphore_mem>> -> memref<1x!tpu.dma_semaphore, #tpu.memory_space<semaphore_mem>>
    %177 = tpu.memref_squeeze %176 : memref<1x!tpu.dma_semaphore, #tpu.memory_space<semaphore_mem>> -> memref<!tpu.dma_semaphore, #tpu.memory_space<semaphore_mem>>
    tpu.enqueue_dma source(%174 : memref<1x9xf32, #tpu.memory_space<any>>) target(%175 : memref<1x9xf32, #tpu.memory_space<vmem>>) target_semaphore(%177 : memref<!tpu.dma_semaphore, #tpu.memory_space<semaphore_mem>>)
    %c20_i32_109 = arith.constant 20 : i32
    %178 = arith.addi %1, %c20_i32_109 : i32
    %c2_i32_110 = arith.constant 2 : i32
    %179 = arith.addi %178, %c2_i32_110 : i32
    %180 = arith.index_cast %179 : i32 to index
    %181 = memref.load %arg1[%180] : memref<80xi32, #tpu.memory_space<smem>>
    %c0_i32_111 = arith.constant 0 : i32
    %c0_i32_112 = arith.constant 0 : i32
    %182 = tpu.memref_slice %arg2[%181, %c0_i32_112] : memref<31x9xf32, #tpu.memory_space<any>> -> memref<1x9xf32, #tpu.memory_space<any>>
    %c20_i32_113 = arith.constant 20 : i32
    %c0_i32_114 = arith.constant 0 : i32
    %183 = tpu.memref_slice %arg12[%c20_i32_113, %c0_i32_114] : memref<40x9xf32, #tpu.memory_space<vmem>> -> memref<1x9xf32, #tpu.memory_space<vmem>>
    %184 = tpu.memref_slice %arg13[%c0_i32_111] : memref<1x!tpu.dma_semaphore, #tpu.memory_space<semaphore_mem>> -> memref<1x!tpu.dma_semaphore, #tpu.memory_space<semaphore_mem>>
    %185 = tpu.memref_squeeze %184 : memref<1x!tpu.dma_semaphore, #tpu.memory_space<semaphore_mem>> -> memref<!tpu.dma_semaphore, #tpu.memory_space<semaphore_mem>>
    tpu.enqueue_dma source(%182 : memref<1x9xf32, #tpu.memory_space<any>>) target(%183 : memref<1x9xf32, #tpu.memory_space<vmem>>) target_semaphore(%185 : memref<!tpu.dma_semaphore, #tpu.memory_space<semaphore_mem>>)
    %c20_i32_115 = arith.constant 20 : i32
    %186 = arith.addi %1, %c20_i32_115 : i32
    %c3_i32_116 = arith.constant 3 : i32
    %187 = arith.addi %186, %c3_i32_116 : i32
    %188 = arith.index_cast %187 : i32 to index
    %189 = memref.load %arg1[%188] : memref<80xi32, #tpu.memory_space<smem>>
    %c0_i32_117 = arith.constant 0 : i32
    %c0_i32_118 = arith.constant 0 : i32
    %190 = tpu.memref_slice %arg2[%189, %c0_i32_118] : memref<31x9xf32, #tpu.memory_space<any>> -> memref<1x9xf32, #tpu.memory_space<any>>
    %c28_i32 = arith.constant 28 : i32
    %c0_i32_119 = arith.constant 0 : i32
    %191 = tpu.memref_slice %arg12[%c28_i32, %c0_i32_119] : memref<40x9xf32, #tpu.memory_space<vmem>> -> memref<1x9xf32, #tpu.memory_space<vmem>>
    %192 = tpu.memref_slice %arg13[%c0_i32_117] : memref<1x!tpu.dma_semaphore, #tpu.memory_space<semaphore_mem>> -> memref<1x!tpu.dma_semaphore, #tpu.memory_space<semaphore_mem>>
    %193 = tpu.memref_squeeze %192 : memref<1x!tpu.dma_semaphore, #tpu.memory_space<semaphore_mem>> -> memref<!tpu.dma_semaphore, #tpu.memory_space<semaphore_mem>>
    tpu.enqueue_dma source(%190 : memref<1x9xf32, #tpu.memory_space<any>>) target(%191 : memref<1x9xf32, #tpu.memory_space<vmem>>) target_semaphore(%193 : memref<!tpu.dma_semaphore, #tpu.memory_space<semaphore_mem>>)
    %c20_i32_120 = arith.constant 20 : i32
    %194 = arith.addi %1, %c20_i32_120 : i32
    %c4_i32_121 = arith.constant 4 : i32
    %195 = arith.addi %194, %c4_i32_121 : i32
    %196 = arith.index_cast %195 : i32 to index
    %197 = memref.load %arg1[%196] : memref<80xi32, #tpu.memory_space<smem>>
    %c0_i32_122 = arith.constant 0 : i32
    %c0_i32_123 = arith.constant 0 : i32
    %198 = tpu.memref_slice %arg2[%197, %c0_i32_123] : memref<31x9xf32, #tpu.memory_space<any>> -> memref<1x9xf32, #tpu.memory_space<any>>
    %c36_i32 = arith.constant 36 : i32
    %c0_i32_124 = arith.constant 0 : i32
    %199 = tpu.memref_slice %arg12[%c36_i32, %c0_i32_124] : memref<40x9xf32, #tpu.memory_space<vmem>> -> memref<1x9xf32, #tpu.memory_space<vmem>>
    %200 = tpu.memref_slice %arg13[%c0_i32_122] : memref<1x!tpu.dma_semaphore, #tpu.memory_space<semaphore_mem>> -> memref<1x!tpu.dma_semaphore, #tpu.memory_space<semaphore_mem>>
    %201 = tpu.memref_squeeze %200 : memref<1x!tpu.dma_semaphore, #tpu.memory_space<semaphore_mem>> -> memref<!tpu.dma_semaphore, #tpu.memory_space<semaphore_mem>>
    tpu.enqueue_dma source(%198 : memref<1x9xf32, #tpu.memory_space<any>>) target(%199 : memref<1x9xf32, #tpu.memory_space<vmem>>) target_semaphore(%201 : memref<!tpu.dma_semaphore, #tpu.memory_space<semaphore_mem>>)
    %c25_i32_125 = arith.constant 25 : i32
    %202 = arith.addi %1, %c25_i32_125 : i32
    %c0_i32_126 = arith.constant 0 : i32
    %203 = arith.addi %202, %c0_i32_126 : i32
    %204 = arith.index_cast %203 : i32 to index
    %205 = memref.load %arg1[%204] : memref<80xi32, #tpu.memory_space<smem>>
    %c0_i32_127 = arith.constant 0 : i32
    %c0_i32_128 = arith.constant 0 : i32
    %206 = tpu.memref_slice %arg2[%205, %c0_i32_128] : memref<31x9xf32, #tpu.memory_space<any>> -> memref<1x9xf32, #tpu.memory_space<any>>
    %c5_i32_129 = arith.constant 5 : i32
    %c0_i32_130 = arith.constant 0 : i32
    %207 = tpu.memref_slice %arg12[%c5_i32_129, %c0_i32_130] : memref<40x9xf32, #tpu.memory_space<vmem>> -> memref<1x9xf32, #tpu.memory_space<vmem>>
    %208 = tpu.memref_slice %arg13[%c0_i32_127] : memref<1x!tpu.dma_semaphore, #tpu.memory_space<semaphore_mem>> -> memref<1x!tpu.dma_semaphore, #tpu.memory_space<semaphore_mem>>
    %209 = tpu.memref_squeeze %208 : memref<1x!tpu.dma_semaphore, #tpu.memory_space<semaphore_mem>> -> memref<!tpu.dma_semaphore, #tpu.memory_space<semaphore_mem>>
    tpu.enqueue_dma source(%206 : memref<1x9xf32, #tpu.memory_space<any>>) target(%207 : memref<1x9xf32, #tpu.memory_space<vmem>>) target_semaphore(%209 : memref<!tpu.dma_semaphore, #tpu.memory_space<semaphore_mem>>)
    %c25_i32_131 = arith.constant 25 : i32
    %210 = arith.addi %1, %c25_i32_131 : i32
    %c1_i32_132 = arith.constant 1 : i32
    %211 = arith.addi %210, %c1_i32_132 : i32
    %212 = arith.index_cast %211 : i32 to index
    %213 = memref.load %arg1[%212] : memref<80xi32, #tpu.memory_space<smem>>
    %c0_i32_133 = arith.constant 0 : i32
    %c0_i32_134 = arith.constant 0 : i32
    %214 = tpu.memref_slice %arg2[%213, %c0_i32_134] : memref<31x9xf32, #tpu.memory_space<any>> -> memref<1x9xf32, #tpu.memory_space<any>>
    %c13_i32 = arith.constant 13 : i32
    %c0_i32_135 = arith.constant 0 : i32
    %215 = tpu.memref_slice %arg12[%c13_i32, %c0_i32_135] : memref<40x9xf32, #tpu.memory_space<vmem>> -> memref<1x9xf32, #tpu.memory_space<vmem>>
    %216 = tpu.memref_slice %arg13[%c0_i32_133] : memref<1x!tpu.dma_semaphore, #tpu.memory_space<semaphore_mem>> -> memref<1x!tpu.dma_semaphore, #tpu.memory_space<semaphore_mem>>
    %217 = tpu.memref_squeeze %216 : memref<1x!tpu.dma_semaphore, #tpu.memory_space<semaphore_mem>> -> memref<!tpu.dma_semaphore, #tpu.memory_space<semaphore_mem>>
    tpu.enqueue_dma source(%214 : memref<1x9xf32, #tpu.memory_space<any>>) target(%215 : memref<1x9xf32, #tpu.memory_space<vmem>>) target_semaphore(%217 : memref<!tpu.dma_semaphore, #tpu.memory_space<semaphore_mem>>)
    %c25_i32_136 = arith.constant 25 : i32
    %218 = arith.addi %1, %c25_i32_136 : i32
    %c2_i32_137 = arith.constant 2 : i32
    %219 = arith.addi %218, %c2_i32_137 : i32
    %220 = arith.index_cast %219 : i32 to index
    %221 = memref.load %arg1[%220] : memref<80xi32, #tpu.memory_space<smem>>
    %c0_i32_138 = arith.constant 0 : i32
    %c0_i32_139 = arith.constant 0 : i32
    %222 = tpu.memref_slice %arg2[%221, %c0_i32_139] : memref<31x9xf32, #tpu.memory_space<any>> -> memref<1x9xf32, #tpu.memory_space<any>>
    %c21_i32 = arith.constant 21 : i32
    %c0_i32_140 = arith.constant 0 : i32
    %223 = tpu.memref_slice %arg12[%c21_i32, %c0_i32_140] : memref<40x9xf32, #tpu.memory_space<vmem>> -> memref<1x9xf32, #tpu.memory_space<vmem>>
    %224 = tpu.memref_slice %arg13[%c0_i32_138] : memref<1x!tpu.dma_semaphore, #tpu.memory_space<semaphore_mem>> -> memref<1x!tpu.dma_semaphore, #tpu.memory_space<semaphore_mem>>
    %225 = tpu.memref_squeeze %224 : memref<1x!tpu.dma_semaphore, #tpu.memory_space<semaphore_mem>> -> memref<!tpu.dma_semaphore, #tpu.memory_space<semaphore_mem>>
    tpu.enqueue_dma source(%222 : memref<1x9xf32, #tpu.memory_space<any>>) target(%223 : memref<1x9xf32, #tpu.memory_space<vmem>>) target_semaphore(%225 : memref<!tpu.dma_semaphore, #tpu.memory_space<semaphore_mem>>)
    %c25_i32_141 = arith.constant 25 : i32
    %226 = arith.addi %1, %c25_i32_141 : i32
    %c3_i32_142 = arith.constant 3 : i32
    %227 = arith.addi %226, %c3_i32_142 : i32
    %228 = arith.index_cast %227 : i32 to index
    %229 = memref.load %arg1[%228] : memref<80xi32, #tpu.memory_space<smem>>
    %c0_i32_143 = arith.constant 0 : i32
    %c0_i32_144 = arith.constant 0 : i32
    %230 = tpu.memref_slice %arg2[%229, %c0_i32_144] : memref<31x9xf32, #tpu.memory_space<any>> -> memref<1x9xf32, #tpu.memory_space<any>>
    %c29_i32 = arith.constant 29 : i32
    %c0_i32_145 = arith.constant 0 : i32
    %231 = tpu.memref_slice %arg12[%c29_i32, %c0_i32_145] : memref<40x9xf32, #tpu.memory_space<vmem>> -> memref<1x9xf32, #tpu.memory_space<vmem>>
    %232 = tpu.memref_slice %arg13[%c0_i32_143] : memref<1x!tpu.dma_semaphore, #tpu.memory_space<semaphore_mem>> -> memref<1x!tpu.dma_semaphore, #tpu.memory_space<semaphore_mem>>
    %233 = tpu.memref_squeeze %232 : memref<1x!tpu.dma_semaphore, #tpu.memory_space<semaphore_mem>> -> memref<!tpu.dma_semaphore, #tpu.memory_space<semaphore_mem>>
    tpu.enqueue_dma source(%230 : memref<1x9xf32, #tpu.memory_space<any>>) target(%231 : memref<1x9xf32, #tpu.memory_space<vmem>>) target_semaphore(%233 : memref<!tpu.dma_semaphore, #tpu.memory_space<semaphore_mem>>)
    %c25_i32_146 = arith.constant 25 : i32
    %234 = arith.addi %1, %c25_i32_146 : i32
    %c4_i32_147 = arith.constant 4 : i32
    %235 = arith.addi %234, %c4_i32_147 : i32
    %236 = arith.index_cast %235 : i32 to index
    %237 = memref.load %arg1[%236] : memref<80xi32, #tpu.memory_space<smem>>
    %c0_i32_148 = arith.constant 0 : i32
    %c0_i32_149 = arith.constant 0 : i32
    %238 = tpu.memref_slice %arg2[%237, %c0_i32_149] : memref<31x9xf32, #tpu.memory_space<any>> -> memref<1x9xf32, #tpu.memory_space<any>>
    %c37_i32 = arith.constant 37 : i32
    %c0_i32_150 = arith.constant 0 : i32
    %239 = tpu.memref_slice %arg12[%c37_i32, %c0_i32_150] : memref<40x9xf32, #tpu.memory_space<vmem>> -> memref<1x9xf32, #tpu.memory_space<vmem>>
    %240 = tpu.memref_slice %arg13[%c0_i32_148] : memref<1x!tpu.dma_semaphore, #tpu.memory_space<semaphore_mem>> -> memref<1x!tpu.dma_semaphore, #tpu.memory_space<semaphore_mem>>
    %241 = tpu.memref_squeeze %240 : memref<1x!tpu.dma_semaphore, #tpu.memory_space<semaphore_mem>> -> memref<!tpu.dma_semaphore, #tpu.memory_space<semaphore_mem>>
    tpu.enqueue_dma source(%238 : memref<1x9xf32, #tpu.memory_space<any>>) target(%239 : memref<1x9xf32, #tpu.memory_space<vmem>>) target_semaphore(%241 : memref<!tpu.dma_semaphore, #tpu.memory_space<semaphore_mem>>)
    %c30_i32 = arith.constant 30 : i32
    %242 = arith.addi %1, %c30_i32 : i32
    %c0_i32_151 = arith.constant 0 : i32
    %243 = arith.addi %242, %c0_i32_151 : i32
    %244 = arith.index_cast %243 : i32 to index
    %245 = memref.load %arg1[%244] : memref<80xi32, #tpu.memory_space<smem>>
    %c0_i32_152 = arith.constant 0 : i32
    %c0_i32_153 = arith.constant 0 : i32
    %246 = tpu.memref_slice %arg2[%245, %c0_i32_153] : memref<31x9xf32, #tpu.memory_space<any>> -> memref<1x9xf32, #tpu.memory_space<any>>
    %c6_i32 = arith.constant 6 : i32
    %c0_i32_154 = arith.constant 0 : i32
    %247 = tpu.memref_slice %arg12[%c6_i32, %c0_i32_154] : memref<40x9xf32, #tpu.memory_space<vmem>> -> memref<1x9xf32, #tpu.memory_space<vmem>>
    %248 = tpu.memref_slice %arg13[%c0_i32_152] : memref<1x!tpu.dma_semaphore, #tpu.memory_space<semaphore_mem>> -> memref<1x!tpu.dma_semaphore, #tpu.memory_space<semaphore_mem>>
    %249 = tpu.memref_squeeze %248 : memref<1x!tpu.dma_semaphore, #tpu.memory_space<semaphore_mem>> -> memref<!tpu.dma_semaphore, #tpu.memory_space<semaphore_mem>>
    tpu.enqueue_dma source(%246 : memref<1x9xf32, #tpu.memory_space<any>>) target(%247 : memref<1x9xf32, #tpu.memory_space<vmem>>) target_semaphore(%249 : memref<!tpu.dma_semaphore, #tpu.memory_space<semaphore_mem>>)
    %c30_i32_155 = arith.constant 30 : i32
    %250 = arith.addi %1, %c30_i32_155 : i32
    %c1_i32_156 = arith.constant 1 : i32
    %251 = arith.addi %250, %c1_i32_156 : i32
    %252 = arith.index_cast %251 : i32 to index
    %253 = memref.load %arg1[%252] : memref<80xi32, #tpu.memory_space<smem>>
    %c0_i32_157 = arith.constant 0 : i32
    %c0_i32_158 = arith.constant 0 : i32
    %254 = tpu.memref_slice %arg2[%253, %c0_i32_158] : memref<31x9xf32, #tpu.memory_space<any>> -> memref<1x9xf32, #tpu.memory_space<any>>
    %c14_i32 = arith.constant 14 : i32
    %c0_i32_159 = arith.constant 0 : i32
    %255 = tpu.memref_slice %arg12[%c14_i32, %c0_i32_159] : memref<40x9xf32, #tpu.memory_space<vmem>> -> memref<1x9xf32, #tpu.memory_space<vmem>>
    %256 = tpu.memref_slice %arg13[%c0_i32_157] : memref<1x!tpu.dma_semaphore, #tpu.memory_space<semaphore_mem>> -> memref<1x!tpu.dma_semaphore, #tpu.memory_space<semaphore_mem>>
    %257 = tpu.memref_squeeze %256 : memref<1x!tpu.dma_semaphore, #tpu.memory_space<semaphore_mem>> -> memref<!tpu.dma_semaphore, #tpu.memory_space<semaphore_mem>>
    tpu.enqueue_dma source(%254 : memref<1x9xf32, #tpu.memory_space<any>>) target(%255 : memref<1x9xf32, #tpu.memory_space<vmem>>) target_semaphore(%257 : memref<!tpu.dma_semaphore, #tpu.memory_space<semaphore_mem>>)
    %c30_i32_160 = arith.constant 30 : i32
    %258 = arith.addi %1, %c30_i32_160 : i32
    %c2_i32_161 = arith.constant 2 : i32
    %259 = arith.addi %258, %c2_i32_161 : i32
    %260 = arith.index_cast %259 : i32 to index
    %261 = memref.load %arg1[%260] : memref<80xi32, #tpu.memory_space<smem>>
    %c0_i32_162 = arith.constant 0 : i32
    %c0_i32_163 = arith.constant 0 : i32
    %262 = tpu.memref_slice %arg2[%261, %c0_i32_163] : memref<31x9xf32, #tpu.memory_space<any>> -> memref<1x9xf32, #tpu.memory_space<any>>
    %c22_i32 = arith.constant 22 : i32
    %c0_i32_164 = arith.constant 0 : i32
    %263 = tpu.memref_slice %arg12[%c22_i32, %c0_i32_164] : memref<40x9xf32, #tpu.memory_space<vmem>> -> memref<1x9xf32, #tpu.memory_space<vmem>>
    %264 = tpu.memref_slice %arg13[%c0_i32_162] : memref<1x!tpu.dma_semaphore, #tpu.memory_space<semaphore_mem>> -> memref<1x!tpu.dma_semaphore, #tpu.memory_space<semaphore_mem>>
    %265 = tpu.memref_squeeze %264 : memref<1x!tpu.dma_semaphore, #tpu.memory_space<semaphore_mem>> -> memref<!tpu.dma_semaphore, #tpu.memory_space<semaphore_mem>>
    tpu.enqueue_dma source(%262 : memref<1x9xf32, #tpu.memory_space<any>>) target(%263 : memref<1x9xf32, #tpu.memory_space<vmem>>) target_semaphore(%265 : memref<!tpu.dma_semaphore, #tpu.memory_space<semaphore_mem>>)
    %c30_i32_165 = arith.constant 30 : i32
    %266 = arith.addi %1, %c30_i32_165 : i32
    %c3_i32_166 = arith.constant 3 : i32
    %267 = arith.addi %266, %c3_i32_166 : i32
    %268 = arith.index_cast %267 : i32 to index
    %269 = memref.load %arg1[%268] : memref<80xi32, #tpu.memory_space<smem>>
    %c0_i32_167 = arith.constant 0 : i32
    %c0_i32_168 = arith.constant 0 : i32
    %270 = tpu.memref_slice %arg2[%269, %c0_i32_168] : memref<31x9xf32, #tpu.memory_space<any>> -> memref<1x9xf32, #tpu.memory_space<any>>
    %c30_i32_169 = arith.constant 30 : i32
    %c0_i32_170 = arith.constant 0 : i32
    %271 = tpu.memref_slice %arg12[%c30_i32_169, %c0_i32_170] : memref<40x9xf32, #tpu.memory_space<vmem>> -> memref<1x9xf32, #tpu.memory_space<vmem>>
    %272 = tpu.memref_slice %arg13[%c0_i32_167] : memref<1x!tpu.dma_semaphore, #tpu.memory_space<semaphore_mem>> -> memref<1x!tpu.dma_semaphore, #tpu.memory_space<semaphore_mem>>
    %273 = tpu.memref_squeeze %272 : memref<1x!tpu.dma_semaphore, #tpu.memory_space<semaphore_mem>> -> memref<!tpu.dma_semaphore, #tpu.memory_space<semaphore_mem>>
    tpu.enqueue_dma source(%270 : memref<1x9xf32, #tpu.memory_space<any>>) target(%271 : memref<1x9xf32, #tpu.memory_space<vmem>>) target_semaphore(%273 : memref<!tpu.dma_semaphore, #tpu.memory_space<semaphore_mem>>)
    %c30_i32_171 = arith.constant 30 : i32
    %274 = arith.addi %1, %c30_i32_171 : i32
    %c4_i32_172 = arith.constant 4 : i32
    %275 = arith.addi %274, %c4_i32_172 : i32
    %276 = arith.index_cast %275 : i32 to index
    %277 = memref.load %arg1[%276] : memref<80xi32, #tpu.memory_space<smem>>
    %c0_i32_173 = arith.constant 0 : i32
    %c0_i32_174 = arith.constant 0 : i32
    %278 = tpu.memref_slice %arg2[%277, %c0_i32_174] : memref<31x9xf32, #tpu.memory_space<any>> -> memref<1x9xf32, #tpu.memory_space<any>>
    %c38_i32 = arith.constant 38 : i32
    %c0_i32_175 = arith.constant 0 : i32
    %279 = tpu.memref_slice %arg12[%c38_i32, %c0_i32_175] : memref<40x9xf32, #tpu.memory_space<vmem>> -> memref<1x9xf32, #tpu.memory_space<vmem>>
    %280 = tpu.memref_slice %arg13[%c0_i32_173] : memref<1x!tpu.dma_semaphore, #tpu.memory_space<semaphore_mem>> -> memref<1x!tpu.dma_semaphore, #tpu.memory_space<semaphore_mem>>
    %281 = tpu.memref_squeeze %280 : memref<1x!tpu.dma_semaphore, #tpu.memory_space<semaphore_mem>> -> memref<!tpu.dma_semaphore, #tpu.memory_space<semaphore_mem>>
    tpu.enqueue_dma source(%278 : memref<1x9xf32, #tpu.memory_space<any>>) target(%279 : memref<1x9xf32, #tpu.memory_space<vmem>>) target_semaphore(%281 : memref<!tpu.dma_semaphore, #tpu.memory_space<semaphore_mem>>)
    %c35_i32_176 = arith.constant 35 : i32
    %282 = arith.addi %1, %c35_i32_176 : i32
    %c0_i32_177 = arith.constant 0 : i32
    %283 = arith.addi %282, %c0_i32_177 : i32
    %284 = arith.index_cast %283 : i32 to index
    %285 = memref.load %arg1[%284] : memref<80xi32, #tpu.memory_space<smem>>
    %c0_i32_178 = arith.constant 0 : i32
    %c0_i32_179 = arith.constant 0 : i32
    %286 = tpu.memref_slice %arg2[%285, %c0_i32_179] : memref<31x9xf32, #tpu.memory_space<any>> -> memref<1x9xf32, #tpu.memory_space<any>>
    %c7_i32 = arith.constant 7 : i32
    %c0_i32_180 = arith.constant 0 : i32
    %287 = tpu.memref_slice %arg12[%c7_i32, %c0_i32_180] : memref<40x9xf32, #tpu.memory_space<vmem>> -> memref<1x9xf32, #tpu.memory_space<vmem>>
    %288 = tpu.memref_slice %arg13[%c0_i32_178] : memref<1x!tpu.dma_semaphore, #tpu.memory_space<semaphore_mem>> -> memref<1x!tpu.dma_semaphore, #tpu.memory_space<semaphore_mem>>
    %289 = tpu.memref_squeeze %288 : memref<1x!tpu.dma_semaphore, #tpu.memory_space<semaphore_mem>> -> memref<!tpu.dma_semaphore, #tpu.memory_space<semaphore_mem>>
    tpu.enqueue_dma source(%286 : memref<1x9xf32, #tpu.memory_space<any>>) target(%287 : memref<1x9xf32, #tpu.memory_space<vmem>>) target_semaphore(%289 : memref<!tpu.dma_semaphore, #tpu.memory_space<semaphore_mem>>)
    %c35_i32_181 = arith.constant 35 : i32
    %290 = arith.addi %1, %c35_i32_181 : i32
    %c1_i32_182 = arith.constant 1 : i32
    %291 = arith.addi %290, %c1_i32_182 : i32
    %292 = arith.index_cast %291 : i32 to index
    %293 = memref.load %arg1[%292] : memref<80xi32, #tpu.memory_space<smem>>
    %c0_i32_183 = arith.constant 0 : i32
    %c0_i32_184 = arith.constant 0 : i32
    %294 = tpu.memref_slice %arg2[%293, %c0_i32_184] : memref<31x9xf32, #tpu.memory_space<any>> -> memref<1x9xf32, #tpu.memory_space<any>>
    %c15_i32_185 = arith.constant 15 : i32
    %c0_i32_186 = arith.constant 0 : i32
    %295 = tpu.memref_slice %arg12[%c15_i32_185, %c0_i32_186] : memref<40x9xf32, #tpu.memory_space<vmem>> -> memref<1x9xf32, #tpu.memory_space<vmem>>
    %296 = tpu.memref_slice %arg13[%c0_i32_183] : memref<1x!tpu.dma_semaphore, #tpu.memory_space<semaphore_mem>> -> memref<1x!tpu.dma_semaphore, #tpu.memory_space<semaphore_mem>>
    %297 = tpu.memref_squeeze %296 : memref<1x!tpu.dma_semaphore, #tpu.memory_space<semaphore_mem>> -> memref<!tpu.dma_semaphore, #tpu.memory_space<semaphore_mem>>
    tpu.enqueue_dma source(%294 : memref<1x9xf32, #tpu.memory_space<any>>) target(%295 : memref<1x9xf32, #tpu.memory_space<vmem>>) target_semaphore(%297 : memref<!tpu.dma_semaphore, #tpu.memory_space<semaphore_mem>>)
    %c35_i32_187 = arith.constant 35 : i32
    %298 = arith.addi %1, %c35_i32_187 : i32
    %c2_i32_188 = arith.constant 2 : i32
    %299 = arith.addi %298, %c2_i32_188 : i32
    %300 = arith.index_cast %299 : i32 to index
    %301 = memref.load %arg1[%300] : memref<80xi32, #tpu.memory_space<smem>>
    %c0_i32_189 = arith.constant 0 : i32
    %c0_i32_190 = arith.constant 0 : i32
    %302 = tpu.memref_slice %arg2[%301, %c0_i32_190] : memref<31x9xf32, #tpu.memory_space<any>> -> memref<1x9xf32, #tpu.memory_space<any>>
    %c23_i32 = arith.constant 23 : i32
    %c0_i32_191 = arith.constant 0 : i32
    %303 = tpu.memref_slice %arg12[%c23_i32, %c0_i32_191] : memref<40x9xf32, #tpu.memory_space<vmem>> -> memref<1x9xf32, #tpu.memory_space<vmem>>
    %304 = tpu.memref_slice %arg13[%c0_i32_189] : memref<1x!tpu.dma_semaphore, #tpu.memory_space<semaphore_mem>> -> memref<1x!tpu.dma_semaphore, #tpu.memory_space<semaphore_mem>>
    %305 = tpu.memref_squeeze %304 : memref<1x!tpu.dma_semaphore, #tpu.memory_space<semaphore_mem>> -> memref<!tpu.dma_semaphore, #tpu.memory_space<semaphore_mem>>
    tpu.enqueue_dma source(%302 : memref<1x9xf32, #tpu.memory_space<any>>) target(%303 : memref<1x9xf32, #tpu.memory_space<vmem>>) target_semaphore(%305 : memref<!tpu.dma_semaphore, #tpu.memory_space<semaphore_mem>>)
    %c35_i32_192 = arith.constant 35 : i32
    %306 = arith.addi %1, %c35_i32_192 : i32
    %c3_i32_193 = arith.constant 3 : i32
    %307 = arith.addi %306, %c3_i32_193 : i32
    %308 = arith.index_cast %307 : i32 to index
    %309 = memref.load %arg1[%308] : memref<80xi32, #tpu.memory_space<smem>>
    %c0_i32_194 = arith.constant 0 : i32
    %c0_i32_195 = arith.constant 0 : i32
    %310 = tpu.memref_slice %arg2[%309, %c0_i32_195] : memref<31x9xf32, #tpu.memory_space<any>> -> memref<1x9xf32, #tpu.memory_space<any>>
    %c31_i32 = arith.constant 31 : i32
    %c0_i32_196 = arith.constant 0 : i32
    %311 = tpu.memref_slice %arg12[%c31_i32, %c0_i32_196] : memref<40x9xf32, #tpu.memory_space<vmem>> -> memref<1x9xf32, #tpu.memory_space<vmem>>
    %312 = tpu.memref_slice %arg13[%c0_i32_194] : memref<1x!tpu.dma_semaphore, #tpu.memory_space<semaphore_mem>> -> memref<1x!tpu.dma_semaphore, #tpu.memory_space<semaphore_mem>>
    %313 = tpu.memref_squeeze %312 : memref<1x!tpu.dma_semaphore, #tpu.memory_space<semaphore_mem>> -> memref<!tpu.dma_semaphore, #tpu.memory_space<semaphore_mem>>
    tpu.enqueue_dma source(%310 : memref<1x9xf32, #tpu.memory_space<any>>) target(%311 : memref<1x9xf32, #tpu.memory_space<vmem>>) target_semaphore(%313 : memref<!tpu.dma_semaphore, #tpu.memory_space<semaphore_mem>>)
    %c35_i32_197 = arith.constant 35 : i32
    %314 = arith.addi %1, %c35_i32_197 : i32
    %c4_i32_198 = arith.constant 4 : i32
    %315 = arith.addi %314, %c4_i32_198 : i32
    %316 = arith.index_cast %315 : i32 to index
    %317 = memref.load %arg1[%316] : memref<80xi32, #tpu.memory_space<smem>>
    %c0_i32_199 = arith.constant 0 : i32
    %c0_i32_200 = arith.constant 0 : i32
    %318 = tpu.memref_slice %arg2[%317, %c0_i32_200] : memref<31x9xf32, #tpu.memory_space<any>> -> memref<1x9xf32, #tpu.memory_space<any>>
    %c39_i32 = arith.constant 39 : i32
    %c0_i32_201 = arith.constant 0 : i32
    %319 = tpu.memref_slice %arg12[%c39_i32, %c0_i32_201] : memref<40x9xf32, #tpu.memory_space<vmem>> -> memref<1x9xf32, #tpu.memory_space<vmem>>
    %320 = tpu.memref_slice %arg13[%c0_i32_199] : memref<1x!tpu.dma_semaphore, #tpu.memory_space<semaphore_mem>> -> memref<1x!tpu.dma_semaphore, #tpu.memory_space<semaphore_mem>>
    %321 = tpu.memref_squeeze %320 : memref<1x!tpu.dma_semaphore, #tpu.memory_space<semaphore_mem>> -> memref<!tpu.dma_semaphore, #tpu.memory_space<semaphore_mem>>
    tpu.enqueue_dma source(%318 : memref<1x9xf32, #tpu.memory_space<any>>) target(%319 : memref<1x9xf32, #tpu.memory_space<vmem>>) target_semaphore(%321 : memref<!tpu.dma_semaphore, #tpu.memory_space<semaphore_mem>>)
    %c0_i32_202 = arith.constant 0 : i32
    %c0_i32_203 = arith.constant 0 : i32
    %c0_i32_204 = arith.constant 0 : i32
    %322 = tpu.memref_slice %arg2[%c0_i32_203, %c0_i32_204] : memref<31x9xf32, #tpu.memory_space<any>> -> memref<1x9xf32, #tpu.memory_space<any>>
    %c0_i32_205 = arith.constant 0 : i32
    %c0_i32_206 = arith.constant 0 : i32
    %323 = tpu.memref_slice %arg12[%c0_i32_205, %c0_i32_206] : memref<40x9xf32, #tpu.memory_space<vmem>> -> memref<1x9xf32, #tpu.memory_space<vmem>>
    %324 = tpu.memref_slice %arg13[%c0_i32_202] : memref<1x!tpu.dma_semaphore, #tpu.memory_space<semaphore_mem>> -> memref<1x!tpu.dma_semaphore, #tpu.memory_space<semaphore_mem>>
    %325 = tpu.memref_squeeze %324 : memref<1x!tpu.dma_semaphore, #tpu.memory_space<semaphore_mem>> -> memref<!tpu.dma_semaphore, #tpu.memory_space<semaphore_mem>>
    tpu.wait_dma2 semaphore(%325 : memref<!tpu.dma_semaphore, #tpu.memory_space<semaphore_mem>>) src(%322 : memref<1x9xf32, #tpu.memory_space<any>>) dst(%323 : memref<1x9xf32, #tpu.memory_space<vmem>>)
    %c0_i32_207 = arith.constant 0 : i32
    %c0_i32_208 = arith.constant 0 : i32
    %c0_i32_209 = arith.constant 0 : i32
    %326 = tpu.memref_slice %arg2[%c0_i32_208, %c0_i32_209] : memref<31x9xf32, #tpu.memory_space<any>> -> memref<1x9xf32, #tpu.memory_space<any>>
    %c8_i32_210 = arith.constant 8 : i32
    %c0_i32_211 = arith.constant 0 : i32
    %327 = tpu.memref_slice %arg12[%c8_i32_210, %c0_i32_211] : memref<40x9xf32, #tpu.memory_space<vmem>> -> memref<1x9xf32, #tpu.memory_space<vmem>>
    %328 = tpu.memref_slice %arg13[%c0_i32_207] : memref<1x!tpu.dma_semaphore, #tpu.memory_space<semaphore_mem>> -> memref<1x!tpu.dma_semaphore, #tpu.memory_space<semaphore_mem>>
    %329 = tpu.memref_squeeze %328 : memref<1x!tpu.dma_semaphore, #tpu.memory_space<semaphore_mem>> -> memref<!tpu.dma_semaphore, #tpu.memory_space<semaphore_mem>>
    tpu.wait_dma2 semaphore(%329 : memref<!tpu.dma_semaphore, #tpu.memory_space<semaphore_mem>>) src(%326 : memref<1x9xf32, #tpu.memory_space<any>>) dst(%327 : memref<1x9xf32, #tpu.memory_space<vmem>>)
    %c0_i32_212 = arith.constant 0 : i32
    %c0_i32_213 = arith.constant 0 : i32
    %c0_i32_214 = arith.constant 0 : i32
    %330 = tpu.memref_slice %arg2[%c0_i32_213, %c0_i32_214] : memref<31x9xf32, #tpu.memory_space<any>> -> memref<1x9xf32, #tpu.memory_space<any>>
    %c16_i32_215 = arith.constant 16 : i32
    %c0_i32_216 = arith.constant 0 : i32
    %331 = tpu.memref_slice %arg12[%c16_i32_215, %c0_i32_216] : memref<40x9xf32, #tpu.memory_space<vmem>> -> memref<1x9xf32, #tpu.memory_space<vmem>>
    %332 = tpu.memref_slice %arg13[%c0_i32_212] : memref<1x!tpu.dma_semaphore, #tpu.memory_space<semaphore_mem>> -> memref<1x!tpu.dma_semaphore, #tpu.memory_space<semaphore_mem>>
    %333 = tpu.memref_squeeze %332 : memref<1x!tpu.dma_semaphore, #tpu.memory_space<semaphore_mem>> -> memref<!tpu.dma_semaphore, #tpu.memory_space<semaphore_mem>>
    tpu.wait_dma2 semaphore(%333 : memref<!tpu.dma_semaphore, #tpu.memory_space<semaphore_mem>>) src(%330 : memref<1x9xf32, #tpu.memory_space<any>>) dst(%331 : memref<1x9xf32, #tpu.memory_space<vmem>>)
    %c0_i32_217 = arith.constant 0 : i32
    %c0_i32_218 = arith.constant 0 : i32
    %c0_i32_219 = arith.constant 0 : i32
    %334 = tpu.memref_slice %arg2[%c0_i32_218, %c0_i32_219] : memref<31x9xf32, #tpu.memory_space<any>> -> memref<1x9xf32, #tpu.memory_space<any>>
    %c24_i32_220 = arith.constant 24 : i32
    %c0_i32_221 = arith.constant 0 : i32
    %335 = tpu.memref_slice %arg12[%c24_i32_220, %c0_i32_221] : memref<40x9xf32, #tpu.memory_space<vmem>> -> memref<1x9xf32, #tpu.memory_space<vmem>>
    %336 = tpu.memref_slice %arg13[%c0_i32_217] : memref<1x!tpu.dma_semaphore, #tpu.memory_space<semaphore_mem>> -> memref<1x!tpu.dma_semaphore, #tpu.memory_space<semaphore_mem>>
    %337 = tpu.memref_squeeze %336 : memref<1x!tpu.dma_semaphore, #tpu.memory_space<semaphore_mem>> -> memref<!tpu.dma_semaphore, #tpu.memory_space<semaphore_mem>>
    tpu.wait_dma2 semaphore(%337 : memref<!tpu.dma_semaphore, #tpu.memory_space<semaphore_mem>>) src(%334 : memref<1x9xf32, #tpu.memory_space<any>>) dst(%335 : memref<1x9xf32, #tpu.memory_space<vmem>>)
    %c0_i32_222 = arith.constant 0 : i32
    %c0_i32_223 = arith.constant 0 : i32
    %c0_i32_224 = arith.constant 0 : i32
    %338 = tpu.memref_slice %arg2[%c0_i32_223, %c0_i32_224] : memref<31x9xf32, #tpu.memory_space<any>> -> memref<1x9xf32, #tpu.memory_space<any>>
    %c32_i32_225 = arith.constant 32 : i32
    %c0_i32_226 = arith.constant 0 : i32
    %339 = tpu.memref_slice %arg12[%c32_i32_225, %c0_i32_226] : memref<40x9xf32, #tpu.memory_space<vmem>> -> memref<1x9xf32, #tpu.memory_space<vmem>>
    %340 = tpu.memref_slice %arg13[%c0_i32_222] : memref<1x!tpu.dma_semaphore, #tpu.memory_space<semaphore_mem>> -> memref<1x!tpu.dma_semaphore, #tpu.memory_space<semaphore_mem>>
    %341 = tpu.memref_squeeze %340 : memref<1x!tpu.dma_semaphore, #tpu.memory_space<semaphore_mem>> -> memref<!tpu.dma_semaphore, #tpu.memory_space<semaphore_mem>>
    tpu.wait_dma2 semaphore(%341 : memref<!tpu.dma_semaphore, #tpu.memory_space<semaphore_mem>>) src(%338 : memref<1x9xf32, #tpu.memory_space<any>>) dst(%339 : memref<1x9xf32, #tpu.memory_space<vmem>>)
    %c0_i32_227 = arith.constant 0 : i32
    %c0_i32_228 = arith.constant 0 : i32
    %c0_i32_229 = arith.constant 0 : i32
    %342 = tpu.memref_slice %arg2[%c0_i32_228, %c0_i32_229] : memref<31x9xf32, #tpu.memory_space<any>> -> memref<1x9xf32, #tpu.memory_space<any>>
    %c1_i32_230 = arith.constant 1 : i32
    %c0_i32_231 = arith.constant 0 : i32
    %343 = tpu.memref_slice %arg12[%c1_i32_230, %c0_i32_231] : memref<40x9xf32, #tpu.memory_space<vmem>> -> memref<1x9xf32, #tpu.memory_space<vmem>>
    %344 = tpu.memref_slice %arg13[%c0_i32_227] : memref<1x!tpu.dma_semaphore, #tpu.memory_space<semaphore_mem>> -> memref<1x!tpu.dma_semaphore, #tpu.memory_space<semaphore_mem>>
    %345 = tpu.memref_squeeze %344 : memref<1x!tpu.dma_semaphore, #tpu.memory_space<semaphore_mem>> -> memref<!tpu.dma_semaphore, #tpu.memory_space<semaphore_mem>>
    tpu.wait_dma2 semaphore(%345 : memref<!tpu.dma_semaphore, #tpu.memory_space<semaphore_mem>>) src(%342 : memref<1x9xf32, #tpu.memory_space<any>>) dst(%343 : memref<1x9xf32, #tpu.memory_space<vmem>>)
    %c0_i32_232 = arith.constant 0 : i32
    %c0_i32_233 = arith.constant 0 : i32
    %c0_i32_234 = arith.constant 0 : i32
    %346 = tpu.memref_slice %arg2[%c0_i32_233, %c0_i32_234] : memref<31x9xf32, #tpu.memory_space<any>> -> memref<1x9xf32, #tpu.memory_space<any>>
    %c9_i32_235 = arith.constant 9 : i32
    %c0_i32_236 = arith.constant 0 : i32
    %347 = tpu.memref_slice %arg12[%c9_i32_235, %c0_i32_236] : memref<40x9xf32, #tpu.memory_space<vmem>> -> memref<1x9xf32, #tpu.memory_space<vmem>>
    %348 = tpu.memref_slice %arg13[%c0_i32_232] : memref<1x!tpu.dma_semaphore, #tpu.memory_space<semaphore_mem>> -> memref<1x!tpu.dma_semaphore, #tpu.memory_space<semaphore_mem>>
    %349 = tpu.memref_squeeze %348 : memref<1x!tpu.dma_semaphore, #tpu.memory_space<semaphore_mem>> -> memref<!tpu.dma_semaphore, #tpu.memory_space<semaphore_mem>>
    tpu.wait_dma2 semaphore(%349 : memref<!tpu.dma_semaphore, #tpu.memory_space<semaphore_mem>>) src(%346 : memref<1x9xf32, #tpu.memory_space<any>>) dst(%347 : memref<1x9xf32, #tpu.memory_space<vmem>>)
    %c0_i32_237 = arith.constant 0 : i32
    %c0_i32_238 = arith.constant 0 : i32
    %c0_i32_239 = arith.constant 0 : i32
    %350 = tpu.memref_slice %arg2[%c0_i32_238, %c0_i32_239] : memref<31x9xf32, #tpu.memory_space<any>> -> memref<1x9xf32, #tpu.memory_space<any>>
    %c17_i32_240 = arith.constant 17 : i32
    %c0_i32_241 = arith.constant 0 : i32
    %351 = tpu.memref_slice %arg12[%c17_i32_240, %c0_i32_241] : memref<40x9xf32, #tpu.memory_space<vmem>> -> memref<1x9xf32, #tpu.memory_space<vmem>>
    %352 = tpu.memref_slice %arg13[%c0_i32_237] : memref<1x!tpu.dma_semaphore, #tpu.memory_space<semaphore_mem>> -> memref<1x!tpu.dma_semaphore, #tpu.memory_space<semaphore_mem>>
    %353 = tpu.memref_squeeze %352 : memref<1x!tpu.dma_semaphore, #tpu.memory_space<semaphore_mem>> -> memref<!tpu.dma_semaphore, #tpu.memory_space<semaphore_mem>>
    tpu.wait_dma2 semaphore(%353 : memref<!tpu.dma_semaphore, #tpu.memory_space<semaphore_mem>>) src(%350 : memref<1x9xf32, #tpu.memory_space<any>>) dst(%351 : memref<1x9xf32, #tpu.memory_space<vmem>>)
    %c0_i32_242 = arith.constant 0 : i32
    %c0_i32_243 = arith.constant 0 : i32
    %c0_i32_244 = arith.constant 0 : i32
    %354 = tpu.memref_slice %arg2[%c0_i32_243, %c0_i32_244] : memref<31x9xf32, #tpu.memory_space<any>> -> memref<1x9xf32, #tpu.memory_space<any>>
    %c25_i32_245 = arith.constant 25 : i32
    %c0_i32_246 = arith.constant 0 : i32
    %355 = tpu.memref_slice %arg12[%c25_i32_245, %c0_i32_246] : memref<40x9xf32, #tpu.memory_space<vmem>> -> memref<1x9xf32, #tpu.memory_space<vmem>>
    %356 = tpu.memref_slice %arg13[%c0_i32_242] : memref<1x!tpu.dma_semaphore, #tpu.memory_space<semaphore_mem>> -> memref<1x!tpu.dma_semaphore, #tpu.memory_space<semaphore_mem>>
    %357 = tpu.memref_squeeze %356 : memref<1x!tpu.dma_semaphore, #tpu.memory_space<semaphore_mem>> -> memref<!tpu.dma_semaphore, #tpu.memory_space<semaphore_mem>>
    tpu.wait_dma2 semaphore(%357 : memref<!tpu.dma_semaphore, #tpu.memory_space<semaphore_mem>>) src(%354 : memref<1x9xf32, #tpu.memory_space<any>>) dst(%355 : memref<1x9xf32, #tpu.memory_space<vmem>>)
    %c0_i32_247 = arith.constant 0 : i32
    %c0_i32_248 = arith.constant 0 : i32
    %c0_i32_249 = arith.constant 0 : i32
    %358 = tpu.memref_slice %arg2[%c0_i32_248, %c0_i32_249] : memref<31x9xf32, #tpu.memory_space<any>> -> memref<1x9xf32, #tpu.memory_space<any>>
    %c33_i32_250 = arith.constant 33 : i32
    %c0_i32_251 = arith.constant 0 : i32
    %359 = tpu.memref_slice %arg12[%c33_i32_250, %c0_i32_251] : memref<40x9xf32, #tpu.memory_space<vmem>> -> memref<1x9xf32, #tpu.memory_space<vmem>>
    %360 = tpu.memref_slice %arg13[%c0_i32_247] : memref<1x!tpu.dma_semaphore, #tpu.memory_space<semaphore_mem>> -> memref<1x!tpu.dma_semaphore, #tpu.memory_space<semaphore_mem>>
    %361 = tpu.memref_squeeze %360 : memref<1x!tpu.dma_semaphore, #tpu.memory_space<semaphore_mem>> -> memref<!tpu.dma_semaphore, #tpu.memory_space<semaphore_mem>>
    tpu.wait_dma2 semaphore(%361 : memref<!tpu.dma_semaphore, #tpu.memory_space<semaphore_mem>>) src(%358 : memref<1x9xf32, #tpu.memory_space<any>>) dst(%359 : memref<1x9xf32, #tpu.memory_space<vmem>>)
    %c0_i32_252 = arith.constant 0 : i32
    %c0_i32_253 = arith.constant 0 : i32
    %c0_i32_254 = arith.constant 0 : i32
    %362 = tpu.memref_slice %arg2[%c0_i32_253, %c0_i32_254] : memref<31x9xf32, #tpu.memory_space<any>> -> memref<1x9xf32, #tpu.memory_space<any>>
    %c2_i32_255 = arith.constant 2 : i32
    %c0_i32_256 = arith.constant 0 : i32
    %363 = tpu.memref_slice %arg12[%c2_i32_255, %c0_i32_256] : memref<40x9xf32, #tpu.memory_space<vmem>> -> memref<1x9xf32, #tpu.memory_space<vmem>>
    %364 = tpu.memref_slice %arg13[%c0_i32_252] : memref<1x!tpu.dma_semaphore, #tpu.memory_space<semaphore_mem>> -> memref<1x!tpu.dma_semaphore, #tpu.memory_space<semaphore_mem>>
    %365 = tpu.memref_squeeze %364 : memref<1x!tpu.dma_semaphore, #tpu.memory_space<semaphore_mem>> -> memref<!tpu.dma_semaphore, #tpu.memory_space<semaphore_mem>>
    tpu.wait_dma2 semaphore(%365 : memref<!tpu.dma_semaphore, #tpu.memory_space<semaphore_mem>>) src(%362 : memref<1x9xf32, #tpu.memory_space<any>>) dst(%363 : memref<1x9xf32, #tpu.memory_space<vmem>>)
    %c0_i32_257 = arith.constant 0 : i32
    %c0_i32_258 = arith.constant 0 : i32
    %c0_i32_259 = arith.constant 0 : i32
    %366 = tpu.memref_slice %arg2[%c0_i32_258, %c0_i32_259] : memref<31x9xf32, #tpu.memory_space<any>> -> memref<1x9xf32, #tpu.memory_space<any>>
    %c10_i32_260 = arith.constant 10 : i32
    %c0_i32_261 = arith.constant 0 : i32
    %367 = tpu.memref_slice %arg12[%c10_i32_260, %c0_i32_261] : memref<40x9xf32, #tpu.memory_space<vmem>> -> memref<1x9xf32, #tpu.memory_space<vmem>>
    %368 = tpu.memref_slice %arg13[%c0_i32_257] : memref<1x!tpu.dma_semaphore, #tpu.memory_space<semaphore_mem>> -> memref<1x!tpu.dma_semaphore, #tpu.memory_space<semaphore_mem>>
    %369 = tpu.memref_squeeze %368 : memref<1x!tpu.dma_semaphore, #tpu.memory_space<semaphore_mem>> -> memref<!tpu.dma_semaphore, #tpu.memory_space<semaphore_mem>>
    tpu.wait_dma2 semaphore(%369 : memref<!tpu.dma_semaphore, #tpu.memory_space<semaphore_mem>>) src(%366 : memref<1x9xf32, #tpu.memory_space<any>>) dst(%367 : memref<1x9xf32, #tpu.memory_space<vmem>>)
    %c0_i32_262 = arith.constant 0 : i32
    %c0_i32_263 = arith.constant 0 : i32
    %c0_i32_264 = arith.constant 0 : i32
    %370 = tpu.memref_slice %arg2[%c0_i32_263, %c0_i32_264] : memref<31x9xf32, #tpu.memory_space<any>> -> memref<1x9xf32, #tpu.memory_space<any>>
    %c18_i32_265 = arith.constant 18 : i32
    %c0_i32_266 = arith.constant 0 : i32
    %371 = tpu.memref_slice %arg12[%c18_i32_265, %c0_i32_266] : memref<40x9xf32, #tpu.memory_space<vmem>> -> memref<1x9xf32, #tpu.memory_space<vmem>>
    %372 = tpu.memref_slice %arg13[%c0_i32_262] : memref<1x!tpu.dma_semaphore, #tpu.memory_space<semaphore_mem>> -> memref<1x!tpu.dma_semaphore, #tpu.memory_space<semaphore_mem>>
    %373 = tpu.memref_squeeze %372 : memref<1x!tpu.dma_semaphore, #tpu.memory_space<semaphore_mem>> -> memref<!tpu.dma_semaphore, #tpu.memory_space<semaphore_mem>>
    tpu.wait_dma2 semaphore(%373 : memref<!tpu.dma_semaphore, #tpu.memory_space<semaphore_mem>>) src(%370 : memref<1x9xf32, #tpu.memory_space<any>>) dst(%371 : memref<1x9xf32, #tpu.memory_space<vmem>>)
    %c0_i32_267 = arith.constant 0 : i32
    %c0_i32_268 = arith.constant 0 : i32
    %c0_i32_269 = arith.constant 0 : i32
    %374 = tpu.memref_slice %arg2[%c0_i32_268, %c0_i32_269] : memref<31x9xf32, #tpu.memory_space<any>> -> memref<1x9xf32, #tpu.memory_space<any>>
    %c26_i32_270 = arith.constant 26 : i32
    %c0_i32_271 = arith.constant 0 : i32
    %375 = tpu.memref_slice %arg12[%c26_i32_270, %c0_i32_271] : memref<40x9xf32, #tpu.memory_space<vmem>> -> memref<1x9xf32, #tpu.memory_space<vmem>>
    %376 = tpu.memref_slice %arg13[%c0_i32_267] : memref<1x!tpu.dma_semaphore, #tpu.memory_space<semaphore_mem>> -> memref<1x!tpu.dma_semaphore, #tpu.memory_space<semaphore_mem>>
    %377 = tpu.memref_squeeze %376 : memref<1x!tpu.dma_semaphore, #tpu.memory_space<semaphore_mem>> -> memref<!tpu.dma_semaphore, #tpu.memory_space<semaphore_mem>>
    tpu.wait_dma2 semaphore(%377 : memref<!tpu.dma_semaphore, #tpu.memory_space<semaphore_mem>>) src(%374 : memref<1x9xf32, #tpu.memory_space<any>>) dst(%375 : memref<1x9xf32, #tpu.memory_space<vmem>>)
    %c0_i32_272 = arith.constant 0 : i32
    %c0_i32_273 = arith.constant 0 : i32
    %c0_i32_274 = arith.constant 0 : i32
    %378 = tpu.memref_slice %arg2[%c0_i32_273, %c0_i32_274] : memref<31x9xf32, #tpu.memory_space<any>> -> memref<1x9xf32, #tpu.memory_space<any>>
    %c34_i32_275 = arith.constant 34 : i32
    %c0_i32_276 = arith.constant 0 : i32
    %379 = tpu.memref_slice %arg12[%c34_i32_275, %c0_i32_276] : memref<40x9xf32, #tpu.memory_space<vmem>> -> memref<1x9xf32, #tpu.memory_space<vmem>>
    %380 = tpu.memref_slice %arg13[%c0_i32_272] : memref<1x!tpu.dma_semaphore, #tpu.memory_space<semaphore_mem>> -> memref<1x!tpu.dma_semaphore, #tpu.memory_space<semaphore_mem>>
    %381 = tpu.memref_squeeze %380 : memref<1x!tpu.dma_semaphore, #tpu.memory_space<semaphore_mem>> -> memref<!tpu.dma_semaphore, #tpu.memory_space<semaphore_mem>>
    tpu.wait_dma2 semaphore(%381 : memref<!tpu.dma_semaphore, #tpu.memory_space<semaphore_mem>>) src(%378 : memref<1x9xf32, #tpu.memory_space<any>>) dst(%379 : memref<1x9xf32, #tpu.memory_space<vmem>>)
    %c0_i32_277 = arith.constant 0 : i32
    %c0_i32_278 = arith.constant 0 : i32
    %c0_i32_279 = arith.constant 0 : i32
    %382 = tpu.memref_slice %arg2[%c0_i32_278, %c0_i32_279] : memref<31x9xf32, #tpu.memory_space<any>> -> memref<1x9xf32, #tpu.memory_space<any>>
    %c3_i32_280 = arith.constant 3 : i32
    %c0_i32_281 = arith.constant 0 : i32
    %383 = tpu.memref_slice %arg12[%c3_i32_280, %c0_i32_281] : memref<40x9xf32, #tpu.memory_space<vmem>> -> memref<1x9xf32, #tpu.memory_space<vmem>>
    %384 = tpu.memref_slice %arg13[%c0_i32_277] : memref<1x!tpu.dma_semaphore, #tpu.memory_space<semaphore_mem>> -> memref<1x!tpu.dma_semaphore, #tpu.memory_space<semaphore_mem>>
    %385 = tpu.memref_squeeze %384 : memref<1x!tpu.dma_semaphore, #tpu.memory_space<semaphore_mem>> -> memref<!tpu.dma_semaphore, #tpu.memory_space<semaphore_mem>>
    tpu.wait_dma2 semaphore(%385 : memref<!tpu.dma_semaphore, #tpu.memory_space<semaphore_mem>>) src(%382 : memref<1x9xf32, #tpu.memory_space<any>>) dst(%383 : memref<1x9xf32, #tpu.memory_space<vmem>>)
    %c0_i32_282 = arith.constant 0 : i32
    %c0_i32_283 = arith.constant 0 : i32
    %c0_i32_284 = arith.constant 0 : i32
    %386 = tpu.memref_slice %arg2[%c0_i32_283, %c0_i32_284] : memref<31x9xf32, #tpu.memory_space<any>> -> memref<1x9xf32, #tpu.memory_space<any>>
    %c11_i32_285 = arith.constant 11 : i32
    %c0_i32_286 = arith.constant 0 : i32
    %387 = tpu.memref_slice %arg12[%c11_i32_285, %c0_i32_286] : memref<40x9xf32, #tpu.memory_space<vmem>> -> memref<1x9xf32, #tpu.memory_space<vmem>>
    %388 = tpu.memref_slice %arg13[%c0_i32_282] : memref<1x!tpu.dma_semaphore, #tpu.memory_space<semaphore_mem>> -> memref<1x!tpu.dma_semaphore, #tpu.memory_space<semaphore_mem>>
    %389 = tpu.memref_squeeze %388 : memref<1x!tpu.dma_semaphore, #tpu.memory_space<semaphore_mem>> -> memref<!tpu.dma_semaphore, #tpu.memory_space<semaphore_mem>>
    tpu.wait_dma2 semaphore(%389 : memref<!tpu.dma_semaphore, #tpu.memory_space<semaphore_mem>>) src(%386 : memref<1x9xf32, #tpu.memory_space<any>>) dst(%387 : memref<1x9xf32, #tpu.memory_space<vmem>>)
    %c0_i32_287 = arith.constant 0 : i32
    %c0_i32_288 = arith.constant 0 : i32
    %c0_i32_289 = arith.constant 0 : i32
    %390 = tpu.memref_slice %arg2[%c0_i32_288, %c0_i32_289] : memref<31x9xf32, #tpu.memory_space<any>> -> memref<1x9xf32, #tpu.memory_space<any>>
    %c19_i32_290 = arith.constant 19 : i32
    %c0_i32_291 = arith.constant 0 : i32
    %391 = tpu.memref_slice %arg12[%c19_i32_290, %c0_i32_291] : memref<40x9xf32, #tpu.memory_space<vmem>> -> memref<1x9xf32, #tpu.memory_space<vmem>>
    %392 = tpu.memref_slice %arg13[%c0_i32_287] : memref<1x!tpu.dma_semaphore, #tpu.memory_space<semaphore_mem>> -> memref<1x!tpu.dma_semaphore, #tpu.memory_space<semaphore_mem>>
    %393 = tpu.memref_squeeze %392 : memref<1x!tpu.dma_semaphore, #tpu.memory_space<semaphore_mem>> -> memref<!tpu.dma_semaphore, #tpu.memory_space<semaphore_mem>>
    tpu.wait_dma2 semaphore(%393 : memref<!tpu.dma_semaphore, #tpu.memory_space<semaphore_mem>>) src(%390 : memref<1x9xf32, #tpu.memory_space<any>>) dst(%391 : memref<1x9xf32, #tpu.memory_space<vmem>>)
    %c0_i32_292 = arith.constant 0 : i32
    %c0_i32_293 = arith.constant 0 : i32
    %c0_i32_294 = arith.constant 0 : i32
    %394 = tpu.memref_slice %arg2[%c0_i32_293, %c0_i32_294] : memref<31x9xf32, #tpu.memory_space<any>> -> memref<1x9xf32, #tpu.memory_space<any>>
    %c27_i32_295 = arith.constant 27 : i32
    %c0_i32_296 = arith.constant 0 : i32
    %395 = tpu.memref_slice %arg12[%c27_i32_295, %c0_i32_296] : memref<40x9xf32, #tpu.memory_space<vmem>> -> memref<1x9xf32, #tpu.memory_space<vmem>>
    %396 = tpu.memref_slice %arg13[%c0_i32_292] : memref<1x!tpu.dma_semaphore, #tpu.memory_space<semaphore_mem>> -> memref<1x!tpu.dma_semaphore, #tpu.memory_space<semaphore_mem>>
    %397 = tpu.memref_squeeze %396 : memref<1x!tpu.dma_semaphore, #tpu.memory_space<semaphore_mem>> -> memref<!tpu.dma_semaphore, #tpu.memory_space<semaphore_mem>>
    tpu.wait_dma2 semaphore(%397 : memref<!tpu.dma_semaphore, #tpu.memory_space<semaphore_mem>>) src(%394 : memref<1x9xf32, #tpu.memory_space<any>>) dst(%395 : memref<1x9xf32, #tpu.memory_space<vmem>>)
    %c0_i32_297 = arith.constant 0 : i32
    %c0_i32_298 = arith.constant 0 : i32
    %c0_i32_299 = arith.constant 0 : i32
    %398 = tpu.memref_slice %arg2[%c0_i32_298, %c0_i32_299] : memref<31x9xf32, #tpu.memory_space<any>> -> memref<1x9xf32, #tpu.memory_space<any>>
    %c35_i32_300 = arith.constant 35 : i32
    %c0_i32_301 = arith.constant 0 : i32
    %399 = tpu.memref_slice %arg12[%c35_i32_300, %c0_i32_301] : memref<40x9xf32, #tpu.memory_space<vmem>> -> memref<1x9xf32, #tpu.memory_space<vmem>>
    %400 = tpu.memref_slice %arg13[%c0_i32_297] : memref<1x!tpu.dma_semaphore, #tpu.memory_space<semaphore_mem>> -> memref<1x!tpu.dma_semaphore, #tpu.memory_space<semaphore_mem>>
    %401 = tpu.memref_squeeze %400 : memref<1x!tpu.dma_semaphore, #tpu.memory_space<semaphore_mem>> -> memref<!tpu.dma_semaphore, #tpu.memory_space<semaphore_mem>>
    tpu.wait_dma2 semaphore(%401 : memref<!tpu.dma_semaphore, #tpu.memory_space<semaphore_mem>>) src(%398 : memref<1x9xf32, #tpu.memory_space<any>>) dst(%399 : memref<1x9xf32, #tpu.memory_space<vmem>>)
    %c0_i32_302 = arith.constant 0 : i32
    %c0_i32_303 = arith.constant 0 : i32
    %c0_i32_304 = arith.constant 0 : i32
    %402 = tpu.memref_slice %arg2[%c0_i32_303, %c0_i32_304] : memref<31x9xf32, #tpu.memory_space<any>> -> memref<1x9xf32, #tpu.memory_space<any>>
    %c4_i32_305 = arith.constant 4 : i32
    %c0_i32_306 = arith.constant 0 : i32
    %403 = tpu.memref_slice %arg12[%c4_i32_305, %c0_i32_306] : memref<40x9xf32, #tpu.memory_space<vmem>> -> memref<1x9xf32, #tpu.memory_space<vmem>>
    %404 = tpu.memref_slice %arg13[%c0_i32_302] : memref<1x!tpu.dma_semaphore, #tpu.memory_space<semaphore_mem>> -> memref<1x!tpu.dma_semaphore, #tpu.memory_space<semaphore_mem>>
    %405 = tpu.memref_squeeze %404 : memref<1x!tpu.dma_semaphore, #tpu.memory_space<semaphore_mem>> -> memref<!tpu.dma_semaphore, #tpu.memory_space<semaphore_mem>>
    tpu.wait_dma2 semaphore(%405 : memref<!tpu.dma_semaphore, #tpu.memory_space<semaphore_mem>>) src(%402 : memref<1x9xf32, #tpu.memory_space<any>>) dst(%403 : memref<1x9xf32, #tpu.memory_space<vmem>>)
    %c0_i32_307 = arith.constant 0 : i32
    %c0_i32_308 = arith.constant 0 : i32
    %c0_i32_309 = arith.constant 0 : i32
    %406 = tpu.memref_slice %arg2[%c0_i32_308, %c0_i32_309] : memref<31x9xf32, #tpu.memory_space<any>> -> memref<1x9xf32, #tpu.memory_space<any>>
    %c12_i32_310 = arith.constant 12 : i32
    %c0_i32_311 = arith.constant 0 : i32
    %407 = tpu.memref_slice %arg12[%c12_i32_310, %c0_i32_311] : memref<40x9xf32, #tpu.memory_space<vmem>> -> memref<1x9xf32, #tpu.memory_space<vmem>>
    %408 = tpu.memref_slice %arg13[%c0_i32_307] : memref<1x!tpu.dma_semaphore, #tpu.memory_space<semaphore_mem>> -> memref<1x!tpu.dma_semaphore, #tpu.memory_space<semaphore_mem>>
    %409 = tpu.memref_squeeze %408 : memref<1x!tpu.dma_semaphore, #tpu.memory_space<semaphore_mem>> -> memref<!tpu.dma_semaphore, #tpu.memory_space<semaphore_mem>>
    tpu.wait_dma2 semaphore(%409 : memref<!tpu.dma_semaphore, #tpu.memory_space<semaphore_mem>>) src(%406 : memref<1x9xf32, #tpu.memory_space<any>>) dst(%407 : memref<1x9xf32, #tpu.memory_space<vmem>>)
    %c0_i32_312 = arith.constant 0 : i32
    %c0_i32_313 = arith.constant 0 : i32
    %c0_i32_314 = arith.constant 0 : i32
    %410 = tpu.memref_slice %arg2[%c0_i32_313, %c0_i32_314] : memref<31x9xf32, #tpu.memory_space<any>> -> memref<1x9xf32, #tpu.memory_space<any>>
    %c20_i32_315 = arith.constant 20 : i32
    %c0_i32_316 = arith.constant 0 : i32
    %411 = tpu.memref_slice %arg12[%c20_i32_315, %c0_i32_316] : memref<40x9xf32, #tpu.memory_space<vmem>> -> memref<1x9xf32, #tpu.memory_space<vmem>>
    %412 = tpu.memref_slice %arg13[%c0_i32_312] : memref<1x!tpu.dma_semaphore, #tpu.memory_space<semaphore_mem>> -> memref<1x!tpu.dma_semaphore, #tpu.memory_space<semaphore_mem>>
    %413 = tpu.memref_squeeze %412 : memref<1x!tpu.dma_semaphore, #tpu.memory_space<semaphore_mem>> -> memref<!tpu.dma_semaphore, #tpu.memory_space<semaphore_mem>>
    tpu.wait_dma2 semaphore(%413 : memref<!tpu.dma_semaphore, #tpu.memory_space<semaphore_mem>>) src(%410 : memref<1x9xf32, #tpu.memory_space<any>>) dst(%411 : memref<1x9xf32, #tpu.memory_space<vmem>>)
    %c0_i32_317 = arith.constant 0 : i32
    %c0_i32_318 = arith.constant 0 : i32
    %c0_i32_319 = arith.constant 0 : i32
    %414 = tpu.memref_slice %arg2[%c0_i32_318, %c0_i32_319] : memref<31x9xf32, #tpu.memory_space<any>> -> memref<1x9xf32, #tpu.memory_space<any>>
    %c28_i32_320 = arith.constant 28 : i32
    %c0_i32_321 = arith.constant 0 : i32
    %415 = tpu.memref_slice %arg12[%c28_i32_320, %c0_i32_321] : memref<40x9xf32, #tpu.memory_space<vmem>> -> memref<1x9xf32, #tpu.memory_space<vmem>>
    %416 = tpu.memref_slice %arg13[%c0_i32_317] : memref<1x!tpu.dma_semaphore, #tpu.memory_space<semaphore_mem>> -> memref<1x!tpu.dma_semaphore, #tpu.memory_space<semaphore_mem>>
    %417 = tpu.memref_squeeze %416 : memref<1x!tpu.dma_semaphore, #tpu.memory_space<semaphore_mem>> -> memref<!tpu.dma_semaphore, #tpu.memory_space<semaphore_mem>>
    tpu.wait_dma2 semaphore(%417 : memref<!tpu.dma_semaphore, #tpu.memory_space<semaphore_mem>>) src(%414 : memref<1x9xf32, #tpu.memory_space<any>>) dst(%415 : memref<1x9xf32, #tpu.memory_space<vmem>>)
    %c0_i32_322 = arith.constant 0 : i32
    %c0_i32_323 = arith.constant 0 : i32
    %c0_i32_324 = arith.constant 0 : i32
    %418 = tpu.memref_slice %arg2[%c0_i32_323, %c0_i32_324] : memref<31x9xf32, #tpu.memory_space<any>> -> memref<1x9xf32, #tpu.memory_space<any>>
    %c36_i32_325 = arith.constant 36 : i32
    %c0_i32_326 = arith.constant 0 : i32
    %419 = tpu.memref_slice %arg12[%c36_i32_325, %c0_i32_326] : memref<40x9xf32, #tpu.memory_space<vmem>> -> memref<1x9xf32, #tpu.memory_space<vmem>>
    %420 = tpu.memref_slice %arg13[%c0_i32_322] : memref<1x!tpu.dma_semaphore, #tpu.memory_space<semaphore_mem>> -> memref<1x!tpu.dma_semaphore, #tpu.memory_space<semaphore_mem>>
    %421 = tpu.memref_squeeze %420 : memref<1x!tpu.dma_semaphore, #tpu.memory_space<semaphore_mem>> -> memref<!tpu.dma_semaphore, #tpu.memory_space<semaphore_mem>>
    tpu.wait_dma2 semaphore(%421 : memref<!tpu.dma_semaphore, #tpu.memory_space<semaphore_mem>>) src(%418 : memref<1x9xf32, #tpu.memory_space<any>>) dst(%419 : memref<1x9xf32, #tpu.memory_space<vmem>>)
    %c0_i32_327 = arith.constant 0 : i32
    %c0_i32_328 = arith.constant 0 : i32
    %c0_i32_329 = arith.constant 0 : i32
    %422 = tpu.memref_slice %arg2[%c0_i32_328, %c0_i32_329] : memref<31x9xf32, #tpu.memory_space<any>> -> memref<1x9xf32, #tpu.memory_space<any>>
    %c5_i32_330 = arith.constant 5 : i32
    %c0_i32_331 = arith.constant 0 : i32
    %423 = tpu.memref_slice %arg12[%c5_i32_330, %c0_i32_331] : memref<40x9xf32, #tpu.memory_space<vmem>> -> memref<1x9xf32, #tpu.memory_space<vmem>>
    %424 = tpu.memref_slice %arg13[%c0_i32_327] : memref<1x!tpu.dma_semaphore, #tpu.memory_space<semaphore_mem>> -> memref<1x!tpu.dma_semaphore, #tpu.memory_space<semaphore_mem>>
    %425 = tpu.memref_squeeze %424 : memref<1x!tpu.dma_semaphore, #tpu.memory_space<semaphore_mem>> -> memref<!tpu.dma_semaphore, #tpu.memory_space<semaphore_mem>>
    tpu.wait_dma2 semaphore(%425 : memref<!tpu.dma_semaphore, #tpu.memory_space<semaphore_mem>>) src(%422 : memref<1x9xf32, #tpu.memory_space<any>>) dst(%423 : memref<1x9xf32, #tpu.memory_space<vmem>>)
    %c0_i32_332 = arith.constant 0 : i32
    %c0_i32_333 = arith.constant 0 : i32
    %c0_i32_334 = arith.constant 0 : i32
    %426 = tpu.memref_slice %arg2[%c0_i32_333, %c0_i32_334] : memref<31x9xf32, #tpu.memory_space<any>> -> memref<1x9xf32, #tpu.memory_space<any>>
    %c13_i32_335 = arith.constant 13 : i32
    %c0_i32_336 = arith.constant 0 : i32
    %427 = tpu.memref_slice %arg12[%c13_i32_335, %c0_i32_336] : memref<40x9xf32, #tpu.memory_space<vmem>> -> memref<1x9xf32, #tpu.memory_space<vmem>>
    %428 = tpu.memref_slice %arg13[%c0_i32_332] : memref<1x!tpu.dma_semaphore, #tpu.memory_space<semaphore_mem>> -> memref<1x!tpu.dma_semaphore, #tpu.memory_space<semaphore_mem>>
    %429 = tpu.memref_squeeze %428 : memref<1x!tpu.dma_semaphore, #tpu.memory_space<semaphore_mem>> -> memref<!tpu.dma_semaphore, #tpu.memory_space<semaphore_mem>>
    tpu.wait_dma2 semaphore(%429 : memref<!tpu.dma_semaphore, #tpu.memory_space<semaphore_mem>>) src(%426 : memref<1x9xf32, #tpu.memory_space<any>>) dst(%427 : memref<1x9xf32, #tpu.memory_space<vmem>>)
    %c0_i32_337 = arith.constant 0 : i32
    %c0_i32_338 = arith.constant 0 : i32
    %c0_i32_339 = arith.constant 0 : i32
    %430 = tpu.memref_slice %arg2[%c0_i32_338, %c0_i32_339] : memref<31x9xf32, #tpu.memory_space<any>> -> memref<1x9xf32, #tpu.memory_space<any>>
    %c21_i32_340 = arith.constant 21 : i32
    %c0_i32_341 = arith.constant 0 : i32
    %431 = tpu.memref_slice %arg12[%c21_i32_340, %c0_i32_341] : memref<40x9xf32, #tpu.memory_space<vmem>> -> memref<1x9xf32, #tpu.memory_space<vmem>>
    %432 = tpu.memref_slice %arg13[%c0_i32_337] : memref<1x!tpu.dma_semaphore, #tpu.memory_space<semaphore_mem>> -> memref<1x!tpu.dma_semaphore, #tpu.memory_space<semaphore_mem>>
    %433 = tpu.memref_squeeze %432 : memref<1x!tpu.dma_semaphore, #tpu.memory_space<semaphore_mem>> -> memref<!tpu.dma_semaphore, #tpu.memory_space<semaphore_mem>>
    tpu.wait_dma2 semaphore(%433 : memref<!tpu.dma_semaphore, #tpu.memory_space<semaphore_mem>>) src(%430 : memref<1x9xf32, #tpu.memory_space<any>>) dst(%431 : memref<1x9xf32, #tpu.memory_space<vmem>>)
    %c0_i32_342 = arith.constant 0 : i32
    %c0_i32_343 = arith.constant 0 : i32
    %c0_i32_344 = arith.constant 0 : i32
    %434 = tpu.memref_slice %arg2[%c0_i32_343, %c0_i32_344] : memref<31x9xf32, #tpu.memory_space<any>> -> memref<1x9xf32, #tpu.memory_space<any>>
    %c29_i32_345 = arith.constant 29 : i32
    %c0_i32_346 = arith.constant 0 : i32
    %435 = tpu.memref_slice %arg12[%c29_i32_345, %c0_i32_346] : memref<40x9xf32, #tpu.memory_space<vmem>> -> memref<1x9xf32, #tpu.memory_space<vmem>>
    %436 = tpu.memref_slice %arg13[%c0_i32_342] : memref<1x!tpu.dma_semaphore, #tpu.memory_space<semaphore_mem>> -> memref<1x!tpu.dma_semaphore, #tpu.memory_space<semaphore_mem>>
    %437 = tpu.memref_squeeze %436 : memref<1x!tpu.dma_semaphore, #tpu.memory_space<semaphore_mem>> -> memref<!tpu.dma_semaphore, #tpu.memory_space<semaphore_mem>>
    tpu.wait_dma2 semaphore(%437 : memref<!tpu.dma_semaphore, #tpu.memory_space<semaphore_mem>>) src(%434 : memref<1x9xf32, #tpu.memory_space<any>>) dst(%435 : memref<1x9xf32, #tpu.memory_space<vmem>>)
    %c0_i32_347 = arith.constant 0 : i32
    %c0_i32_348 = arith.constant 0 : i32
    %c0_i32_349 = arith.constant 0 : i32
    %438 = tpu.memref_slice %arg2[%c0_i32_348, %c0_i32_349] : memref<31x9xf32, #tpu.memory_space<any>> -> memref<1x9xf32, #tpu.memory_space<any>>
    %c37_i32_350 = arith.constant 37 : i32
    %c0_i32_351 = arith.constant 0 : i32
    %439 = tpu.memref_slice %arg12[%c37_i32_350, %c0_i32_351] : memref<40x9xf32, #tpu.memory_space<vmem>> -> memref<1x9xf32, #tpu.memory_space<vmem>>
    %440 = tpu.memref_slice %arg13[%c0_i32_347] : memref<1x!tpu.dma_semaphore, #tpu.memory_space<semaphore_mem>> -> memref<1x!tpu.dma_semaphore, #tpu.memory_space<semaphore_mem>>
    %441 = tpu.memref_squeeze %440 : memref<1x!tpu.dma_semaphore, #tpu.memory_space<semaphore_mem>> -> memref<!tpu.dma_semaphore, #tpu.memory_space<semaphore_mem>>
    tpu.wait_dma2 semaphore(%441 : memref<!tpu.dma_semaphore, #tpu.memory_space<semaphore_mem>>) src(%438 : memref<1x9xf32, #tpu.memory_space<any>>) dst(%439 : memref<1x9xf32, #tpu.memory_space<vmem>>)
    %c0_i32_352 = arith.constant 0 : i32
    %c0_i32_353 = arith.constant 0 : i32
    %c0_i32_354 = arith.constant 0 : i32
    %442 = tpu.memref_slice %arg2[%c0_i32_353, %c0_i32_354] : memref<31x9xf32, #tpu.memory_space<any>> -> memref<1x9xf32, #tpu.memory_space<any>>
    %c6_i32_355 = arith.constant 6 : i32
    %c0_i32_356 = arith.constant 0 : i32
    %443 = tpu.memref_slice %arg12[%c6_i32_355, %c0_i32_356] : memref<40x9xf32, #tpu.memory_space<vmem>> -> memref<1x9xf32, #tpu.memory_space<vmem>>
    %444 = tpu.memref_slice %arg13[%c0_i32_352] : memref<1x!tpu.dma_semaphore, #tpu.memory_space<semaphore_mem>> -> memref<1x!tpu.dma_semaphore, #tpu.memory_space<semaphore_mem>>
    %445 = tpu.memref_squeeze %444 : memref<1x!tpu.dma_semaphore, #tpu.memory_space<semaphore_mem>> -> memref<!tpu.dma_semaphore, #tpu.memory_space<semaphore_mem>>
    tpu.wait_dma2 semaphore(%445 : memref<!tpu.dma_semaphore, #tpu.memory_space<semaphore_mem>>) src(%442 : memref<1x9xf32, #tpu.memory_space<any>>) dst(%443 : memref<1x9xf32, #tpu.memory_space<vmem>>)
    %c0_i32_357 = arith.constant 0 : i32
    %c0_i32_358 = arith.constant 0 : i32
    %c0_i32_359 = arith.constant 0 : i32
    %446 = tpu.memref_slice %arg2[%c0_i32_358, %c0_i32_359] : memref<31x9xf32, #tpu.memory_space<any>> -> memref<1x9xf32, #tpu.memory_space<any>>
    %c14_i32_360 = arith.constant 14 : i32
    %c0_i32_361 = arith.constant 0 : i32
    %447 = tpu.memref_slice %arg12[%c14_i32_360, %c0_i32_361] : memref<40x9xf32, #tpu.memory_space<vmem>> -> memref<1x9xf32, #tpu.memory_space<vmem>>
    %448 = tpu.memref_slice %arg13[%c0_i32_357] : memref<1x!tpu.dma_semaphore, #tpu.memory_space<semaphore_mem>> -> memref<1x!tpu.dma_semaphore, #tpu.memory_space<semaphore_mem>>
    %449 = tpu.memref_squeeze %448 : memref<1x!tpu.dma_semaphore, #tpu.memory_space<semaphore_mem>> -> memref<!tpu.dma_semaphore, #tpu.memory_space<semaphore_mem>>
    tpu.wait_dma2 semaphore(%449 : memref<!tpu.dma_semaphore, #tpu.memory_space<semaphore_mem>>) src(%446 : memref<1x9xf32, #tpu.memory_space<any>>) dst(%447 : memref<1x9xf32, #tpu.memory_space<vmem>>)
    %c0_i32_362 = arith.constant 0 : i32
    %c0_i32_363 = arith.constant 0 : i32
    %c0_i32_364 = arith.constant 0 : i32
    %450 = tpu.memref_slice %arg2[%c0_i32_363, %c0_i32_364] : memref<31x9xf32, #tpu.memory_space<any>> -> memref<1x9xf32, #tpu.memory_space<any>>
    %c22_i32_365 = arith.constant 22 : i32
    %c0_i32_366 = arith.constant 0 : i32
    %451 = tpu.memref_slice %arg12[%c22_i32_365, %c0_i32_366] : memref<40x9xf32, #tpu.memory_space<vmem>> -> memref<1x9xf32, #tpu.memory_space<vmem>>
    %452 = tpu.memref_slice %arg13[%c0_i32_362] : memref<1x!tpu.dma_semaphore, #tpu.memory_space<semaphore_mem>> -> memref<1x!tpu.dma_semaphore, #tpu.memory_space<semaphore_mem>>
    %453 = tpu.memref_squeeze %452 : memref<1x!tpu.dma_semaphore, #tpu.memory_space<semaphore_mem>> -> memref<!tpu.dma_semaphore, #tpu.memory_space<semaphore_mem>>
    tpu.wait_dma2 semaphore(%453 : memref<!tpu.dma_semaphore, #tpu.memory_space<semaphore_mem>>) src(%450 : memref<1x9xf32, #tpu.memory_space<any>>) dst(%451 : memref<1x9xf32, #tpu.memory_space<vmem>>)
    %c0_i32_367 = arith.constant 0 : i32
    %c0_i32_368 = arith.constant 0 : i32
    %c0_i32_369 = arith.constant 0 : i32
    %454 = tpu.memref_slice %arg2[%c0_i32_368, %c0_i32_369] : memref<31x9xf32, #tpu.memory_space<any>> -> memref<1x9xf32, #tpu.memory_space<any>>
    %c30_i32_370 = arith.constant 30 : i32
    %c0_i32_371 = arith.constant 0 : i32
    %455 = tpu.memref_slice %arg12[%c30_i32_370, %c0_i32_371] : memref<40x9xf32, #tpu.memory_space<vmem>> -> memref<1x9xf32, #tpu.memory_space<vmem>>
    %456 = tpu.memref_slice %arg13[%c0_i32_367] : memref<1x!tpu.dma_semaphore, #tpu.memory_space<semaphore_mem>> -> memref<1x!tpu.dma_semaphore, #tpu.memory_space<semaphore_mem>>
    %457 = tpu.memref_squeeze %456 : memref<1x!tpu.dma_semaphore, #tpu.memory_space<semaphore_mem>> -> memref<!tpu.dma_semaphore, #tpu.memory_space<semaphore_mem>>
    tpu.wait_dma2 semaphore(%457 : memref<!tpu.dma_semaphore, #tpu.memory_space<semaphore_mem>>) src(%454 : memref<1x9xf32, #tpu.memory_space<any>>) dst(%455 : memref<1x9xf32, #tpu.memory_space<vmem>>)
    %c0_i32_372 = arith.constant 0 : i32
    %c0_i32_373 = arith.constant 0 : i32
    %c0_i32_374 = arith.constant 0 : i32
    %458 = tpu.memref_slice %arg2[%c0_i32_373, %c0_i32_374] : memref<31x9xf32, #tpu.memory_space<any>> -> memref<1x9xf32, #tpu.memory_space<any>>
    %c38_i32_375 = arith.constant 38 : i32
    %c0_i32_376 = arith.constant 0 : i32
    %459 = tpu.memref_slice %arg12[%c38_i32_375, %c0_i32_376] : memref<40x9xf32, #tpu.memory_space<vmem>> -> memref<1x9xf32, #tpu.memory_space<vmem>>
    %460 = tpu.memref_slice %arg13[%c0_i32_372] : memref<1x!tpu.dma_semaphore, #tpu.memory_space<semaphore_mem>> -> memref<1x!tpu.dma_semaphore, #tpu.memory_space<semaphore_mem>>
    %461 = tpu.memref_squeeze %460 : memref<1x!tpu.dma_semaphore, #tpu.memory_space<semaphore_mem>> -> memref<!tpu.dma_semaphore, #tpu.memory_space<semaphore_mem>>
    tpu.wait_dma2 semaphore(%461 : memref<!tpu.dma_semaphore, #tpu.memory_space<semaphore_mem>>) src(%458 : memref<1x9xf32, #tpu.memory_space<any>>) dst(%459 : memref<1x9xf32, #tpu.memory_space<vmem>>)
    %c0_i32_377 = arith.constant 0 : i32
    %c0_i32_378 = arith.constant 0 : i32
    %c0_i32_379 = arith.constant 0 : i32
    %462 = tpu.memref_slice %arg2[%c0_i32_378, %c0_i32_379] : memref<31x9xf32, #tpu.memory_space<any>> -> memref<1x9xf32, #tpu.memory_space<any>>
    %c7_i32_380 = arith.constant 7 : i32
    %c0_i32_381 = arith.constant 0 : i32
    %463 = tpu.memref_slice %arg12[%c7_i32_380, %c0_i32_381] : memref<40x9xf32, #tpu.memory_space<vmem>> -> memref<1x9xf32, #tpu.memory_space<vmem>>
    %464 = tpu.memref_slice %arg13[%c0_i32_377] : memref<1x!tpu.dma_semaphore, #tpu.memory_space<semaphore_mem>> -> memref<1x!tpu.dma_semaphore, #tpu.memory_space<semaphore_mem>>
    %465 = tpu.memref_squeeze %464 : memref<1x!tpu.dma_semaphore, #tpu.memory_space<semaphore_mem>> -> memref<!tpu.dma_semaphore, #tpu.memory_space<semaphore_mem>>
    tpu.wait_dma2 semaphore(%465 : memref<!tpu.dma_semaphore, #tpu.memory_space<semaphore_mem>>) src(%462 : memref<1x9xf32, #tpu.memory_space<any>>) dst(%463 : memref<1x9xf32, #tpu.memory_space<vmem>>)
    %c0_i32_382 = arith.constant 0 : i32
    %c0_i32_383 = arith.constant 0 : i32
    %c0_i32_384 = arith.constant 0 : i32
    %466 = tpu.memref_slice %arg2[%c0_i32_383, %c0_i32_384] : memref<31x9xf32, #tpu.memory_space<any>> -> memref<1x9xf32, #tpu.memory_space<any>>
    %c15_i32_385 = arith.constant 15 : i32
    %c0_i32_386 = arith.constant 0 : i32
    %467 = tpu.memref_slice %arg12[%c15_i32_385, %c0_i32_386] : memref<40x9xf32, #tpu.memory_space<vmem>> -> memref<1x9xf32, #tpu.memory_space<vmem>>
    %468 = tpu.memref_slice %arg13[%c0_i32_382] : memref<1x!tpu.dma_semaphore, #tpu.memory_space<semaphore_mem>> -> memref<1x!tpu.dma_semaphore, #tpu.memory_space<semaphore_mem>>
    %469 = tpu.memref_squeeze %468 : memref<1x!tpu.dma_semaphore, #tpu.memory_space<semaphore_mem>> -> memref<!tpu.dma_semaphore, #tpu.memory_space<semaphore_mem>>
    tpu.wait_dma2 semaphore(%469 : memref<!tpu.dma_semaphore, #tpu.memory_space<semaphore_mem>>) src(%466 : memref<1x9xf32, #tpu.memory_space<any>>) dst(%467 : memref<1x9xf32, #tpu.memory_space<vmem>>)
    %c0_i32_387 = arith.constant 0 : i32
    %c0_i32_388 = arith.constant 0 : i32
    %c0_i32_389 = arith.constant 0 : i32
    %470 = tpu.memref_slice %arg2[%c0_i32_388, %c0_i32_389] : memref<31x9xf32, #tpu.memory_space<any>> -> memref<1x9xf32, #tpu.memory_space<any>>
    %c23_i32_390 = arith.constant 23 : i32
    %c0_i32_391 = arith.constant 0 : i32
    %471 = tpu.memref_slice %arg12[%c23_i32_390, %c0_i32_391] : memref<40x9xf32, #tpu.memory_space<vmem>> -> memref<1x9xf32, #tpu.memory_space<vmem>>
    %472 = tpu.memref_slice %arg13[%c0_i32_387] : memref<1x!tpu.dma_semaphore, #tpu.memory_space<semaphore_mem>> -> memref<1x!tpu.dma_semaphore, #tpu.memory_space<semaphore_mem>>
    %473 = tpu.memref_squeeze %472 : memref<1x!tpu.dma_semaphore, #tpu.memory_space<semaphore_mem>> -> memref<!tpu.dma_semaphore, #tpu.memory_space<semaphore_mem>>
    tpu.wait_dma2 semaphore(%473 : memref<!tpu.dma_semaphore, #tpu.memory_space<semaphore_mem>>) src(%470 : memref<1x9xf32, #tpu.memory_space<any>>) dst(%471 : memref<1x9xf32, #tpu.memory_space<vmem>>)
    %c0_i32_392 = arith.constant 0 : i32
    %c0_i32_393 = arith.constant 0 : i32
    %c0_i32_394 = arith.constant 0 : i32
    %474 = tpu.memref_slice %arg2[%c0_i32_393, %c0_i32_394] : memref<31x9xf32, #tpu.memory_space<any>> -> memref<1x9xf32, #tpu.memory_space<any>>
    %c31_i32_395 = arith.constant 31 : i32
    %c0_i32_396 = arith.constant 0 : i32
    %475 = tpu.memref_slice %arg12[%c31_i32_395, %c0_i32_396] : memref<40x9xf32, #tpu.memory_space<vmem>> -> memref<1x9xf32, #tpu.memory_space<vmem>>
    %476 = tpu.memref_slice %arg13[%c0_i32_392] : memref<1x!tpu.dma_semaphore, #tpu.memory_space<semaphore_mem>> -> memref<1x!tpu.dma_semaphore, #tpu.memory_space<semaphore_mem>>
    %477 = tpu.memref_squeeze %476 : memref<1x!tpu.dma_semaphore, #tpu.memory_space<semaphore_mem>> -> memref<!tpu.dma_semaphore, #tpu.memory_space<semaphore_mem>>
    tpu.wait_dma2 semaphore(%477 : memref<!tpu.dma_semaphore, #tpu.memory_space<semaphore_mem>>) src(%474 : memref<1x9xf32, #tpu.memory_space<any>>) dst(%475 : memref<1x9xf32, #tpu.memory_space<vmem>>)
    %c0_i32_397 = arith.constant 0 : i32
    %c0_i32_398 = arith.constant 0 : i32
    %c0_i32_399 = arith.constant 0 : i32
    %478 = tpu.memref_slice %arg2[%c0_i32_398, %c0_i32_399] : memref<31x9xf32, #tpu.memory_space<any>> -> memref<1x9xf32, #tpu.memory_space<any>>
    %c39_i32_400 = arith.constant 39 : i32
    %c0_i32_401 = arith.constant 0 : i32
    %479 = tpu.memref_slice %arg12[%c39_i32_400, %c0_i32_401] : memref<40x9xf32, #tpu.memory_space<vmem>> -> memref<1x9xf32, #tpu.memory_space<vmem>>
    %480 = tpu.memref_slice %arg13[%c0_i32_397] : memref<1x!tpu.dma_semaphore, #tpu.memory_space<semaphore_mem>> -> memref<1x!tpu.dma_semaphore, #tpu.memory_space<semaphore_mem>>
    %481 = tpu.memref_squeeze %480 : memref<1x!tpu.dma_semaphore, #tpu.memory_space<semaphore_mem>> -> memref<!tpu.dma_semaphore, #tpu.memory_space<semaphore_mem>>
    tpu.wait_dma2 semaphore(%481 : memref<!tpu.dma_semaphore, #tpu.memory_space<semaphore_mem>>) src(%478 : memref<1x9xf32, #tpu.memory_space<any>>) dst(%479 : memref<1x9xf32, #tpu.memory_space<vmem>>)
    %c0 = arith.constant 0 : index
    %c0_402 = arith.constant 0 : index
    %482 = vector.load %arg12[%c0, %c0_402] : memref<40x9xf32, #tpu.memory_space<vmem>>, vector<40x9xf32>
    %cst = arith.constant 0.000000e+00 : f32
    %483 = vector.broadcast %cst : f32 to vector<8x1xf32>
    %cst_403 = arith.constant 0.000000e+00 : f32
    %484 = vector.broadcast %cst_403 : f32 to vector<8x1xf32>
    %cst_404 = arith.constant 0.000000e+00 : f32
    %485 = vector.broadcast %cst_404 : f32 to vector<8x32xf32>
    %486 = vector.extract_strided_slice %482 {offsets = [0, 0], sizes = [8, 9], strides = [1, 1]} : vector<40x9xf32> to vector<8x9xf32>
    %487 = vector.extract_strided_slice %486 {offsets = [0, 0], sizes = [8, 1], strides = [1, 1]} : vector<8x9xf32> to vector<8x1xf32>
    %488 = arith.addf %483, %487 : vector<8x1xf32>
    %489 = vector.extract_strided_slice %486 {offsets = [0, 1], sizes = [8, 8], strides = [1, 1]} : vector<8x9xf32> to vector<8x8xf32>
    %cst_405 = arith.constant dense<0.000000e+00> : vector<8xf32>
    %490 = vector.multi_reduction <add>, %489, %cst_405 [1] : vector<8x8xf32> to vector<8xf32>
    %491 = vector.shape_cast %490 : vector<8xf32> to vector<8x1xf32>
    %492 = arith.mulf %491, %491 : vector<8x1xf32>
    %493 = arith.addf %484, %492 : vector<8x1xf32>
    %494 = arith.mulf %489, %489 : vector<8x8xf32>
    %cst_406 = arith.constant dense<0.000000e+00> : vector<8xf32>
    %495 = vector.multi_reduction <add>, %494, %cst_406 [1] : vector<8x8xf32> to vector<8xf32>
    %496 = vector.shape_cast %495 : vector<8xf32> to vector<8x1xf32>
    %497 = arith.subf %493, %496 : vector<8x1xf32>
    %c0_407 = arith.constant 0 : index
    %c0_408 = arith.constant 0 : index
    %c0_409 = arith.constant 0 : index
    %498 = vector.load %arg3[%c0_407, %c0_408, %c0_409] : memref<5x9x32xf32, #tpu.memory_space<vmem>>, vector<1x9x32xf32>
    %499 = vector.shape_cast %498 : vector<1x9x32xf32> to vector<9x32xf32>
    %cst_410 = arith.constant dense<0.000000e+00> : vector<8x32xf32>
    %500 = tpu.matmul %486, %499, %cst_410 {dimension_numbers = #tpu.dot_dimension_numbers<[1], [0], [0], [1], [0, 0, 1, 1], [], []>} : vector<8x9xf32>, vector<9x32xf32>, vector<8x32xf32> -> vector<8x32xf32>
    %501 = arith.addf %485, %500 : vector<8x32xf32>
    %502 = vector.extract_strided_slice %482 {offsets = [8, 0], sizes = [8, 9], strides = [1, 1]} : vector<40x9xf32> to vector<8x9xf32>
    %503 = vector.extract_strided_slice %502 {offsets = [0, 0], sizes = [8, 1], strides = [1, 1]} : vector<8x9xf32> to vector<8x1xf32>
    %504 = arith.addf %488, %503 : vector<8x1xf32>
    %505 = vector.extract_strided_slice %502 {offsets = [0, 1], sizes = [8, 8], strides = [1, 1]} : vector<8x9xf32> to vector<8x8xf32>
    %cst_411 = arith.constant dense<0.000000e+00> : vector<8xf32>
    %506 = vector.multi_reduction <add>, %505, %cst_411 [1] : vector<8x8xf32> to vector<8xf32>
    %507 = vector.shape_cast %506 : vector<8xf32> to vector<8x1xf32>
    %508 = arith.mulf %507, %507 : vector<8x1xf32>
    %509 = arith.addf %497, %508 : vector<8x1xf32>
    %510 = arith.mulf %505, %505 : vector<8x8xf32>
    %cst_412 = arith.constant dense<0.000000e+00> : vector<8xf32>
    %511 = vector.multi_reduction <add>, %510, %cst_412 [1] : vector<8x8xf32> to vector<8xf32>
    %512 = vector.shape_cast %511 : vector<8xf32> to vector<8x1xf32>
    %513 = arith.subf %509, %512 : vector<8x1xf32>
    %c1 = arith.constant 1 : index
    %c0_413 = arith.constant 0 : index
    %c0_414 = arith.constant 0 : index
    %514 = vector.load %arg3[%c1, %c0_413, %c0_414] : memref<5x9x32xf32, #tpu.memory_space<vmem>>, vector<1x9x32xf32>
    %515 = vector.shape_cast %514 : vector<1x9x32xf32> to vector<9x32xf32>
    %cst_415 = arith.constant dense<0.000000e+00> : vector<8x32xf32>
    %516 = tpu.matmul %502, %515, %cst_415 {dimension_numbers = #tpu.dot_dimension_numbers<[1], [0], [0], [1], [0, 0, 1, 1], [], []>} : vector<8x9xf32>, vector<9x32xf32>, vector<8x32xf32> -> vector<8x32xf32>
    %517 = arith.addf %501, %516 : vector<8x32xf32>
    %518 = vector.extract_strided_slice %482 {offsets = [16, 0], sizes = [8, 9], strides = [1, 1]} : vector<40x9xf32> to vector<8x9xf32>
    %519 = vector.extract_strided_slice %518 {offsets = [0, 0], sizes = [8, 1], strides = [1, 1]} : vector<8x9xf32> to vector<8x1xf32>
    %520 = arith.addf %504, %519 : vector<8x1xf32>
    %521 = vector.extract_strided_slice %518 {offsets = [0, 1], sizes = [8, 8], strides = [1, 1]} : vector<8x9xf32> to vector<8x8xf32>
    %cst_416 = arith.constant dense<0.000000e+00> : vector<8xf32>
    %522 = vector.multi_reduction <add>, %521, %cst_416 [1] : vector<8x8xf32> to vector<8xf32>
    %523 = vector.shape_cast %522 : vector<8xf32> to vector<8x1xf32>
    %524 = arith.mulf %523, %523 : vector<8x1xf32>
    %525 = arith.addf %513, %524 : vector<8x1xf32>
    %526 = arith.mulf %521, %521 : vector<8x8xf32>
    %cst_417 = arith.constant dense<0.000000e+00> : vector<8xf32>
    %527 = vector.multi_reduction <add>, %526, %cst_417 [1] : vector<8x8xf32> to vector<8xf32>
    %528 = vector.shape_cast %527 : vector<8xf32> to vector<8x1xf32>
    %529 = arith.subf %525, %528 : vector<8x1xf32>
    %c2 = arith.constant 2 : index
    %c0_418 = arith.constant 0 : index
    %c0_419 = arith.constant 0 : index
    %530 = vector.load %arg3[%c2, %c0_418, %c0_419] : memref<5x9x32xf32, #tpu.memory_space<vmem>>, vector<1x9x32xf32>
    %531 = vector.shape_cast %530 : vector<1x9x32xf32> to vector<9x32xf32>
    %cst_420 = arith.constant dense<0.000000e+00> : vector<8x32xf32>
    %532 = tpu.matmul %518, %531, %cst_420 {dimension_numbers = #tpu.dot_dimension_numbers<[1], [0], [0], [1], [0, 0, 1, 1], [], []>} : vector<8x9xf32>, vector<9x32xf32>, vector<8x32xf32> -> vector<8x32xf32>
    %533 = arith.addf %517, %532 : vector<8x32xf32>
    %534 = vector.extract_strided_slice %482 {offsets = [24, 0], sizes = [8, 9], strides = [1, 1]} : vector<40x9xf32> to vector<8x9xf32>
    %535 = vector.extract_strided_slice %534 {offsets = [0, 0], sizes = [8, 1], strides = [1, 1]} : vector<8x9xf32> to vector<8x1xf32>
    %536 = arith.addf %520, %535 : vector<8x1xf32>
    %537 = vector.extract_strided_slice %534 {offsets = [0, 1], sizes = [8, 8], strides = [1, 1]} : vector<8x9xf32> to vector<8x8xf32>
    %cst_421 = arith.constant dense<0.000000e+00> : vector<8xf32>
    %538 = vector.multi_reduction <add>, %537, %cst_421 [1] : vector<8x8xf32> to vector<8xf32>
    %539 = vector.shape_cast %538 : vector<8xf32> to vector<8x1xf32>
    %540 = arith.mulf %539, %539 : vector<8x1xf32>
    %541 = arith.addf %529, %540 : vector<8x1xf32>
    %542 = arith.mulf %537, %537 : vector<8x8xf32>
    %cst_422 = arith.constant dense<0.000000e+00> : vector<8xf32>
    %543 = vector.multi_reduction <add>, %542, %cst_422 [1] : vector<8x8xf32> to vector<8xf32>
    %544 = vector.shape_cast %543 : vector<8xf32> to vector<8x1xf32>
    %545 = arith.subf %541, %544 : vector<8x1xf32>
    %c3 = arith.constant 3 : index
    %c0_423 = arith.constant 0 : index
    %c0_424 = arith.constant 0 : index
    %546 = vector.load %arg3[%c3, %c0_423, %c0_424] : memref<5x9x32xf32, #tpu.memory_space<vmem>>, vector<1x9x32xf32>
    %547 = vector.shape_cast %546 : vector<1x9x32xf32> to vector<9x32xf32>
    %cst_425 = arith.constant dense<0.000000e+00> : vector<8x32xf32>
    %548 = tpu.matmul %534, %547, %cst_425 {dimension_numbers = #tpu.dot_dimension_numbers<[1], [0], [0], [1], [0, 0, 1, 1], [], []>} : vector<8x9xf32>, vector<9x32xf32>, vector<8x32xf32> -> vector<8x32xf32>
    %549 = arith.addf %533, %548 : vector<8x32xf32>
    %550 = vector.extract_strided_slice %482 {offsets = [32, 0], sizes = [8, 9], strides = [1, 1]} : vector<40x9xf32> to vector<8x9xf32>
    %551 = vector.extract_strided_slice %550 {offsets = [0, 0], sizes = [8, 1], strides = [1, 1]} : vector<8x9xf32> to vector<8x1xf32>
    %552 = arith.addf %536, %551 : vector<8x1xf32>
    %553 = vector.extract_strided_slice %550 {offsets = [0, 1], sizes = [8, 8], strides = [1, 1]} : vector<8x9xf32> to vector<8x8xf32>
    %cst_426 = arith.constant dense<0.000000e+00> : vector<8xf32>
    %554 = vector.multi_reduction <add>, %553, %cst_426 [1] : vector<8x8xf32> to vector<8xf32>
    %555 = vector.shape_cast %554 : vector<8xf32> to vector<8x1xf32>
    %556 = arith.mulf %555, %555 : vector<8x1xf32>
    %557 = arith.addf %545, %556 : vector<8x1xf32>
    %558 = arith.mulf %553, %553 : vector<8x8xf32>
    %cst_427 = arith.constant dense<0.000000e+00> : vector<8xf32>
    %559 = vector.multi_reduction <add>, %558, %cst_427 [1] : vector<8x8xf32> to vector<8xf32>
    %560 = vector.shape_cast %559 : vector<8xf32> to vector<8x1xf32>
    %561 = arith.subf %557, %560 : vector<8x1xf32>
    %c4 = arith.constant 4 : index
    %c0_428 = arith.constant 0 : index
    %c0_429 = arith.constant 0 : index
    %562 = vector.load %arg3[%c4, %c0_428, %c0_429] : memref<5x9x32xf32, #tpu.memory_space<vmem>>, vector<1x9x32xf32>
    %563 = vector.shape_cast %562 : vector<1x9x32xf32> to vector<9x32xf32>
    %cst_430 = arith.constant dense<0.000000e+00> : vector<8x32xf32>
    %564 = tpu.matmul %550, %563, %cst_430 {dimension_numbers = #tpu.dot_dimension_numbers<[1], [0], [0], [1], [0, 0, 1, 1], [], []>} : vector<8x9xf32>, vector<9x32xf32>, vector<8x32xf32> -> vector<8x32xf32>
    %565 = arith.addf %549, %564 : vector<8x32xf32>
    %cst_431 = arith.constant 5.000000e-01 : f32
    %566 = vector.broadcast %cst_431 : f32 to vector<8x1xf32>
    %567 = arith.mulf %566, %561 : vector<8x1xf32>
    %568 = arith.addf %552, %567 : vector<8x1xf32>
    %c0_432 = arith.constant 0 : index
    %c0_433 = arith.constant 0 : index
    %569 = vector.load %arg4[%c0_432, %c0_433] : memref<1x32xf32, #tpu.memory_space<vmem>>, vector<1x32xf32>
    %570 = vector.broadcast %569 : vector<1x32xf32> to vector<8x32xf32>
    %571 = arith.addf %565, %570 : vector<8x32xf32>
    %cst_434 = arith.constant 0.000000e+00 : f32
    %572 = vector.broadcast %cst_434 : f32 to vector<8x32xf32>
    %573 = arith.maximumf %571, %572 : vector<8x32xf32>
    %574 = arith.truncf %573 : vector<8x32xf32> to vector<8x32xbf16>
    %c0_435 = arith.constant 0 : index
    %c0_436 = arith.constant 0 : index
    %575 = vector.load %arg5[%c0_435, %c0_436] : memref<32x32xbf16, #tpu.memory_space<vmem>>, vector<32x32xbf16>
    %cst_437 = arith.constant dense<0.000000e+00> : vector<8x32xf32>
    %576 = tpu.matmul %574, %575, %cst_437 {dimension_numbers = #tpu.dot_dimension_numbers<[1], [0], [0], [1], [0, 0, 1, 1], [], []>} : vector<8x32xbf16>, vector<32x32xbf16>, vector<8x32xf32> -> vector<8x32xf32>
    %c0_438 = arith.constant 0 : index
    %c0_439 = arith.constant 0 : index
    %577 = vector.load %arg6[%c0_438, %c0_439] : memref<1x32xf32, #tpu.memory_space<vmem>>, vector<1x32xf32>
    %578 = vector.broadcast %577 : vector<1x32xf32> to vector<8x32xf32>
    %579 = arith.addf %576, %578 : vector<8x32xf32>
    %cst_440 = arith.constant 0.000000e+00 : f32
    %580 = vector.broadcast %cst_440 : f32 to vector<8x32xf32>
    %581 = arith.maximumf %579, %580 : vector<8x32xf32>
    %582 = arith.truncf %581 : vector<8x32xf32> to vector<8x32xbf16>
    %c0_441 = arith.constant 0 : index
    %c0_442 = arith.constant 0 : index
    %583 = vector.load %arg7[%c0_441, %c0_442] : memref<32x32xbf16, #tpu.memory_space<vmem>>, vector<32x32xbf16>
    %cst_443 = arith.constant dense<0.000000e+00> : vector<8x32xf32>
    %584 = tpu.matmul %582, %583, %cst_443 {dimension_numbers = #tpu.dot_dimension_numbers<[1], [0], [0], [1], [0, 0, 1, 1], [], []>} : vector<8x32xbf16>, vector<32x32xbf16>, vector<8x32xf32> -> vector<8x32xf32>
    %c0_444 = arith.constant 0 : index
    %c0_445 = arith.constant 0 : index
    %585 = vector.load %arg8[%c0_444, %c0_445] : memref<1x32xf32, #tpu.memory_space<vmem>>, vector<1x32xf32>
    %586 = vector.broadcast %585 : vector<1x32xf32> to vector<8x32xf32>
    %587 = arith.addf %584, %586 : vector<8x32xf32>
    %cst_446 = arith.constant 0.000000e+00 : f32
    %588 = vector.broadcast %cst_446 : f32 to vector<8x32xf32>
    %589 = arith.maximumf %587, %588 : vector<8x32xf32>
    %c0_447 = arith.constant 0 : index
    %c0_448 = arith.constant 0 : index
    %590 = vector.load %arg9[%c0_447, %c0_448] : memref<1x32xf32, #tpu.memory_space<vmem>>, vector<1x32xf32>
    %591 = vector.broadcast %590 : vector<1x32xf32> to vector<8x32xf32>
    %592 = arith.mulf %589, %591 : vector<8x32xf32>
    %cst_449 = arith.constant dense<0.000000e+00> : vector<8xf32>
    %593 = vector.multi_reduction <add>, %592, %cst_449 [1] : vector<8x32xf32> to vector<8xf32>
    %594 = vector.shape_cast %593 : vector<8xf32> to vector<8x1xf32>
    %595 = arith.addf %568, %594 : vector<8x1xf32>
    %c0_450 = arith.constant 0 : index
    %596 = memref.load %arg10[%c0_450] : memref<1xf32, #tpu.memory_space<smem>>
    %597 = vector.broadcast %596 : f32 to vector<8x1xf32>
    %598 = arith.addf %595, %597 : vector<8x1xf32>
    %c0_451 = arith.constant 0 : index
    %c0_452 = arith.constant 0 : index
    %599 = vector.load %arg11[%c0_451, %c0_452] : memref<8x1xf32, #tpu.memory_space<vmem>>, vector<8x1xf32>
    tpu.vector_store %arg11[%c0_451, %c0_452], %598 {strides = array<i32>} : memref<8x1xf32, #tpu.memory_space<vmem>>, vector<8x1xf32>,
    return
  }
  func.func @transform_1(%arg0: i32, %arg1: memref<80xi32, #tpu.memory_space<smem>>) -> (i32, i32, i32) {
    %c0_i32 = arith.constant 0 : i32
    %c0_i32_0 = arith.constant 0 : i32
    %c0_i32_1 = arith.constant 0 : i32
    %c0_i32_2 = arith.constant 0 : i32
    return %c0_i32, %c0_i32_0, %c0_i32_1 : i32, i32, i32
  }
  func.func @transform_2(%arg0: i32, %arg1: memref<80xi32, #tpu.memory_space<smem>>) -> (i32, i32) {
    %c0_i32 = arith.constant 0 : i32
    %c0_i32_0 = arith.constant 0 : i32
    %c0_i32_1 = arith.constant 0 : i32
    return %c0_i32, %c0_i32_0 : i32, i32
  }
  func.func @transform_3(%arg0: i32, %arg1: memref<80xi32, #tpu.memory_space<smem>>) -> (i32, i32) {
    %c0_i32 = arith.constant 0 : i32
    %c0_i32_0 = arith.constant 0 : i32
    %c0_i32_1 = arith.constant 0 : i32
    return %c0_i32, %c0_i32_0 : i32, i32
  }
  func.func @transform_4(%arg0: i32, %arg1: memref<80xi32, #tpu.memory_space<smem>>) -> (i32, i32) {
    %c0_i32 = arith.constant 0 : i32
    %c0_i32_0 = arith.constant 0 : i32
    %c0_i32_1 = arith.constant 0 : i32
    return %c0_i32, %c0_i32_0 : i32, i32
  }
  func.func @transform_5(%arg0: i32, %arg1: memref<80xi32, #tpu.memory_space<smem>>) -> (i32, i32) {
    %c0_i32 = arith.constant 0 : i32
    %c0_i32_0 = arith.constant 0 : i32
    %c0_i32_1 = arith.constant 0 : i32
    return %c0_i32, %c0_i32_0 : i32, i32
  }
  func.func @transform_6(%arg0: i32, %arg1: memref<80xi32, #tpu.memory_space<smem>>) -> (i32, i32) {
    %c0_i32 = arith.constant 0 : i32
    %c0_i32_0 = arith.constant 0 : i32
    %c0_i32_1 = arith.constant 0 : i32
    return %c0_i32, %c0_i32_0 : i32, i32
  }
  func.func @transform_7(%arg0: i32, %arg1: memref<80xi32, #tpu.memory_space<smem>>) -> (i32, i32) {
    %c0_i32 = arith.constant 0 : i32
    %c0_i32_0 = arith.constant 0 : i32
    %c0_i32_1 = arith.constant 0 : i32
    return %c0_i32, %c0_i32_0 : i32, i32
  }
  func.func @transform_8(%arg0: i32, %arg1: memref<80xi32, #tpu.memory_space<smem>>) -> i32 {
    %c0_i32 = arith.constant 0 : i32
    %c0_i32_0 = arith.constant 0 : i32
    return %c0_i32 : i32
  }
  func.func @transform_9(%arg0: i32, %arg1: memref<80xi32, #tpu.memory_space<smem>>) -> (i32, i32) {
    %c0_i32 = arith.constant 0 : i32
    %c0_i32_0 = arith.constant 0 : i32
    return %arg0, %c0_i32 : i32, i32
  }
}

</mosaic_0001>

<llo_original>
// kernel: tpu_custom_call.1
$region0: #{tpu_custom_call.1}
  #allocation0 [shape = 'u32[]', space=smem, size = 0x4, offset = 0x4, fixed_abs, tag = 'smem constant byte address 0x4 - core index']
  #allocation1 [shape = 'u32[72,128]{1,0:T(1,128)}', space=vmem, size = 0x9000, scoped, tag = 'internal scratch']
  #allocation2 [shape = 'f32[40,9]{1,0:T(8,128)}', space=vmem, size = 0x5000, scoped, tag = 'scratch operand']
  #allocation3 [shape = 's32[1]{0}', space=sflag, size = 0x4, scoped, tag = 'scratch operand']
  #allocation4 [shape = 's32[1]{0}', space=sflag, size = 0x4, scoped, tag = 'scoped memory for tpu_custom_call.1']
  #allocation5 [shape = 'u8[512]{0}', space=smem, size = 0x200, scoped, tag = 'prefetched SMEM operand 0']
  #allocation6 [shape = 'f32[1]{0:T(128)S(6)}', space=smem, size = 0x200, scoped, tag = 'scoped memory for tpu_custom_call.1']
  #allocation7 [shape = 's32[]', space=sflag, size = 0x4, offset = 0, fixed_abs, tag = 'sflag constant byte address 0x0 - dummy sync flag']
  #allocation8 [shape = 's32[]', space=sflag, size = 0x4, offset = 0, fixed_abs, tag = 'sflag constant byte address 0x0 - dummy sync flag']
  #allocation9 [shape = 's32[]', space=sflag, size = 0x4, offset = 0, fixed_abs, tag = 'sflag constant byte address 0x0 - dummy sync flag']
  #allocation10 [shape = 's32[]', space=sflag, size = 0x4, offset = 0, fixed_abs, tag = 'sflag constant byte address 0x0 - dummy sync flag']
  #allocation11 [shape = 's32[]', space=sflag, size = 0x4, offset = 0, fixed_abs, tag = 'sflag constant byte address 0x0 - dummy sync flag']
  #allocation12 [shape = 's32[]', space=sflag, size = 0x4, offset = 0, fixed_abs, tag = 'sflag constant byte address 0x0 - dummy sync flag']
  #allocation13 [shape = 's32[]', space=sflag, size = 0x4, offset = 0, fixed_abs, tag = 'sflag constant byte address 0x0 - dummy sync flag']
  #allocation14 [shape = 's32[]', space=sflag, size = 0x4, offset = 0, fixed_abs, tag = 'sflag constant byte address 0x0 - dummy sync flag']
  #allocation15 [shape = 's32[]', space=sflag, size = 0x4, offset = 0, fixed_abs, tag = 'sflag constant byte address 0x0 - dummy sync flag']
  #allocation16 [shape = 's32[]', space=sflag, size = 0x4, offset = 0, fixed_abs, tag = 'sflag constant byte address 0x0 - dummy sync flag']
  #allocation17 [shape = 's32[]', space=sflag, size = 0x4, offset = 0, fixed_abs, tag = 'sflag constant byte address 0x0 - dummy sync flag']
  #allocation18 [shape = 's32[]', space=sflag, size = 0x4, offset = 0, fixed_abs, tag = 'sflag constant byte address 0x0 - dummy sync flag']
  #allocation19 [shape = 's32[]', space=sflag, size = 0x4, offset = 0, fixed_abs, tag = 'sflag constant byte address 0x0 - dummy sync flag']
  #allocation20 [shape = 's32[]', space=sflag, size = 0x4, offset = 0, fixed_abs, tag = 'sflag constant byte address 0x0 - dummy sync flag']
  #allocation21 [shape = 's32[]', space=sflag, size = 0x4, offset = 0, fixed_abs, tag = 'sflag constant byte address 0x0 - dummy sync flag']
  #allocation22 [shape = 's32[]', space=sflag, size = 0x4, offset = 0, fixed_abs, tag = 'sflag constant byte address 0x0 - dummy sync flag']
  #allocation23 [shape = 's32[]', space=sflag, size = 0x4, offset = 0, fixed_abs, tag = 'sflag constant byte address 0x0 - dummy sync flag']
  #allocation24 [shape = 's32[]', space=sflag, size = 0x4, offset = 0, fixed_abs, tag = 'sflag constant byte address 0x0 - dummy sync flag']
  #allocation25 [shape = 's32[]', space=sflag, size = 0x4, offset = 0, fixed_abs, tag = 'sflag constant byte address 0x0 - dummy sync flag']
  #allocation26 [shape = 's32[]', space=sflag, size = 0x4, offset = 0, fixed_abs, tag = 'sflag constant byte address 0x0 - dummy sync flag']
  #allocation27 [shape = 's32[]', space=sflag, size = 0x4, offset = 0, fixed_abs, tag = 'sflag constant byte address 0x0 - dummy sync flag']
  #allocation28 [shape = 's32[]', space=sflag, size = 0x4, offset = 0, fixed_abs, tag = 'sflag constant byte address 0x0 - dummy sync flag']
  #allocation29 [shape = 's32[]', space=sflag, size = 0x4, offset = 0, fixed_abs, tag = 'sflag constant byte address 0x0 - dummy sync flag']
  #allocation30 [shape = 's32[]', space=sflag, size = 0x4, offset = 0, fixed_abs, tag = 'sflag constant byte address 0x0 - dummy sync flag']
  #allocation31 [shape = 's32[]', space=sflag, size = 0x4, offset = 0, fixed_abs, tag = 'sflag constant byte address 0x0 - dummy sync flag']
  #allocation32 [shape = 's32[]', space=sflag, size = 0x4, offset = 0, fixed_abs, tag = 'sflag constant byte address 0x0 - dummy sync flag']
  #allocation33 [shape = 's32[]', space=sflag, size = 0x4, offset = 0, fixed_abs, tag = 'sflag constant byte address 0x0 - dummy sync flag']
  #allocation34 [shape = 's32[]', space=sflag, size = 0x4, offset = 0, fixed_abs, tag = 'sflag constant byte address 0x0 - dummy sync flag']
  #allocation35 [shape = 's32[]', space=sflag, size = 0x4, offset = 0, fixed_abs, tag = 'sflag constant byte address 0x0 - dummy sync flag']
  #allocation36 [shape = 's32[]', space=sflag, size = 0x4, offset = 0, fixed_abs, tag = 'sflag constant byte address 0x0 - dummy sync flag']
  #allocation37 [shape = 's32[]', space=sflag, size = 0x4, offset = 0, fixed_abs, tag = 'sflag constant byte address 0x0 - dummy sync flag']
  #allocation38 [shape = 's32[]', space=sflag, size = 0x4, offset = 0, fixed_abs, tag = 'sflag constant byte address 0x0 - dummy sync flag']
  #allocation39 [shape = 's32[]', space=sflag, size = 0x4, offset = 0, fixed_abs, tag = 'sflag constant byte address 0x0 - dummy sync flag']
  #allocation40 [shape = 's32[]', space=sflag, size = 0x4, offset = 0, fixed_abs, tag = 'sflag constant byte address 0x0 - dummy sync flag']
  #allocation41 [shape = 's32[]', space=sflag, size = 0x4, offset = 0, fixed_abs, tag = 'sflag constant byte address 0x0 - dummy sync flag']
  #allocation42 [shape = 's32[]', space=sflag, size = 0x4, offset = 0, fixed_abs, tag = 'sflag constant byte address 0x0 - dummy sync flag']
  #allocation43 [shape = 's32[]', space=sflag, size = 0x4, offset = 0, fixed_abs, tag = 'sflag constant byte address 0x0 - dummy sync flag']
  #allocation44 [shape = 's32[]', space=sflag, size = 0x4, offset = 0, fixed_abs, tag = 'sflag constant byte address 0x0 - dummy sync flag']
  #allocation45 [shape = 's32[]', space=sflag, size = 0x4, offset = 0, fixed_abs, tag = 'sflag constant byte address 0x0 - dummy sync flag']
  #allocation46 [shape = 's32[]', space=sflag, size = 0x4, offset = 0, fixed_abs, tag = 'sflag constant byte address 0x0 - dummy sync flag']
  %s0 = inlined_call_operand.vmem [shape: s32[80], index: 0, kind: input, shape index: {}]
  %s1 = inlined_call_operand.vmem [shape: f32[31,9], index: 1, kind: input, shape index: {}]
  %s2 = inlined_call_operand.vmem [shape: f32[5,9,32], index: 2, kind: input, shape index: {}]
  %s3 = inlined_call_operand.vmem [shape: f32[1,32], index: 3, kind: input, shape index: {}]
  %s4 = inlined_call_operand.vmem [shape: bf16[32,32], index: 4, kind: input, shape index: {}]
  %s5 = inlined_call_operand.vmem [shape: f32[1,32], index: 5, kind: input, shape index: {}]
  %s6 = inlined_call_operand.vmem [shape: bf16[32,32], index: 6, kind: input, shape index: {}]
  %s7 = inlined_call_operand.vmem [shape: f32[1,32], index: 7, kind: input, shape index: {}]
  %s8 = inlined_call_operand.vmem [shape: f32[1,32], index: 8, kind: input, shape index: {}]
  %s9 = inlined_call_operand.<no memory space> [shape: f32[1], index: 9, kind: input, shape index: {}]
  %s10 = inlined_call_operand.vmem [shape: f32[16,1], index: 10, kind: output, shape index: {}]
  %s11 = sld [smem:[#allocation0]]
  $region1265: #{tpu_custom_call.1} parent=0
    _
  %s13 = ssub.s32 1, %s11
  %s14 = scalar_select 0, %s13, %s11
  %s16 = sshll.u32 %s0, 4
  %s17 = int_to_ptr.vmem [resolvable:$true] %s16
  %19 = dma.vmem_to_smem %s17, 16, [#allocation5], [#allocation4]
  %20 = sst [smem:[#allocation6]] %s9
  %22 = dma.done [#allocation4], 16
  %23 = sfence
  loop: start=0, step=1, limit=4
  $region2: #{tpu_custom_call.1} parent=0 // loop_pre_header
    _
  $region3: #{tpu_custom_call.1} parent=0 // loop_header
    %s25 = sphi 0, %s29
    %p26 = scmp.ge.s32.totalorder %s25, 4
    %s33 = sphi 0, %s33
    %s35 = sphi 0, %s33
    %s36 = sphi 0, %s35
    %s50 = sphi 0, %s36
    %s54 = sphi 0, %s54
    %s56 = sphi 0, %s54
    %s57 = sphi 0, %s56
    %s71 = sphi 0, %s57
    %s75 = sphi 0, %s75
    %s77 = sphi 0, %s75
    %s78 = sphi 0, %s77
    %s92 = sphi 0, %s78
    %s96 = sphi 0, %s96
    %s98 = sphi 0, %s96
    %s99 = sphi 0, %s98
    %s113 = sphi 0, %s99
    %s117 = sphi 0, %s117
    %s119 = sphi 0, %s117
    %s120 = sphi 0, %s119
    %s134 = sphi 0, %s120
    %s138 = sphi 0, %s138
    %s140 = sphi 0, %s138
    %s141 = sphi 0, %s140
    %s155 = sphi 0, %s141
    %s159 = sphi 0, %s159
    %s161 = sphi 0, %s159
    %s162 = sphi 0, %s161
    %s176 = sphi 0, %s162
    %s180 = sphi 0, %s180
    %s182 = sphi 0, %s180
    %s183 = sphi 0, %s182
    %s197 = sphi 0, %s183
    %s203 = sphi 0, %s205
    %s206 = sphi 0, %s203
    %s207 = sphi 0, %s206
    %s223 = sphi 0, %s207
  $region4: #{tpu_custom_call.1} parent=0 // loop_header_branch
    %28 = sbr.rel (%p26) target = $region8
  $region5: #{tpu_custom_call.1} parent=0 // loop_body
    %s30 = ssub.s32 %s25, 1
    %s31 = ssub.s32 %s25, 2
    %s32 = sadd.s32 %s25, 1
    %s34 = sadd.s32 %s33, 1
    %p37 = scmp.eq.s32.totalorder %s25, 1
    %p38 = scmp.ne.s32.totalorder %s33, %s35
    %p39 = scmp.eq.s32.totalorder %s25, 0
    %p40 = por %p38, %p39
    %p41 = scmp.ne.s32.totalorder %s33, %s35
    %p42 = scmp.eq.s32.totalorder %s30, 1
    %p43 = por %p41, %p42
    %p44 = scmp.ne.s32.totalorder %s35, %s36
    %p45 = scmp.eq.s32.totalorder %s30, 0
    %p46 = por %p44, %p45
    %p47 = scmp.ne.s32.totalorder %s35, %s36
    %p48 = scmp.eq.s32.totalorder %s31, 1
    %p49 = por %p47, %p48
    %p51 = scmp.ne.s32.totalorder %s36, %s50
    %p52 = scmp.eq.s32.totalorder %s31, 0
    %p53 = por %p51, %p52
    %s55 = sadd.s32 %s54, 1
    %p58 = scmp.eq.s32.totalorder %s25, 1
    %p59 = scmp.ne.s32.totalorder %s54, %s56
    %p60 = scmp.eq.s32.totalorder %s25, 0
    %p61 = por %p59, %p60
    %p62 = scmp.ne.s32.totalorder %s54, %s56
    %p63 = scmp.eq.s32.totalorder %s30, 1
    %p64 = por %p62, %p63
    %p65 = scmp.ne.s32.totalorder %s56, %s57
    %p66 = scmp.eq.s32.totalorder %s30, 0
    %p67 = por %p65, %p66
    %p68 = scmp.ne.s32.totalorder %s56, %s57
    %p69 = scmp.eq.s32.totalorder %s31, 1
    %p70 = por %p68, %p69
    %p72 = scmp.ne.s32.totalorder %s57, %s71
    %p73 = scmp.eq.s32.totalorder %s31, 0
    %p74 = por %p72, %p73
    %s76 = sadd.s32 %s75, 1
    %p79 = scmp.eq.s32.totalorder %s25, 1
    %p80 = scmp.ne.s32.totalorder %s75, %s77
    %p81 = scmp.eq.s32.totalorder %s25, 0
    %p82 = por %p80, %p81
    %p83 = scmp.ne.s32.totalorder %s75, %s77
    %p84 = scmp.eq.s32.totalorder %s30, 1
    %p85 = por %p83, %p84
    %p86 = scmp.ne.s32.totalorder %s77, %s78
    %p87 = scmp.eq.s32.totalorder %s30, 0
    %p88 = por %p86, %p87
    %p89 = scmp.ne.s32.totalorder %s77, %s78
    %p90 = scmp.eq.s32.totalorder %s31, 1
    %p91 = por %p89, %p90
    %p93 = scmp.ne.s32.totalorder %s78, %s92
    %p94 = scmp.eq.s32.totalorder %s31, 0
    %p95 = por %p93, %p94
    %s97 = sadd.s32 %s96, 1
    %p100 = scmp.eq.s32.totalorder %s25, 1
    %p101 = scmp.ne.s32.totalorder %s96, %s98
    %p102 = scmp.eq.s32.totalorder %s25, 0
    %p103 = por %p101, %p102
    %p104 = scmp.ne.s32.totalorder %s96, %s98
    %p105 = scmp.eq.s32.totalorder %s30, 1
    %p106 = por %p104, %p105
    %p107 = scmp.ne.s32.totalorder %s98, %s99
    %p108 = scmp.eq.s32.totalorder %s30, 0
    %p109 = por %p107, %p108
    %p110 = scmp.ne.s32.totalorder %s98, %s99
    %p111 = scmp.eq.s32.totalorder %s31, 1
    %p112 = por %p110, %p111
    %p114 = scmp.ne.s32.totalorder %s99, %s113
    %p115 = scmp.eq.s32.totalorder %s31, 0
    %p116 = por %p114, %p115
    %s118 = sadd.s32 %s117, 1
    %p121 = scmp.eq.s32.totalorder %s25, 1
    %p122 = scmp.ne.s32.totalorder %s117, %s119
    %p123 = scmp.eq.s32.totalorder %s25, 0
    %p124 = por %p122, %p123
    %p125 = scmp.ne.s32.totalorder %s117, %s119
    %p126 = scmp.eq.s32.totalorder %s30, 1
    %p127 = por %p125, %p126
    %p128 = scmp.ne.s32.totalorder %s119, %s120
    %p129 = scmp.eq.s32.totalorder %s30, 0
    %p130 = por %p128, %p129
    %p131 = scmp.ne.s32.totalorder %s119, %s120
    %p132 = scmp.eq.s32.totalorder %s31, 1
    %p133 = por %p131, %p132
    %p135 = scmp.ne.s32.totalorder %s120, %s134
    %p136 = scmp.eq.s32.totalorder %s31, 0
    %p137 = por %p135, %p136
    %s139 = sadd.s32 %s138, 1
    %p142 = scmp.eq.s32.totalorder %s25, 1
    %p143 = scmp.ne.s32.totalorder %s138, %s140
    %p144 = scmp.eq.s32.totalorder %s25, 0
    %p145 = por %p143, %p144
    %p146 = scmp.ne.s32.totalorder %s138, %s140
    %p147 = scmp.eq.s32.totalorder %s30, 1
    %p148 = por %p146, %p147
    %p149 = scmp.ne.s32.totalorder %s140, %s141
    %p150 = scmp.eq.s32.totalorder %s30, 0
    %p151 = por %p149, %p150
    %p152 = scmp.ne.s32.totalorder %s140, %s141
    %p153 = scmp.eq.s32.totalorder %s31, 1
    %p154 = por %p152, %p153
    %p156 = scmp.ne.s32.totalorder %s141, %s155
    %p157 = scmp.eq.s32.totalorder %s31, 0
    %p158 = por %p156, %p157
    %s160 = sadd.s32 %s159, 1
    %p163 = scmp.eq.s32.totalorder %s25, 1
    %p164 = scmp.ne.s32.totalorder %s159, %s161
    %p165 = scmp.eq.s32.totalorder %s25, 0
    %p166 = por %p164, %p165
    %p167 = scmp.ne.s32.totalorder %s159, %s161
    %p168 = scmp.eq.s32.totalorder %s30, 1
    %p169 = por %p167, %p168
    %p170 = scmp.ne.s32.totalorder %s161, %s162
    %p171 = scmp.eq.s32.totalorder %s30, 0
    %p172 = por %p170, %p171
    %p173 = scmp.ne.s32.totalorder %s161, %s162
    %p174 = scmp.eq.s32.totalorder %s31, 1
    %p175 = por %p173, %p174
    %p177 = scmp.ne.s32.totalorder %s162, %s176
    %p178 = scmp.eq.s32.totalorder %s31, 0
    %p179 = por %p177, %p178
    %s181 = sadd.s32 %s180, 1
    %p184 = scmp.eq.s32.totalorder %s25, 1
    %p185 = scmp.ne.s32.totalorder %s180, %s182
    %p186 = scmp.eq.s32.totalorder %s25, 0
    %p187 = por %p185, %p186
    %p188 = scmp.ne.s32.totalorder %s180, %s182
    %p189 = scmp.eq.s32.totalorder %s30, 1
    %p190 = por %p188, %p189
    %p191 = scmp.ne.s32.totalorder %s182, %s183
    %p192 = scmp.eq.s32.totalorder %s30, 0
    %p193 = por %p191, %p192
    %p194 = scmp.ne.s32.totalorder %s182, %s183
    %p195 = scmp.eq.s32.totalorder %s31, 1
    %p196 = por %p194, %p195
    %p198 = scmp.ne.s32.totalorder %s183, %s197
    %p199 = scmp.eq.s32.totalorder %s31, 0
    %p200 = por %p198, %p199
    %s201 = ssub.s32 %s25, %s32
    %p202 = scmp.eq.s32.totalorder %s201, 0
    %s204 = sadd.s32 %s203, 1
    %s205 = scalar_select %p202, %s203, %s204
    %p208 = pneg %p202
    %p209 = scmp.eq.s32.totalorder %s25, 1
    %p210 = por %p208, %p209
    %p211 = scmp.ne.s32.totalorder %s203, %s206
    %p212 = scmp.eq.s32.totalorder %s25, 0
    %p213 = por %p211, %p212
    %p214 = scmp.ne.s32.totalorder %s203, %s206
    %p215 = scmp.eq.s32.totalorder %s30, 1
    %p216 = por %p214, %p215
    %p217 = scmp.ne.s32.totalorder %s206, %s207
    %p218 = scmp.eq.s32.totalorder %s30, 0
    %p219 = por %p217, %p218
    %p220 = scmp.ne.s32.totalorder %s206, %s207
    %p221 = scmp.eq.s32.totalorder %s31, 1
    %p222 = por %p220, %p221
    %p224 = scmp.ne.s32.totalorder %s207, %s223
    %p225 = scmp.eq.s32.totalorder %s31, 0
    %p226 = por %p224, %p225
    %p227 = scmp.le.s32.totalorder 1, %s25
    %p228 = scmp.lt.s32.totalorder %s25, 3
    %p229 = pnand %p227, %p228
    %p230 = pneg %p229
    // Predicated region
    $region9: #{tpu_custom_call.1} parent=5 // pred_check
      _
    $region10: #{tpu_custom_call.1} parent=5 // pred_check_branch
      %232 = sbr.rel (%p229) target = $region12
    $region11: #{tpu_custom_call.1} parent=5 // pred_region
      %s233 = ssub.s32 %s25, 1
      // Predicated region
      $region13: #{tpu_custom_call.1} parent=11 // pred_check
        %p234 = pneg %p46
      $region14: #{tpu_custom_call.1} parent=11 // pred_check_branch
        %236 = sbr.rel (%p234) target = $region16
      $region15: #{tpu_custom_call.1} parent=11 // pred_region
        _
      $region16: #{tpu_custom_call.1} parent=11 // pred_fallthru
        _
      // Predicated region
      $region17: #{tpu_custom_call.1} parent=11 // pred_check
        %p237 = pneg %p67
      $region18: #{tpu_custom_call.1} parent=11 // pred_check_branch
        %239 = sbr.rel (%p237) target = $region20
      $region19: #{tpu_custom_call.1} parent=11 // pred_region
        _
      $region20: #{tpu_custom_call.1} parent=11 // pred_fallthru
        _
      // Predicated region
      $region21: #{tpu_custom_call.1} parent=11 // pred_check
        %p240 = pneg %p88
      $region22: #{tpu_custom_call.1} parent=11 // pred_check_branch
        %242 = sbr.rel (%p240) target = $region24
      $region23: #{tpu_custom_call.1} parent=11 // pred_region
        _
      $region24: #{tpu_custom_call.1} parent=11 // pred_fallthru
        _
      // Predicated region
      $region25: #{tpu_custom_call.1} parent=11 // pred_check
        %p243 = pneg %p109
      $region26: #{tpu_custom_call.1} parent=11 // pred_check_branch
        %245 = sbr.rel (%p243) target = $region28
      $region27: #{tpu_custom_call.1} parent=11 // pred_region
        _
      $region28: #{tpu_custom_call.1} parent=11 // pred_fallthru
        _
      // Predicated region
      $region29: #{tpu_custom_call.1} parent=11 // pred_check
        %p246 = pneg %p130
      $region30: #{tpu_custom_call.1} parent=11 // pred_check_branch
        %248 = sbr.rel (%p246) target = $region32
      $region31: #{tpu_custom_call.1} parent=11 // pred_region
        _
      $region32: #{tpu_custom_call.1} parent=11 // pred_fallthru
        _
      // Predicated region
      $region33: #{tpu_custom_call.1} parent=11 // pred_check
        %p249 = pneg %p151
      $region34: #{tpu_custom_call.1} parent=11 // pred_check_branch
        %251 = sbr.rel (%p249) target = $region36
      $region35: #{tpu_custom_call.1} parent=11 // pred_region
        _
      $region36: #{tpu_custom_call.1} parent=11 // pred_fallthru
        _
      // Predicated region
      $region37: #{tpu_custom_call.1} parent=11 // pred_check
        %p252 = pneg %p172
      $region38: #{tpu_custom_call.1} parent=11 // pred_check_branch
        %254 = sbr.rel (%p252) target = $region40
      $region39: #{tpu_custom_call.1} parent=11 // pred_region
        _
      $region40: #{tpu_custom_call.1} parent=11 // pred_fallthru
        _
      // Predicated region
      $region41: #{tpu_custom_call.1} parent=11 // pred_check
        %p255 = pneg %p193
      $region42: #{tpu_custom_call.1} parent=11 // pred_check_branch
        %257 = sbr.rel (%p255) target = $region44
      $region43: #{tpu_custom_call.1} parent=11 // pred_region
        _
      $region44: #{tpu_custom_call.1} parent=11 // pred_fallthru
        _
    $region12: #{tpu_custom_call.1} parent=5 // pred_fallthru
      _
    %p258 = scmp.lt.s32.totalorder %s25, 2
    // Predicated region
    $region45: #{tpu_custom_call.1} parent=5 // pred_check
      %p259 = pneg %p258
    $region46: #{tpu_custom_call.1} parent=5 // pred_check_branch
      %261 = sbr.rel (%p259) target = $region48
    $region47: #{tpu_custom_call.1} parent=5 // pred_region
      _
    $region48: #{tpu_custom_call.1} parent=5 // pred_fallthru
      _
    %p262 = scmp.le.s32.totalorder 1, %s25
    %p263 = scmp.lt.s32.totalorder %s25, 3
    %p264 = pnand %p262, %p263
    %p265 = pneg %p264
    // Predicated region
    $region49: #{tpu_custom_call.1} parent=5 // pred_check
      _
    $region50: #{tpu_custom_call.1} parent=5 // pred_check_branch
      %267 = sbr.rel (%p264) target = $region52
    $region51: #{tpu_custom_call.1} parent=5 // pred_region
      %s268 = ssub.s32 %s25, 1
      %p269 = pneg %p46
      %p270 = pneg %p43
      %p271 = pneg %p67
      %p272 = pneg %p64
      %p273 = pneg %p88
      %p274 = pneg %p85
      %p275 = pneg %p109
      %p276 = pneg %p106
      %p277 = pneg %p130
      %p278 = pneg %p127
      %p279 = pneg %p151
      %p280 = pneg %p148
      %p281 = pneg %p172
      %p282 = pneg %p169
      %p283 = pneg %p193
      %p284 = pneg %p190
      %p285 = pneg %p219
      %p286 = pneg %p216
      %p287 = scmp.lt.s32.totalorder %s30, 1
      %s288 = scalar_select %p287, %s30, 1
      %s289 = smul.addr %s288, 8
      %s290 = scalar_lea.vmem %s10, %s289
      %p291 = scmp.lt.s32.totalorder %s30, 1
      %s292 = scalar_select %p291, %s30, 1
      %s293 = smul.addr %s292, 8
      %s294 = scalar_lea.vmem %s10, %s293
      %s296 = smul.u32 %s30, 40
      %s297 = sld [smem:[#allocation5 + %s296]]
      %s298 = scalar_lea.vmem %s1, %s297
      // Predicated region
      $region53: #{tpu_custom_call.1} parent=51 // pred_check
        _
      $region54: #{tpu_custom_call.1} parent=51 // pred_check_branch
        %300 = sbr.rel target = $region56
      $region55: #{tpu_custom_call.1} parent=51 // pred_region
        // Predicated region
        $region68: #{tpu_custom_call.1} parent=55 // pred_check
          _
        $region69: #{tpu_custom_call.1} parent=55 // pred_check_branch
          %316 = sbr.rel (0) target = $region71
        $region70: #{tpu_custom_call.1} parent=55 // pred_region
          %s318 = ssub.s32 2, 1
          loop: start=0, step=1, limit=1
          $region72: #{tpu_custom_call.1} parent=70 // loop_pre_header
            _
          $region73: #{tpu_custom_call.1} parent=70 // loop_header
            %s320 = sphi 0, %s324
            %p321 = scmp.ge.s32.totalorder %s320, 1
            %s325 = sphi %s298, %s298
            %s326 = sphi [#allocation2], [#allocation2]
          $region74: #{tpu_custom_call.1} parent=70 // loop_header_branch
            %323 = sbr.rel (%p321) target = $region78
          $region75: #{tpu_custom_call.1} parent=70 // loop_body
            %v327 = vld [vmem:[%s325] sm:%s318]
            %328 = vst [vmem:[%s326] sm:%s318] %v327
          $region76: #{tpu_custom_call.1} parent=70 // loop_footer
            %s324 = sadd.s32 1, %s320
          $region77: #{tpu_custom_call.1} parent=70 // loop_footer_branch
            %319 = sbr.rel target = $region73
          $region78: #{tpu_custom_call.1} parent=70 // loop_exit
            _
        $region71: #{tpu_custom_call.1} parent=55 // pred_fallthru
          _
      $region56: #{tpu_custom_call.1} parent=51 // pred_fallthru
        _
      // Predicated region
      $region57: #{tpu_custom_call.1} parent=51 // pred_check
        _
      $region58: #{tpu_custom_call.1} parent=51 // pred_check_branch
        %302 = sbr.rel (0) target = $region60
      $region59: #{tpu_custom_call.1} parent=51 // pred_region
        %s304 = ssub.s32 2, 1
        loop: start=0, step=1, limit=1
        $region61: #{tpu_custom_call.1} parent=59 // loop_pre_header
          _
        $region62: #{tpu_custom_call.1} parent=59 // loop_header
          %s306 = sphi 0, %s310
          %p307 = scmp.ge.s32.totalorder %s306, 1
          %s311 = sphi %s298, %s298
          %s312 = sphi [#allocation2], [#allocation2]
        $region63: #{tpu_custom_call.1} parent=59 // loop_header_branch
          %309 = sbr.rel (%p307) target = $region67
        $region64: #{tpu_custom_call.1} parent=59 // loop_body
          %v313 = vld [vmem:[%s311] sm:%s304]
          %314 = vst [vmem:[%s312] sm:%s304] %v313
        $region65: #{tpu_custom_call.1} parent=59 // loop_footer
          %s310 = sadd.s32 1, %s306
        $region66: #{tpu_custom_call.1} parent=59 // loop_footer_branch
          %305 = sbr.rel target = $region62
        $region67: #{tpu_custom_call.1} parent=59 // loop_exit
          _
      $region60: #{tpu_custom_call.1} parent=51 // pred_fallthru
        _
      // Predicated region
      $region79: #{tpu_custom_call.1} parent=51 // pred_check
        _
      $region80: #{tpu_custom_call.1} parent=51 // pred_check_branch
        %331 = sbr.rel (0) target = $region82
      $region81: #{tpu_custom_call.1} parent=51 // pred_region
        %332 = vsyncadd [#allocation3], 16
      $region82: #{tpu_custom_call.1} parent=51 // pred_fallthru
        _
      %s333 = sadd.s32 %s296, 1
      %s334 = sld [smem:[#allocation5 + %s333]]
      %s335 = scalar_lea.vmem %s1, %s334
      %s336 = scalar_lea.vmem [#allocation2], 8
      // Predicated region
      $region83: #{tpu_custom_call.1} parent=51 // pred_check
        _
      $region84: #{tpu_custom_call.1} parent=51 // pred_check_branch
        %338 = sbr.rel target = $region86
      $region85: #{tpu_custom_call.1} parent=51 // pred_region
        // Predicated region
        $region98: #{tpu_custom_call.1} parent=85 // pred_check
          _
        $region99: #{tpu_custom_call.1} parent=85 // pred_check_branch
          %354 = sbr.rel (0) target = $region101
        $region100: #{tpu_custom_call.1} parent=85 // pred_region
          %s356 = ssub.s32 2, 1
          loop: start=0, step=1, limit=1
          $region102: #{tpu_custom_call.1} parent=100 // loop_pre_header
            _
          $region103: #{tpu_custom_call.1} parent=100 // loop_header
            %s358 = sphi 0, %s362
            %p359 = scmp.ge.s32.totalorder %s358, 1
            %s363 = sphi %s335, %s335
            %s364 = sphi %s336, %s336
          $region104: #{tpu_custom_call.1} parent=100 // loop_header_branch
            %361 = sbr.rel (%p359) target = $region108
          $region105: #{tpu_custom_call.1} parent=100 // loop_body
            %v365 = vld [vmem:[%s363] sm:%s356]
            %366 = vst [vmem:[%s364] sm:%s356] %v365
          $region106: #{tpu_custom_call.1} parent=100 // loop_footer
            %s362 = sadd.s32 1, %s358
          $region107: #{tpu_custom_call.1} parent=100 // loop_footer_branch
            %357 = sbr.rel target = $region103
          $region108: #{tpu_custom_call.1} parent=100 // loop_exit
            _
        $region101: #{tpu_custom_call.1} parent=85 // pred_fallthru
          _
      $region86: #{tpu_custom_call.1} parent=51 // pred_fallthru
        _
      // Predicated region
      $region87: #{tpu_custom_call.1} parent=51 // pred_check
        _
      $region88: #{tpu_custom_call.1} parent=51 // pred_check_branch
        %340 = sbr.rel (0) target = $region90
      $region89: #{tpu_custom_call.1} parent=51 // pred_region
        %s342 = ssub.s32 2, 1
        loop: start=0, step=1, limit=1
        $region91: #{tpu_custom_call.1} parent=89 // loop_pre_header
          _
        $region92: #{tpu_custom_call.1} parent=89 // loop_header
          %s344 = sphi 0, %s348
          %p345 = scmp.ge.s32.totalorder %s344, 1
          %s349 = sphi %s335, %s335
          %s350 = sphi %s336, %s336
        $region93: #{tpu_custom_call.1} parent=89 // loop_header_branch
          %347 = sbr.rel (%p345) target = $region97
        $region94: #{tpu_custom_call.1} parent=89 // loop_body
          %v351 = vld [vmem:[%s349] sm:%s342]
          %352 = vst [vmem:[%s350] sm:%s342] %v351
        $region95: #{tpu_custom_call.1} parent=89 // loop_footer
          %s348 = sadd.s32 1, %s344
        $region96: #{tpu_custom_call.1} parent=89 // loop_footer_branch
          %343 = sbr.rel target = $region92
        $region97: #{tpu_custom_call.1} parent=89 // loop_exit
          _
      $region90: #{tpu_custom_call.1} parent=51 // pred_fallthru
        _
      // Predicated region
      $region109: #{tpu_custom_call.1} parent=51 // pred_check
        _
      $region110: #{tpu_custom_call.1} parent=51 // pred_check_branch
        %369 = sbr.rel (0) target = $region112
      $region111: #{tpu_custom_call.1} parent=51 // pred_region
        %370 = vsyncadd [#allocation3], 16
      $region112: #{tpu_custom_call.1} parent=51 // pred_fallthru
        _
      %s371 = sadd.s32 %s296, 2
      %s372 = sld [smem:[#allocation5 + %s371]]
      %s373 = scalar_lea.vmem %s1, %s372
      %s374 = scalar_lea.vmem [#allocation2], 16
      // Predicated region
      $region113: #{tpu_custom_call.1} parent=51 // pred_check
        _
      $region114: #{tpu_custom_call.1} parent=51 // pred_check_branch
        %376 = sbr.rel target = $region116
      $region115: #{tpu_custom_call.1} parent=51 // pred_region
        // Predicated region
        $region128: #{tpu_custom_call.1} parent=115 // pred_check
          _
        $region129: #{tpu_custom_call.1} parent=115 // pred_check_branch
          %392 = sbr.rel (0) target = $region131
        $region130: #{tpu_custom_call.1} parent=115 // pred_region
          %s394 = ssub.s32 2, 1
          loop: start=0, step=1, limit=1
          $region132: #{tpu_custom_call.1} parent=130 // loop_pre_header
            _
          $region133: #{tpu_custom_call.1} parent=130 // loop_header
            %s396 = sphi 0, %s400
            %p397 = scmp.ge.s32.totalorder %s396, 1
            %s401 = sphi %s373, %s373
            %s402 = sphi %s374, %s374
          $region134: #{tpu_custom_call.1} parent=130 // loop_header_branch
            %399 = sbr.rel (%p397) target = $region138
          $region135: #{tpu_custom_call.1} parent=130 // loop_body
            %v403 = vld [vmem:[%s401] sm:%s394]
            %404 = vst [vmem:[%s402] sm:%s394] %v403
          $region136: #{tpu_custom_call.1} parent=130 // loop_footer
            %s400 = sadd.s32 1, %s396
          $region137: #{tpu_custom_call.1} parent=130 // loop_footer_branch
            %395 = sbr.rel target = $region133
          $region138: #{tpu_custom_call.1} parent=130 // loop_exit
            _
        $region131: #{tpu_custom_call.1} parent=115 // pred_fallthru
          _
      $region116: #{tpu_custom_call.1} parent=51 // pred_fallthru
        _
      // Predicated region
      $region117: #{tpu_custom_call.1} parent=51 // pred_check
        _
      $region118: #{tpu_custom_call.1} parent=51 // pred_check_branch
        %378 = sbr.rel (0) target = $region120
      $region119: #{tpu_custom_call.1} parent=51 // pred_region
        %s380 = ssub.s32 2, 1
        loop: start=0, step=1, limit=1
        $region121: #{tpu_custom_call.1} parent=119 // loop_pre_header
          _
        $region122: #{tpu_custom_call.1} parent=119 // loop_header
          %s382 = sphi 0, %s386
          %p383 = scmp.ge.s32.totalorder %s382, 1
          %s387 = sphi %s373, %s373
          %s388 = sphi %s374, %s374
        $region123: #{tpu_custom_call.1} parent=119 // loop_header_branch
          %385 = sbr.rel (%p383) target = $region127
        $region124: #{tpu_custom_call.1} parent=119 // loop_body
          %v389 = vld [vmem:[%s387] sm:%s380]
          %390 = vst [vmem:[%s388] sm:%s380] %v389
        $region125: #{tpu_custom_call.1} parent=119 // loop_footer
          %s386 = sadd.s32 1, %s382
        $region126: #{tpu_custom_call.1} parent=119 // loop_footer_branch
          %381 = sbr.rel target = $region122
        $region127: #{tpu_custom_call.1} parent=119 // loop_exit
          _
      $region120: #{tpu_custom_call.1} parent=51 // pred_fallthru
        _
      // Predicated region
      $region139: #{tpu_custom_call.1} parent=51 // pred_check
        _
      $region140: #{tpu_custom_call.1} parent=51 // pred_check_branch
        %407 = sbr.rel (0) target = $region142
      $region141: #{tpu_custom_call.1} parent=51 // pred_region
        %408 = vsyncadd [#allocation3], 16
      $region142: #{tpu_custom_call.1} parent=51 // pred_fallthru
        _
      %s409 = sadd.s32 %s296, 3
      %s410 = sld [smem:[#allocation5 + %s409]]
      %s411 = scalar_lea.vmem %s1, %s410
      %s412 = scalar_lea.vmem [#allocation2], 24
      // Predicated region
      $region143: #{tpu_custom_call.1} parent=51 // pred_check
        _
      $region144: #{tpu_custom_call.1} parent=51 // pred_check_branch
        %414 = sbr.rel target = $region146
      $region145: #{tpu_custom_call.1} parent=51 // pred_region
        // Predicated region
        $region158: #{tpu_custom_call.1} parent=145 // pred_check
          _
        $region159: #{tpu_custom_call.1} parent=145 // pred_check_branch
          %430 = sbr.rel (0) target = $region161
        $region160: #{tpu_custom_call.1} parent=145 // pred_region
          %s432 = ssub.s32 2, 1
          loop: start=0, step=1, limit=1
          $region162: #{tpu_custom_call.1} parent=160 // loop_pre_header
            _
          $region163: #{tpu_custom_call.1} parent=160 // loop_header
            %s434 = sphi 0, %s438
            %p435 = scmp.ge.s32.totalorder %s434, 1
            %s439 = sphi %s411, %s411
            %s440 = sphi %s412, %s412
          $region164: #{tpu_custom_call.1} parent=160 // loop_header_branch
            %437 = sbr.rel (%p435) target = $region168
          $region165: #{tpu_custom_call.1} parent=160 // loop_body
            %v441 = vld [vmem:[%s439] sm:%s432]
            %442 = vst [vmem:[%s440] sm:%s432] %v441
          $region166: #{tpu_custom_call.1} parent=160 // loop_footer
            %s438 = sadd.s32 1, %s434
          $region167: #{tpu_custom_call.1} parent=160 // loop_footer_branch
            %433 = sbr.rel target = $region163
          $region168: #{tpu_custom_call.1} parent=160 // loop_exit
            _
        $region161: #{tpu_custom_call.1} parent=145 // pred_fallthru
          _
      $region146: #{tpu_custom_call.1} parent=51 // pred_fallthru
        _
      // Predicated region
      $region147: #{tpu_custom_call.1} parent=51 // pred_check
        _
      $region148: #{tpu_custom_call.1} parent=51 // pred_check_branch
        %416 = sbr.rel (0) target = $region150
      $region149: #{tpu_custom_call.1} parent=51 // pred_region
        %s418 = ssub.s32 2, 1
        loop: start=0, step=1, limit=1
        $region151: #{tpu_custom_call.1} parent=149 // loop_pre_header
          _
        $region152: #{tpu_custom_call.1} parent=149 // loop_header
          %s420 = sphi 0, %s424
          %p421 = scmp.ge.s32.totalorder %s420, 1
          %s425 = sphi %s411, %s411
          %s426 = sphi %s412, %s412
        $region153: #{tpu_custom_call.1} parent=149 // loop_header_branch
          %423 = sbr.rel (%p421) target = $region157
        $region154: #{tpu_custom_call.1} parent=149 // loop_body
          %v427 = vld [vmem:[%s425] sm:%s418]
          %428 = vst [vmem:[%s426] sm:%s418] %v427
        $region155: #{tpu_custom_call.1} parent=149 // loop_footer
          %s424 = sadd.s32 1, %s420
        $region156: #{tpu_custom_call.1} parent=149 // loop_footer_branch
          %419 = sbr.rel target = $region152
        $region157: #{tpu_custom_call.1} parent=149 // loop_exit
          _
      $region150: #{tpu_custom_call.1} parent=51 // pred_fallthru
        _
      // Predicated region
      $region169: #{tpu_custom_call.1} parent=51 // pred_check
        _
      $region170: #{tpu_custom_call.1} parent=51 // pred_check_branch
        %445 = sbr.rel (0) target = $region172
      $region171: #{tpu_custom_call.1} parent=51 // pred_region
        %446 = vsyncadd [#allocation3], 16
      $region172: #{tpu_custom_call.1} parent=51 // pred_fallthru
        _
      %s447 = sadd.s32 %s296, 4
      %s448 = sld [smem:[#allocation5 + %s447]]
      %s449 = scalar_lea.vmem %s1, %s448
      %s450 = scalar_lea.vmem [#allocation2], 32
      // Predicated region
      $region173: #{tpu_custom_call.1} parent=51 // pred_check
        _
      $region174: #{tpu_custom_call.1} parent=51 // pred_check_branch
        %452 = sbr.rel target = $region176
      $region175: #{tpu_custom_call.1} parent=51 // pred_region
        // Predicated region
        $region188: #{tpu_custom_call.1} parent=175 // pred_check
          _
        $region189: #{tpu_custom_call.1} parent=175 // pred_check_branch
          %468 = sbr.rel (0) target = $region191
        $region190: #{tpu_custom_call.1} parent=175 // pred_region
          %s470 = ssub.s32 2, 1
          loop: start=0, step=1, limit=1
          $region192: #{tpu_custom_call.1} parent=190 // loop_pre_header
            _
          $region193: #{tpu_custom_call.1} parent=190 // loop_header
            %s472 = sphi 0, %s476
            %p473 = scmp.ge.s32.totalorder %s472, 1
            %s477 = sphi %s449, %s449
            %s478 = sphi %s450, %s450
          $region194: #{tpu_custom_call.1} parent=190 // loop_header_branch
            %475 = sbr.rel (%p473) target = $region198
          $region195: #{tpu_custom_call.1} parent=190 // loop_body
            %v479 = vld [vmem:[%s477] sm:%s470]
            %480 = vst [vmem:[%s478] sm:%s470] %v479
          $region196: #{tpu_custom_call.1} parent=190 // loop_footer
            %s476 = sadd.s32 1, %s472
          $region197: #{tpu_custom_call.1} parent=190 // loop_footer_branch
            %471 = sbr.rel target = $region193
          $region198: #{tpu_custom_call.1} parent=190 // loop_exit
            _
        $region191: #{tpu_custom_call.1} parent=175 // pred_fallthru
          _
      $region176: #{tpu_custom_call.1} parent=51 // pred_fallthru
        _
      // Predicated region
      $region177: #{tpu_custom_call.1} parent=51 // pred_check
        _
      $region178: #{tpu_custom_call.1} parent=51 // pred_check_branch
        %454 = sbr.rel (0) target = $region180
      $region179: #{tpu_custom_call.1} parent=51 // pred_region
        %s456 = ssub.s32 2, 1
        loop: start=0, step=1, limit=1
        $region181: #{tpu_custom_call.1} parent=179 // loop_pre_header
          _
        $region182: #{tpu_custom_call.1} parent=179 // loop_header
          %s458 = sphi 0, %s462
          %p459 = scmp.ge.s32.totalorder %s458, 1
          %s463 = sphi %s449, %s449
          %s464 = sphi %s450, %s450
        $region183: #{tpu_custom_call.1} parent=179 // loop_header_branch
          %461 = sbr.rel (%p459) target = $region187
        $region184: #{tpu_custom_call.1} parent=179 // loop_body
          %v465 = vld [vmem:[%s463] sm:%s456]
          %466 = vst [vmem:[%s464] sm:%s456] %v465
        $region185: #{tpu_custom_call.1} parent=179 // loop_footer
          %s462 = sadd.s32 1, %s458
        $region186: #{tpu_custom_call.1} parent=179 // loop_footer_branch
          %457 = sbr.rel target = $region182
        $region187: #{tpu_custom_call.1} parent=179 // loop_exit
          _
      $region180: #{tpu_custom_call.1} parent=51 // pred_fallthru
        _
      // Predicated region
      $region199: #{tpu_custom_call.1} parent=51 // pred_check
        _
      $region200: #{tpu_custom_call.1} parent=51 // pred_check_branch
        %483 = sbr.rel (0) target = $region202
      $region201: #{tpu_custom_call.1} parent=51 // pred_region
        %484 = vsyncadd [#allocation3], 16
      $region202: #{tpu_custom_call.1} parent=51 // pred_fallthru
        _
      %s485 = sadd.s32 %s296, 5
      %s486 = sld [smem:[#allocation5 + %s485]]
      %s487 = scalar_lea.vmem %s1, %s486
      %s488 = scalar_lea.vmem [#allocation2], 1
      // Predicated region
      $region203: #{tpu_custom_call.1} parent=51 // pred_check
        _
      $region204: #{tpu_custom_call.1} parent=51 // pred_check_branch
        %490 = sbr.rel target = $region206
      $region205: #{tpu_custom_call.1} parent=51 // pred_region
        // Predicated region
        $region218: #{tpu_custom_call.1} parent=205 // pred_check
          _
        $region219: #{tpu_custom_call.1} parent=205 // pred_check_branch
          %506 = sbr.rel (0) target = $region221
        $region220: #{tpu_custom_call.1} parent=205 // pred_region
          %s508 = ssub.s32 2, 1
          loop: start=0, step=1, limit=1
          $region222: #{tpu_custom_call.1} parent=220 // loop_pre_header
            _
          $region223: #{tpu_custom_call.1} parent=220 // loop_header
            %s510 = sphi 0, %s514
            %p511 = scmp.ge.s32.totalorder %s510, 1
            %s515 = sphi %s487, %s487
            %s516 = sphi %s488, %s488
          $region224: #{tpu_custom_call.1} parent=220 // loop_header_branch
            %513 = sbr.rel (%p511) target = $region228
          $region225: #{tpu_custom_call.1} parent=220 // loop_body
            %v517 = vld [vmem:[%s515] sm:%s508]
            %518 = vst [vmem:[%s516] sm:%s508] %v517
          $region226: #{tpu_custom_call.1} parent=220 // loop_footer
            %s514 = sadd.s32 1, %s510
          $region227: #{tpu_custom_call.1} parent=220 // loop_footer_branch
            %509 = sbr.rel target = $region223
          $region228: #{tpu_custom_call.1} parent=220 // loop_exit
            _
        $region221: #{tpu_custom_call.1} parent=205 // pred_fallthru
          _
      $region206: #{tpu_custom_call.1} parent=51 // pred_fallthru
        _
      // Predicated region
      $region207: #{tpu_custom_call.1} parent=51 // pred_check
        _
      $region208: #{tpu_custom_call.1} parent=51 // pred_check_branch
        %492 = sbr.rel (0) target = $region210
      $region209: #{tpu_custom_call.1} parent=51 // pred_region
        %s494 = ssub.s32 2, 1
        loop: start=0, step=1, limit=1
        $region211: #{tpu_custom_call.1} parent=209 // loop_pre_header
          _
        $region212: #{tpu_custom_call.1} parent=209 // loop_header
          %s496 = sphi 0, %s500
          %p497 = scmp.ge.s32.totalorder %s496, 1
          %s501 = sphi %s487, %s487
          %s502 = sphi %s488, %s488
        $region213: #{tpu_custom_call.1} parent=209 // loop_header_branch
          %499 = sbr.rel (%p497) target = $region217
        $region214: #{tpu_custom_call.1} parent=209 // loop_body
          %v503 = vld [vmem:[%s501] sm:%s494]
          %504 = vst [vmem:[%s502] sm:%s494] %v503
        $region215: #{tpu_custom_call.1} parent=209 // loop_footer
          %s500 = sadd.s32 1, %s496
        $region216: #{tpu_custom_call.1} parent=209 // loop_footer_branch
          %495 = sbr.rel target = $region212
        $region217: #{tpu_custom_call.1} parent=209 // loop_exit
          _
      $region210: #{tpu_custom_call.1} parent=51 // pred_fallthru
        _
      // Predicated region
      $region229: #{tpu_custom_call.1} parent=51 // pred_check
        _
      $region230: #{tpu_custom_call.1} parent=51 // pred_check_branch
        %521 = sbr.rel (0) target = $region232
      $region231: #{tpu_custom_call.1} parent=51 // pred_region
        %522 = vsyncadd [#allocation3], 16
      $region232: #{tpu_custom_call.1} parent=51 // pred_fallthru
        _
      %s523 = sadd.s32 %s296, 6
      %s524 = sld [smem:[#allocation5 + %s523]]
      %s525 = scalar_lea.vmem %s1, %s524
      %s526 = scalar_lea.vmem [#allocation2], 9
      // Predicated region
      $region233: #{tpu_custom_call.1} parent=51 // pred_check
        _
      $region234: #{tpu_custom_call.1} parent=51 // pred_check_branch
        %528 = sbr.rel target = $region236
      $region235: #{tpu_custom_call.1} parent=51 // pred_region
        // Predicated region
        $region248: #{tpu_custom_call.1} parent=235 // pred_check
          _
        $region249: #{tpu_custom_call.1} parent=235 // pred_check_branch
          %544 = sbr.rel (0) target = $region251
        $region250: #{tpu_custom_call.1} parent=235 // pred_region
          %s546 = ssub.s32 2, 1
          loop: start=0, step=1, limit=1
          $region252: #{tpu_custom_call.1} parent=250 // loop_pre_header
            _
          $region253: #{tpu_custom_call.1} parent=250 // loop_header
            %s548 = sphi 0, %s552
            %p549 = scmp.ge.s32.totalorder %s548, 1
            %s553 = sphi %s525, %s525
            %s554 = sphi %s526, %s526
          $region254: #{tpu_custom_call.1} parent=250 // loop_header_branch
            %551 = sbr.rel (%p549) target = $region258
          $region255: #{tpu_custom_call.1} parent=250 // loop_body
            %v555 = vld [vmem:[%s553] sm:%s546]
            %556 = vst [vmem:[%s554] sm:%s546] %v555
          $region256: #{tpu_custom_call.1} parent=250 // loop_footer
            %s552 = sadd.s32 1, %s548
          $region257: #{tpu_custom_call.1} parent=250 // loop_footer_branch
            %547 = sbr.rel target = $region253
          $region258: #{tpu_custom_call.1} parent=250 // loop_exit
            _
        $region251: #{tpu_custom_call.1} parent=235 // pred_fallthru
          _
      $region236: #{tpu_custom_call.1} parent=51 // pred_fallthru
        _
      // Predicated region
      $region237: #{tpu_custom_call.1} parent=51 // pred_check
        _
      $region238: #{tpu_custom_call.1} parent=51 // pred_check_branch
        %530 = sbr.rel (0) target = $region240
      $region239: #{tpu_custom_call.1} parent=51 // pred_region
        %s532 = ssub.s32 2, 1
        loop: start=0, step=1, limit=1
        $region241: #{tpu_custom_call.1} parent=239 // loop_pre_header
          _
        $region242: #{tpu_custom_call.1} parent=239 // loop_header
          %s534 = sphi 0, %s538
          %p535 = scmp.ge.s32.totalorder %s534, 1
          %s539 = sphi %s525, %s525
          %s540 = sphi %s526, %s526
        $region243: #{tpu_custom_call.1} parent=239 // loop_header_branch
          %537 = sbr.rel (%p535) target = $region247
        $region244: #{tpu_custom_call.1} parent=239 // loop_body
          %v541 = vld [vmem:[%s539] sm:%s532]
          %542 = vst [vmem:[%s540] sm:%s532] %v541
        $region245: #{tpu_custom_call.1} parent=239 // loop_footer
          %s538 = sadd.s32 1, %s534
        $region246: #{tpu_custom_call.1} parent=239 // loop_footer_branch
          %533 = sbr.rel target = $region242
        $region247: #{tpu_custom_call.1} parent=239 // loop_exit
          _
      $region240: #{tpu_custom_call.1} parent=51 // pred_fallthru
        _
      // Predicated region
      $region259: #{tpu_custom_call.1} parent=51 // pred_check
        _
      $region260: #{tpu_custom_call.1} parent=51 // pred_check_branch
        %559 = sbr.rel (0) target = $region262
      $region261: #{tpu_custom_call.1} parent=51 // pred_region
        %560 = vsyncadd [#allocation3], 16
      $region262: #{tpu_custom_call.1} parent=51 // pred_fallthru
        _
      %s561 = sadd.s32 %s296, 7
      %s562 = sld [smem:[#allocation5 + %s561]]
      %s563 = scalar_lea.vmem %s1, %s562
      %s564 = scalar_lea.vmem [#allocation2], 17
      // Predicated region
      $region263: #{tpu_custom_call.1} parent=51 // pred_check
        _
      $region264: #{tpu_custom_call.1} parent=51 // pred_check_branch
        %566 = sbr.rel target = $region266
      $region265: #{tpu_custom_call.1} parent=51 // pred_region
        // Predicated region
        $region278: #{tpu_custom_call.1} parent=265 // pred_check
          _
        $region279: #{tpu_custom_call.1} parent=265 // pred_check_branch
          %582 = sbr.rel (0) target = $region281
        $region280: #{tpu_custom_call.1} parent=265 // pred_region
          %s584 = ssub.s32 2, 1
          loop: start=0, step=1, limit=1
          $region282: #{tpu_custom_call.1} parent=280 // loop_pre_header
            _
          $region283: #{tpu_custom_call.1} parent=280 // loop_header
            %s586 = sphi 0, %s590
            %p587 = scmp.ge.s32.totalorder %s586, 1
            %s591 = sphi %s563, %s563
            %s592 = sphi %s564, %s564
          $region284: #{tpu_custom_call.1} parent=280 // loop_header_branch
            %589 = sbr.rel (%p587) target = $region288
          $region285: #{tpu_custom_call.1} parent=280 // loop_body
            %v593 = vld [vmem:[%s591] sm:%s584]
            %594 = vst [vmem:[%s592] sm:%s584] %v593
          $region286: #{tpu_custom_call.1} parent=280 // loop_footer
            %s590 = sadd.s32 1, %s586
          $region287: #{tpu_custom_call.1} parent=280 // loop_footer_branch
            %585 = sbr.rel target = $region283
          $region288: #{tpu_custom_call.1} parent=280 // loop_exit
            _
        $region281: #{tpu_custom_call.1} parent=265 // pred_fallthru
          _
      $region266: #{tpu_custom_call.1} parent=51 // pred_fallthru
        _
      // Predicated region
      $region267: #{tpu_custom_call.1} parent=51 // pred_check
        _
      $region268: #{tpu_custom_call.1} parent=51 // pred_check_branch
        %568 = sbr.rel (0) target = $region270
      $region269: #{tpu_custom_call.1} parent=51 // pred_region
        %s570 = ssub.s32 2, 1
        loop: start=0, step=1, limit=1
        $region271: #{tpu_custom_call.1} parent=269 // loop_pre_header
          _
        $region272: #{tpu_custom_call.1} parent=269 // loop_header
          %s572 = sphi 0, %s576
          %p573 = scmp.ge.s32.totalorder %s572, 1
          %s577 = sphi %s563, %s563
          %s578 = sphi %s564, %s564
        $region273: #{tpu_custom_call.1} parent=269 // loop_header_branch
          %575 = sbr.rel (%p573) target = $region277
        $region274: #{tpu_custom_call.1} parent=269 // loop_body
          %v579 = vld [vmem:[%s577] sm:%s570]
          %580 = vst [vmem:[%s578] sm:%s570] %v579
        $region275: #{tpu_custom_call.1} parent=269 // loop_footer
          %s576 = sadd.s32 1, %s572
        $region276: #{tpu_custom_call.1} parent=269 // loop_footer_branch
          %571 = sbr.rel target = $region272
        $region277: #{tpu_custom_call.1} parent=269 // loop_exit
          _
      $region270: #{tpu_custom_call.1} parent=51 // pred_fallthru
        _
      // Predicated region
      $region289: #{tpu_custom_call.1} parent=51 // pred_check
        _
      $region290: #{tpu_custom_call.1} parent=51 // pred_check_branch
        %597 = sbr.rel (0) target = $region292
      $region291: #{tpu_custom_call.1} parent=51 // pred_region
        %598 = vsyncadd [#allocation3], 16
      $region292: #{tpu_custom_call.1} parent=51 // pred_fallthru
        _
      %s599 = sadd.s32 %s296, 8
      %s600 = sld [smem:[#allocation5 + %s599]]
      %s601 = scalar_lea.vmem %s1, %s600
      %s602 = scalar_lea.vmem [#allocation2], 25
      // Predicated region
      $region293: #{tpu_custom_call.1} parent=51 // pred_check
        _
      $region294: #{tpu_custom_call.1} parent=51 // pred_check_branch
        %604 = sbr.rel target = $region296
      $region295: #{tpu_custom_call.1} parent=51 // pred_region
        // Predicated region
        $region308: #{tpu_custom_call.1} parent=295 // pred_check
          _
        $region309: #{tpu_custom_call.1} parent=295 // pred_check_branch
          %620 = sbr.rel (0) target = $region311
        $region310: #{tpu_custom_call.1} parent=295 // pred_region
          %s622 = ssub.s32 2, 1
          loop: start=0, step=1, limit=1
          $region312: #{tpu_custom_call.1} parent=310 // loop_pre_header
            _
          $region313: #{tpu_custom_call.1} parent=310 // loop_header
            %s624 = sphi 0, %s628
            %p625 = scmp.ge.s32.totalorder %s624, 1
            %s629 = sphi %s601, %s601
            %s630 = sphi %s602, %s602
          $region314: #{tpu_custom_call.1} parent=310 // loop_header_branch
            %627 = sbr.rel (%p625) target = $region318
          $region315: #{tpu_custom_call.1} parent=310 // loop_body
            %v631 = vld [vmem:[%s629] sm:%s622]
            %632 = vst [vmem:[%s630] sm:%s622] %v631
          $region316: #{tpu_custom_call.1} parent=310 // loop_footer
            %s628 = sadd.s32 1, %s624
          $region317: #{tpu_custom_call.1} parent=310 // loop_footer_branch
            %623 = sbr.rel target = $region313
          $region318: #{tpu_custom_call.1} parent=310 // loop_exit
            _
        $region311: #{tpu_custom_call.1} parent=295 // pred_fallthru
          _
      $region296: #{tpu_custom_call.1} parent=51 // pred_fallthru
        _
      // Predicated region
      $region297: #{tpu_custom_call.1} parent=51 // pred_check
        _
      $region298: #{tpu_custom_call.1} parent=51 // pred_check_branch
        %606 = sbr.rel (0) target = $region300
      $region299: #{tpu_custom_call.1} parent=51 // pred_region
        %s608 = ssub.s32 2, 1
        loop: start=0, step=1, limit=1
        $region301: #{tpu_custom_call.1} parent=299 // loop_pre_header
          _
        $region302: #{tpu_custom_call.1} parent=299 // loop_header
          %s610 = sphi 0, %s614
          %p611 = scmp.ge.s32.totalorder %s610, 1
          %s615 = sphi %s601, %s601
          %s616 = sphi %s602, %s602
        $region303: #{tpu_custom_call.1} parent=299 // loop_header_branch
          %613 = sbr.rel (%p611) target = $region307
        $region304: #{tpu_custom_call.1} parent=299 // loop_body
          %v617 = vld [vmem:[%s615] sm:%s608]
          %618 = vst [vmem:[%s616] sm:%s608] %v617
        $region305: #{tpu_custom_call.1} parent=299 // loop_footer
          %s614 = sadd.s32 1, %s610
        $region306: #{tpu_custom_call.1} parent=299 // loop_footer_branch
          %609 = sbr.rel target = $region302
        $region307: #{tpu_custom_call.1} parent=299 // loop_exit
          _
      $region300: #{tpu_custom_call.1} parent=51 // pred_fallthru
        _
      // Predicated region
      $region319: #{tpu_custom_call.1} parent=51 // pred_check
        _
      $region320: #{tpu_custom_call.1} parent=51 // pred_check_branch
        %635 = sbr.rel (0) target = $region322
      $region321: #{tpu_custom_call.1} parent=51 // pred_region
        %636 = vsyncadd [#allocation3], 16
      $region322: #{tpu_custom_call.1} parent=51 // pred_fallthru
        _
      %s637 = sadd.s32 %s296, 9
      %s638 = sld [smem:[#allocation5 + %s637]]
      %s639 = scalar_lea.vmem %s1, %s638
      %s640 = scalar_lea.vmem [#allocation2], 33
      // Predicated region
      $region323: #{tpu_custom_call.1} parent=51 // pred_check
        _
      $region324: #{tpu_custom_call.1} parent=51 // pred_check_branch
        %642 = sbr.rel target = $region326
      $region325: #{tpu_custom_call.1} parent=51 // pred_region
        // Predicated region
        $region338: #{tpu_custom_call.1} parent=325 // pred_check
          _
        $region339: #{tpu_custom_call.1} parent=325 // pred_check_branch
          %658 = sbr.rel (0) target = $region341
        $region340: #{tpu_custom_call.1} parent=325 // pred_region
          %s660 = ssub.s32 2, 1
          loop: start=0, step=1, limit=1
          $region342: #{tpu_custom_call.1} parent=340 // loop_pre_header
            _
          $region343: #{tpu_custom_call.1} parent=340 // loop_header
            %s662 = sphi 0, %s666
            %p663 = scmp.ge.s32.totalorder %s662, 1
            %s667 = sphi %s639, %s639
            %s668 = sphi %s640, %s640
          $region344: #{tpu_custom_call.1} parent=340 // loop_header_branch
            %665 = sbr.rel (%p663) target = $region348
          $region345: #{tpu_custom_call.1} parent=340 // loop_body
            %v669 = vld [vmem:[%s667] sm:%s660]
            %670 = vst [vmem:[%s668] sm:%s660] %v669
          $region346: #{tpu_custom_call.1} parent=340 // loop_footer
            %s666 = sadd.s32 1, %s662
          $region347: #{tpu_custom_call.1} parent=340 // loop_footer_branch
            %661 = sbr.rel target = $region343
          $region348: #{tpu_custom_call.1} parent=340 // loop_exit
            _
        $region341: #{tpu_custom_call.1} parent=325 // pred_fallthru
          _
      $region326: #{tpu_custom_call.1} parent=51 // pred_fallthru
        _
      // Predicated region
      $region327: #{tpu_custom_call.1} parent=51 // pred_check
        _
      $region328: #{tpu_custom_call.1} parent=51 // pred_check_branch
        %644 = sbr.rel (0) target = $region330
      $region329: #{tpu_custom_call.1} parent=51 // pred_region
        %s646 = ssub.s32 2, 1
        loop: start=0, step=1, limit=1
        $region331: #{tpu_custom_call.1} parent=329 // loop_pre_header
          _
        $region332: #{tpu_custom_call.1} parent=329 // loop_header
          %s648 = sphi 0, %s652
          %p649 = scmp.ge.s32.totalorder %s648, 1
          %s653 = sphi %s639, %s639
          %s654 = sphi %s640, %s640
        $region333: #{tpu_custom_call.1} parent=329 // loop_header_branch
          %651 = sbr.rel (%p649) target = $region337
        $region334: #{tpu_custom_call.1} parent=329 // loop_body
          %v655 = vld [vmem:[%s653] sm:%s646]
          %656 = vst [vmem:[%s654] sm:%s646] %v655
        $region335: #{tpu_custom_call.1} parent=329 // loop_footer
          %s652 = sadd.s32 1, %s648
        $region336: #{tpu_custom_call.1} parent=329 // loop_footer_branch
          %647 = sbr.rel target = $region332
        $region337: #{tpu_custom_call.1} parent=329 // loop_exit
          _
      $region330: #{tpu_custom_call.1} parent=51 // pred_fallthru
        _
      // Predicated region
      $region349: #{tpu_custom_call.1} parent=51 // pred_check
        _
      $region350: #{tpu_custom_call.1} parent=51 // pred_check_branch
        %673 = sbr.rel (0) target = $region352
      $region351: #{tpu_custom_call.1} parent=51 // pred_region
        %674 = vsyncadd [#allocation3], 16
      $region352: #{tpu_custom_call.1} parent=51 // pred_fallthru
        _
      %s675 = sadd.s32 %s296, 10
      %s676 = sld [smem:[#allocation5 + %s675]]
      %s677 = scalar_lea.vmem %s1, %s676
      %s678 = scalar_lea.vmem [#allocation2], 2
      // Predicated region
      $region353: #{tpu_custom_call.1} parent=51 // pred_check
        _
      $region354: #{tpu_custom_call.1} parent=51 // pred_check_branch
        %680 = sbr.rel target = $region356
      $region355: #{tpu_custom_call.1} parent=51 // pred_region
        // Predicated region
        $region368: #{tpu_custom_call.1} parent=355 // pred_check
          _
        $region369: #{tpu_custom_call.1} parent=355 // pred_check_branch
          %696 = sbr.rel (0) target = $region371
        $region370: #{tpu_custom_call.1} parent=355 // pred_region
          %s698 = ssub.s32 2, 1
          loop: start=0, step=1, limit=1
          $region372: #{tpu_custom_call.1} parent=370 // loop_pre_header
            _
          $region373: #{tpu_custom_call.1} parent=370 // loop_header
            %s700 = sphi 0, %s704
            %p701 = scmp.ge.s32.totalorder %s700, 1
            %s705 = sphi %s677, %s677
            %s706 = sphi %s678, %s678
          $region374: #{tpu_custom_call.1} parent=370 // loop_header_branch
            %703 = sbr.rel (%p701) target = $region378
          $region375: #{tpu_custom_call.1} parent=370 // loop_body
            %v707 = vld [vmem:[%s705] sm:%s698]
            %708 = vst [vmem:[%s706] sm:%s698] %v707
          $region376: #{tpu_custom_call.1} parent=370 // loop_footer
            %s704 = sadd.s32 1, %s700
          $region377: #{tpu_custom_call.1} parent=370 // loop_footer_branch
            %699 = sbr.rel target = $region373
          $region378: #{tpu_custom_call.1} parent=370 // loop_exit
            _
        $region371: #{tpu_custom_call.1} parent=355 // pred_fallthru
          _
      $region356: #{tpu_custom_call.1} parent=51 // pred_fallthru
        _
      // Predicated region
      $region357: #{tpu_custom_call.1} parent=51 // pred_check
        _
      $region358: #{tpu_custom_call.1} parent=51 // pred_check_branch
        %682 = sbr.rel (0) target = $region360
      $region359: #{tpu_custom_call.1} parent=51 // pred_region
        %s684 = ssub.s32 2, 1
        loop: start=0, step=1, limit=1
        $region361: #{tpu_custom_call.1} parent=359 // loop_pre_header
          _
        $region362: #{tpu_custom_call.1} parent=359 // loop_header
          %s686 = sphi 0, %s690
          %p687 = scmp.ge.s32.totalorder %s686, 1
          %s691 = sphi %s677, %s677
          %s692 = sphi %s678, %s678
        $region363: #{tpu_custom_call.1} parent=359 // loop_header_branch
          %689 = sbr.rel (%p687) target = $region367
        $region364: #{tpu_custom_call.1} parent=359 // loop_body
          %v693 = vld [vmem:[%s691] sm:%s684]
          %694 = vst [vmem:[%s692] sm:%s684] %v693
        $region365: #{tpu_custom_call.1} parent=359 // loop_footer
          %s690 = sadd.s32 1, %s686
        $region366: #{tpu_custom_call.1} parent=359 // loop_footer_branch
          %685 = sbr.rel target = $region362
        $region367: #{tpu_custom_call.1} parent=359 // loop_exit
          _
      $region360: #{tpu_custom_call.1} parent=51 // pred_fallthru
        _
      // Predicated region
      $region379: #{tpu_custom_call.1} parent=51 // pred_check
        _
      $region380: #{tpu_custom_call.1} parent=51 // pred_check_branch
        %711 = sbr.rel (0) target = $region382
      $region381: #{tpu_custom_call.1} parent=51 // pred_region
        %712 = vsyncadd [#allocation3], 16
      $region382: #{tpu_custom_call.1} parent=51 // pred_fallthru
        _
      %s713 = sadd.s32 %s296, 11
      %s714 = sld [smem:[#allocation5 + %s713]]
      %s715 = scalar_lea.vmem %s1, %s714
      %s716 = scalar_lea.vmem [#allocation2], 10
      // Predicated region
      $region383: #{tpu_custom_call.1} parent=51 // pred_check
        _
      $region384: #{tpu_custom_call.1} parent=51 // pred_check_branch
        %718 = sbr.rel target = $region386
      $region385: #{tpu_custom_call.1} parent=51 // pred_region
        // Predicated region
        $region398: #{tpu_custom_call.1} parent=385 // pred_check
          _
        $region399: #{tpu_custom_call.1} parent=385 // pred_check_branch
          %734 = sbr.rel (0) target = $region401
        $region400: #{tpu_custom_call.1} parent=385 // pred_region
          %s736 = ssub.s32 2, 1
          loop: start=0, step=1, limit=1
          $region402: #{tpu_custom_call.1} parent=400 // loop_pre_header
            _
          $region403: #{tpu_custom_call.1} parent=400 // loop_header
            %s738 = sphi 0, %s742
            %p739 = scmp.ge.s32.totalorder %s738, 1
            %s743 = sphi %s715, %s715
            %s744 = sphi %s716, %s716
          $region404: #{tpu_custom_call.1} parent=400 // loop_header_branch
            %741 = sbr.rel (%p739) target = $region408
          $region405: #{tpu_custom_call.1} parent=400 // loop_body
            %v745 = vld [vmem:[%s743] sm:%s736]
            %746 = vst [vmem:[%s744] sm:%s736] %v745
          $region406: #{tpu_custom_call.1} parent=400 // loop_footer
            %s742 = sadd.s32 1, %s738
          $region407: #{tpu_custom_call.1} parent=400 // loop_footer_branch
            %737 = sbr.rel target = $region403
          $region408: #{tpu_custom_call.1} parent=400 // loop_exit
            _
        $region401: #{tpu_custom_call.1} parent=385 // pred_fallthru
          _
      $region386: #{tpu_custom_call.1} parent=51 // pred_fallthru
        _
      // Predicated region
      $region387: #{tpu_custom_call.1} parent=51 // pred_check
        _
      $region388: #{tpu_custom_call.1} parent=51 // pred_check_branch
        %720 = sbr.rel (0) target = $region390
      $region389: #{tpu_custom_call.1} parent=51 // pred_region
        %s722 = ssub.s32 2, 1
        loop: start=0, step=1, limit=1
        $region391: #{tpu_custom_call.1} parent=389 // loop_pre_header
          _
        $region392: #{tpu_custom_call.1} parent=389 // loop_header
          %s724 = sphi 0, %s728
          %p725 = scmp.ge.s32.totalorder %s724, 1
          %s729 = sphi %s715, %s715
          %s730 = sphi %s716, %s716
        $region393: #{tpu_custom_call.1} parent=389 // loop_header_branch
          %727 = sbr.rel (%p725) target = $region397
        $region394: #{tpu_custom_call.1} parent=389 // loop_body
          %v731 = vld [vmem:[%s729] sm:%s722]
          %732 = vst [vmem:[%s730] sm:%s722] %v731
        $region395: #{tpu_custom_call.1} parent=389 // loop_footer
          %s728 = sadd.s32 1, %s724
        $region396: #{tpu_custom_call.1} parent=389 // loop_footer_branch
          %723 = sbr.rel target = $region392
        $region397: #{tpu_custom_call.1} parent=389 // loop_exit
          _
      $region390: #{tpu_custom_call.1} parent=51 // pred_fallthru
        _
      // Predicated region
      $region409: #{tpu_custom_call.1} parent=51 // pred_check
        _
      $region410: #{tpu_custom_call.1} parent=51 // pred_check_branch
        %749 = sbr.rel (0) target = $region412
      $region411: #{tpu_custom_call.1} parent=51 // pred_region
        %750 = vsyncadd [#allocation3], 16
      $region412: #{tpu_custom_call.1} parent=51 // pred_fallthru
        _
      %s751 = sadd.s32 %s296, 12
      %s752 = sld [smem:[#allocation5 + %s751]]
      %s753 = scalar_lea.vmem %s1, %s752
      %s754 = scalar_lea.vmem [#allocation2], 18
      // Predicated region
      $region413: #{tpu_custom_call.1} parent=51 // pred_check
        _
      $region414: #{tpu_custom_call.1} parent=51 // pred_check_branch
        %756 = sbr.rel target = $region416
      $region415: #{tpu_custom_call.1} parent=51 // pred_region
        // Predicated region
        $region428: #{tpu_custom_call.1} parent=415 // pred_check
          _
        $region429: #{tpu_custom_call.1} parent=415 // pred_check_branch
          %772 = sbr.rel (0) target = $region431
        $region430: #{tpu_custom_call.1} parent=415 // pred_region
          %s774 = ssub.s32 2, 1
          loop: start=0, step=1, limit=1
          $region432: #{tpu_custom_call.1} parent=430 // loop_pre_header
            _
          $region433: #{tpu_custom_call.1} parent=430 // loop_header
            %s776 = sphi 0, %s780
            %p777 = scmp.ge.s32.totalorder %s776, 1
            %s781 = sphi %s753, %s753
            %s782 = sphi %s754, %s754
          $region434: #{tpu_custom_call.1} parent=430 // loop_header_branch
            %779 = sbr.rel (%p777) target = $region438
          $region435: #{tpu_custom_call.1} parent=430 // loop_body
            %v783 = vld [vmem:[%s781] sm:%s774]
            %784 = vst [vmem:[%s782] sm:%s774] %v783
          $region436: #{tpu_custom_call.1} parent=430 // loop_footer
            %s780 = sadd.s32 1, %s776
          $region437: #{tpu_custom_call.1} parent=430 // loop_footer_branch
            %775 = sbr.rel target = $region433
          $region438: #{tpu_custom_call.1} parent=430 // loop_exit
            _
        $region431: #{tpu_custom_call.1} parent=415 // pred_fallthru
          _
      $region416: #{tpu_custom_call.1} parent=51 // pred_fallthru
        _
      // Predicated region
      $region417: #{tpu_custom_call.1} parent=51 // pred_check
        _
      $region418: #{tpu_custom_call.1} parent=51 // pred_check_branch
        %758 = sbr.rel (0) target = $region420
      $region419: #{tpu_custom_call.1} parent=51 // pred_region
        %s760 = ssub.s32 2, 1
        loop: start=0, step=1, limit=1
        $region421: #{tpu_custom_call.1} parent=419 // loop_pre_header
          _
        $region422: #{tpu_custom_call.1} parent=419 // loop_header
          %s762 = sphi 0, %s766
          %p763 = scmp.ge.s32.totalorder %s762, 1
          %s767 = sphi %s753, %s753
          %s768 = sphi %s754, %s754
        $region423: #{tpu_custom_call.1} parent=419 // loop_header_branch
          %765 = sbr.rel (%p763) target = $region427
        $region424: #{tpu_custom_call.1} parent=419 // loop_body
          %v769 = vld [vmem:[%s767] sm:%s760]
          %770 = vst [vmem:[%s768] sm:%s760] %v769
        $region425: #{tpu_custom_call.1} parent=419 // loop_footer
          %s766 = sadd.s32 1, %s762
        $region426: #{tpu_custom_call.1} parent=419 // loop_footer_branch
          %761 = sbr.rel target = $region422
        $region427: #{tpu_custom_call.1} parent=419 // loop_exit
          _
      $region420: #{tpu_custom_call.1} parent=51 // pred_fallthru
        _
      // Predicated region
      $region439: #{tpu_custom_call.1} parent=51 // pred_check
        _
      $region440: #{tpu_custom_call.1} parent=51 // pred_check_branch
        %787 = sbr.rel (0) target = $region442
      $region441: #{tpu_custom_call.1} parent=51 // pred_region
        %788 = vsyncadd [#allocation3], 16
      $region442: #{tpu_custom_call.1} parent=51 // pred_fallthru
        _
      %s789 = sadd.s32 %s296, 13
      %s790 = sld [smem:[#allocation5 + %s789]]
      %s791 = scalar_lea.vmem %s1, %s790
      %s792 = scalar_lea.vmem [#allocation2], 26
      // Predicated region
      $region443: #{tpu_custom_call.1} parent=51 // pred_check
        _
      $region444: #{tpu_custom_call.1} parent=51 // pred_check_branch
        %794 = sbr.rel target = $region446
      $region445: #{tpu_custom_call.1} parent=51 // pred_region
        // Predicated region
        $region458: #{tpu_custom_call.1} parent=445 // pred_check
          _
        $region459: #{tpu_custom_call.1} parent=445 // pred_check_branch
          %810 = sbr.rel (0) target = $region461
        $region460: #{tpu_custom_call.1} parent=445 // pred_region
          %s812 = ssub.s32 2, 1
          loop: start=0, step=1, limit=1
          $region462: #{tpu_custom_call.1} parent=460 // loop_pre_header
            _
          $region463: #{tpu_custom_call.1} parent=460 // loop_header
            %s814 = sphi 0, %s818
            %p815 = scmp.ge.s32.totalorder %s814, 1
            %s819 = sphi %s791, %s791
            %s820 = sphi %s792, %s792
          $region464: #{tpu_custom_call.1} parent=460 // loop_header_branch
            %817 = sbr.rel (%p815) target = $region468
          $region465: #{tpu_custom_call.1} parent=460 // loop_body
            %v821 = vld [vmem:[%s819] sm:%s812]
            %822 = vst [vmem:[%s820] sm:%s812] %v821
          $region466: #{tpu_custom_call.1} parent=460 // loop_footer
            %s818 = sadd.s32 1, %s814
          $region467: #{tpu_custom_call.1} parent=460 // loop_footer_branch
            %813 = sbr.rel target = $region463
          $region468: #{tpu_custom_call.1} parent=460 // loop_exit
            _
        $region461: #{tpu_custom_call.1} parent=445 // pred_fallthru
          _
      $region446: #{tpu_custom_call.1} parent=51 // pred_fallthru
        _
      // Predicated region
      $region447: #{tpu_custom_call.1} parent=51 // pred_check
        _
      $region448: #{tpu_custom_call.1} parent=51 // pred_check_branch
        %796 = sbr.rel (0) target = $region450
      $region449: #{tpu_custom_call.1} parent=51 // pred_region
        %s798 = ssub.s32 2, 1
        loop: start=0, step=1, limit=1
        $region451: #{tpu_custom_call.1} parent=449 // loop_pre_header
          _
        $region452: #{tpu_custom_call.1} parent=449 // loop_header
          %s800 = sphi 0, %s804
          %p801 = scmp.ge.s32.totalorder %s800, 1
          %s805 = sphi %s791, %s791
          %s806 = sphi %s792, %s792
        $region453: #{tpu_custom_call.1} parent=449 // loop_header_branch
          %803 = sbr.rel (%p801) target = $region457
        $region454: #{tpu_custom_call.1} parent=449 // loop_body
          %v807 = vld [vmem:[%s805] sm:%s798]
          %808 = vst [vmem:[%s806] sm:%s798] %v807
        $region455: #{tpu_custom_call.1} parent=449 // loop_footer
          %s804 = sadd.s32 1, %s800
        $region456: #{tpu_custom_call.1} parent=449 // loop_footer_branch
          %799 = sbr.rel target = $region452
        $region457: #{tpu_custom_call.1} parent=449 // loop_exit
          _
      $region450: #{tpu_custom_call.1} parent=51 // pred_fallthru
        _
      // Predicated region
      $region469: #{tpu_custom_call.1} parent=51 // pred_check
        _
      $region470: #{tpu_custom_call.1} parent=51 // pred_check_branch
        %825 = sbr.rel (0) target = $region472
      $region471: #{tpu_custom_call.1} parent=51 // pred_region
        %826 = vsyncadd [#allocation3], 16
      $region472: #{tpu_custom_call.1} parent=51 // pred_fallthru
        _
      %s827 = sadd.s32 %s296, 14
      %s828 = sld [smem:[#allocation5 + %s827]]
      %s829 = scalar_lea.vmem %s1, %s828
      %s830 = scalar_lea.vmem [#allocation2], 34
      // Predicated region
      $region473: #{tpu_custom_call.1} parent=51 // pred_check
        _
      $region474: #{tpu_custom_call.1} parent=51 // pred_check_branch
        %832 = sbr.rel target = $region476
      $region475: #{tpu_custom_call.1} parent=51 // pred_region
        // Predicated region
        $region488: #{tpu_custom_call.1} parent=475 // pred_check
          _
        $region489: #{tpu_custom_call.1} parent=475 // pred_check_branch
          %848 = sbr.rel (0) target = $region491
        $region490: #{tpu_custom_call.1} parent=475 // pred_region
          %s850 = ssub.s32 2, 1
          loop: start=0, step=1, limit=1
          $region492: #{tpu_custom_call.1} parent=490 // loop_pre_header
            _
          $region493: #{tpu_custom_call.1} parent=490 // loop_header
            %s852 = sphi 0, %s856
            %p853 = scmp.ge.s32.totalorder %s852, 1
            %s857 = sphi %s829, %s829
            %s858 = sphi %s830, %s830
          $region494: #{tpu_custom_call.1} parent=490 // loop_header_branch
            %855 = sbr.rel (%p853) target = $region498
          $region495: #{tpu_custom_call.1} parent=490 // loop_body
            %v859 = vld [vmem:[%s857] sm:%s850]
            %860 = vst [vmem:[%s858] sm:%s850] %v859
          $region496: #{tpu_custom_call.1} parent=490 // loop_footer
            %s856 = sadd.s32 1, %s852
          $region497: #{tpu_custom_call.1} parent=490 // loop_footer_branch
            %851 = sbr.rel target = $region493
          $region498: #{tpu_custom_call.1} parent=490 // loop_exit
            _
        $region491: #{tpu_custom_call.1} parent=475 // pred_fallthru
          _
      $region476: #{tpu_custom_call.1} parent=51 // pred_fallthru
        _
      // Predicated region
      $region477: #{tpu_custom_call.1} parent=51 // pred_check
        _
      $region478: #{tpu_custom_call.1} parent=51 // pred_check_branch
        %834 = sbr.rel (0) target = $region480
      $region479: #{tpu_custom_call.1} parent=51 // pred_region
        %s836 = ssub.s32 2, 1
        loop: start=0, step=1, limit=1
        $region481: #{tpu_custom_call.1} parent=479 // loop_pre_header
          _
        $region482: #{tpu_custom_call.1} parent=479 // loop_header
          %s838 = sphi 0, %s842
          %p839 = scmp.ge.s32.totalorder %s838, 1
          %s843 = sphi %s829, %s829
          %s844 = sphi %s830, %s830
        $region483: #{tpu_custom_call.1} parent=479 // loop_header_branch
          %841 = sbr.rel (%p839) target = $region487
        $region484: #{tpu_custom_call.1} parent=479 // loop_body
          %v845 = vld [vmem:[%s843] sm:%s836]
          %846 = vst [vmem:[%s844] sm:%s836] %v845
        $region485: #{tpu_custom_call.1} parent=479 // loop_footer
          %s842 = sadd.s32 1, %s838
        $region486: #{tpu_custom_call.1} parent=479 // loop_footer_branch
          %837 = sbr.rel target = $region482
        $region487: #{tpu_custom_call.1} parent=479 // loop_exit
          _
      $region480: #{tpu_custom_call.1} parent=51 // pred_fallthru
        _
      // Predicated region
      $region499: #{tpu_custom_call.1} parent=51 // pred_check
        _
      $region500: #{tpu_custom_call.1} parent=51 // pred_check_branch
        %863 = sbr.rel (0) target = $region502
      $region501: #{tpu_custom_call.1} parent=51 // pred_region
        %864 = vsyncadd [#allocation3], 16
      $region502: #{tpu_custom_call.1} parent=51 // pred_fallthru
        _
      %s865 = sadd.s32 %s296, 15
      %s866 = sld [smem:[#allocation5 + %s865]]
      %s867 = scalar_lea.vmem %s1, %s866
      %s868 = scalar_lea.vmem [#allocation2], 3
      // Predicated region
      $region503: #{tpu_custom_call.1} parent=51 // pred_check
        _
      $region504: #{tpu_custom_call.1} parent=51 // pred_check_branch
        %870 = sbr.rel target = $region506
      $region505: #{tpu_custom_call.1} parent=51 // pred_region
        // Predicated region
        $region518: #{tpu_custom_call.1} parent=505 // pred_check
          _
        $region519: #{tpu_custom_call.1} parent=505 // pred_check_branch
          %886 = sbr.rel (0) target = $region521
        $region520: #{tpu_custom_call.1} parent=505 // pred_region
          %s888 = ssub.s32 2, 1
          loop: start=0, step=1, limit=1
          $region522: #{tpu_custom_call.1} parent=520 // loop_pre_header
            _
          $region523: #{tpu_custom_call.1} parent=520 // loop_header
            %s890 = sphi 0, %s894
            %p891 = scmp.ge.s32.totalorder %s890, 1
            %s895 = sphi %s867, %s867
            %s896 = sphi %s868, %s868
          $region524: #{tpu_custom_call.1} parent=520 // loop_header_branch
            %893 = sbr.rel (%p891) target = $region528
          $region525: #{tpu_custom_call.1} parent=520 // loop_body
            %v897 = vld [vmem:[%s895] sm:%s888]
            %898 = vst [vmem:[%s896] sm:%s888] %v897
          $region526: #{tpu_custom_call.1} parent=520 // loop_footer
            %s894 = sadd.s32 1, %s890
          $region527: #{tpu_custom_call.1} parent=520 // loop_footer_branch
            %889 = sbr.rel target = $region523
          $region528: #{tpu_custom_call.1} parent=520 // loop_exit
            _
        $region521: #{tpu_custom_call.1} parent=505 // pred_fallthru
          _
      $region506: #{tpu_custom_call.1} parent=51 // pred_fallthru
        _
      // Predicated region
      $region507: #{tpu_custom_call.1} parent=51 // pred_check
        _
      $region508: #{tpu_custom_call.1} parent=51 // pred_check_branch
        %872 = sbr.rel (0) target = $region510
      $region509: #{tpu_custom_call.1} parent=51 // pred_region
        %s874 = ssub.s32 2, 1
        loop: start=0, step=1, limit=1
        $region511: #{tpu_custom_call.1} parent=509 // loop_pre_header
          _
        $region512: #{tpu_custom_call.1} parent=509 // loop_header
          %s876 = sphi 0, %s880
          %p877 = scmp.ge.s32.totalorder %s876, 1
          %s881 = sphi %s867, %s867
          %s882 = sphi %s868, %s868
        $region513: #{tpu_custom_call.1} parent=509 // loop_header_branch
          %879 = sbr.rel (%p877) target = $region517
        $region514: #{tpu_custom_call.1} parent=509 // loop_body
          %v883 = vld [vmem:[%s881] sm:%s874]
          %884 = vst [vmem:[%s882] sm:%s874] %v883
        $region515: #{tpu_custom_call.1} parent=509 // loop_footer
          %s880 = sadd.s32 1, %s876
        $region516: #{tpu_custom_call.1} parent=509 // loop_footer_branch
          %875 = sbr.rel target = $region512
        $region517: #{tpu_custom_call.1} parent=509 // loop_exit
          _
      $region510: #{tpu_custom_call.1} parent=51 // pred_fallthru
        _
      // Predicated region
      $region529: #{tpu_custom_call.1} parent=51 // pred_check
        _
      $region530: #{tpu_custom_call.1} parent=51 // pred_check_branch
        %901 = sbr.rel (0) target = $region532
      $region531: #{tpu_custom_call.1} parent=51 // pred_region
        %902 = vsyncadd [#allocation3], 16
      $region532: #{tpu_custom_call.1} parent=51 // pred_fallthru
        _
      %s903 = sadd.s32 %s296, 16
      %s904 = sld [smem:[#allocation5 + %s903]]
      %s905 = scalar_lea.vmem %s1, %s904
      %s906 = scalar_lea.vmem [#allocation2], 11
      // Predicated region
      $region533: #{tpu_custom_call.1} parent=51 // pred_check
        _
      $region534: #{tpu_custom_call.1} parent=51 // pred_check_branch
        %908 = sbr.rel target = $region536
      $region535: #{tpu_custom_call.1} parent=51 // pred_region
        // Predicated region
        $region548: #{tpu_custom_call.1} parent=535 // pred_check
          _
        $region549: #{tpu_custom_call.1} parent=535 // pred_check_branch
          %924 = sbr.rel (0) target = $region551
        $region550: #{tpu_custom_call.1} parent=535 // pred_region
          %s926 = ssub.s32 2, 1
          loop: start=0, step=1, limit=1
          $region552: #{tpu_custom_call.1} parent=550 // loop_pre_header
            _
          $region553: #{tpu_custom_call.1} parent=550 // loop_header
            %s928 = sphi 0, %s932
            %p929 = scmp.ge.s32.totalorder %s928, 1
            %s933 = sphi %s905, %s905
            %s934 = sphi %s906, %s906
          $region554: #{tpu_custom_call.1} parent=550 // loop_header_branch
            %931 = sbr.rel (%p929) target = $region558
          $region555: #{tpu_custom_call.1} parent=550 // loop_body
            %v935 = vld [vmem:[%s933] sm:%s926]
            %936 = vst [vmem:[%s934] sm:%s926] %v935
          $region556: #{tpu_custom_call.1} parent=550 // loop_footer
            %s932 = sadd.s32 1, %s928
          $region557: #{tpu_custom_call.1} parent=550 // loop_footer_branch
            %927 = sbr.rel target = $region553
          $region558: #{tpu_custom_call.1} parent=550 // loop_exit
            _
        $region551: #{tpu_custom_call.1} parent=535 // pred_fallthru
          _
      $region536: #{tpu_custom_call.1} parent=51 // pred_fallthru
        _
      // Predicated region
      $region537: #{tpu_custom_call.1} parent=51 // pred_check
        _
      $region538: #{tpu_custom_call.1} parent=51 // pred_check_branch
        %910 = sbr.rel (0) target = $region540
      $region539: #{tpu_custom_call.1} parent=51 // pred_region
        %s912 = ssub.s32 2, 1
        loop: start=0, step=1, limit=1
        $region541: #{tpu_custom_call.1} parent=539 // loop_pre_header
          _
        $region542: #{tpu_custom_call.1} parent=539 // loop_header
          %s914 = sphi 0, %s918
          %p915 = scmp.ge.s32.totalorder %s914, 1
          %s919 = sphi %s905, %s905
          %s920 = sphi %s906, %s906
        $region543: #{tpu_custom_call.1} parent=539 // loop_header_branch
          %917 = sbr.rel (%p915) target = $region547
        $region544: #{tpu_custom_call.1} parent=539 // loop_body
          %v921 = vld [vmem:[%s919] sm:%s912]
          %922 = vst [vmem:[%s920] sm:%s912] %v921
        $region545: #{tpu_custom_call.1} parent=539 // loop_footer
          %s918 = sadd.s32 1, %s914
        $region546: #{tpu_custom_call.1} parent=539 // loop_footer_branch
          %913 = sbr.rel target = $region542
        $region547: #{tpu_custom_call.1} parent=539 // loop_exit
          _
      $region540: #{tpu_custom_call.1} parent=51 // pred_fallthru
        _
      // Predicated region
      $region559: #{tpu_custom_call.1} parent=51 // pred_check
        _
      $region560: #{tpu_custom_call.1} parent=51 // pred_check_branch
        %939 = sbr.rel (0) target = $region562
      $region561: #{tpu_custom_call.1} parent=51 // pred_region
        %940 = vsyncadd [#allocation3], 16
      $region562: #{tpu_custom_call.1} parent=51 // pred_fallthru
        _
      %s941 = sadd.s32 %s296, 17
      %s942 = sld [smem:[#allocation5 + %s941]]
      %s943 = scalar_lea.vmem %s1, %s942
      %s944 = scalar_lea.vmem [#allocation2], 19
      // Predicated region
      $region563: #{tpu_custom_call.1} parent=51 // pred_check
        _
      $region564: #{tpu_custom_call.1} parent=51 // pred_check_branch
        %946 = sbr.rel target = $region566
      $region565: #{tpu_custom_call.1} parent=51 // pred_region
        // Predicated region
        $region578: #{tpu_custom_call.1} parent=565 // pred_check
          _
        $region579: #{tpu_custom_call.1} parent=565 // pred_check_branch
          %962 = sbr.rel (0) target = $region581
        $region580: #{tpu_custom_call.1} parent=565 // pred_region
          %s964 = ssub.s32 2, 1
          loop: start=0, step=1, limit=1
          $region582: #{tpu_custom_call.1} parent=580 // loop_pre_header
            _
          $region583: #{tpu_custom_call.1} parent=580 // loop_header
            %s966 = sphi 0, %s970
            %p967 = scmp.ge.s32.totalorder %s966, 1
            %s971 = sphi %s943, %s943
            %s972 = sphi %s944, %s944
          $region584: #{tpu_custom_call.1} parent=580 // loop_header_branch
            %969 = sbr.rel (%p967) target = $region588
          $region585: #{tpu_custom_call.1} parent=580 // loop_body
            %v973 = vld [vmem:[%s971] sm:%s964]
            %974 = vst [vmem:[%s972] sm:%s964] %v973
          $region586: #{tpu_custom_call.1} parent=580 // loop_footer
            %s970 = sadd.s32 1, %s966
          $region587: #{tpu_custom_call.1} parent=580 // loop_footer_branch
            %965 = sbr.rel target = $region583
          $region588: #{tpu_custom_call.1} parent=580 // loop_exit
            _
        $region581: #{tpu_custom_call.1} parent=565 // pred_fallthru
          _
      $region566: #{tpu_custom_call.1} parent=51 // pred_fallthru
        _
      // Predicated region
      $region567: #{tpu_custom_call.1} parent=51 // pred_check
        _
      $region568: #{tpu_custom_call.1} parent=51 // pred_check_branch
        %948 = sbr.rel (0) target = $region570
      $region569: #{tpu_custom_call.1} parent=51 // pred_region
        %s950 = ssub.s32 2, 1
        loop: start=0, step=1, limit=1
        $region571: #{tpu_custom_call.1} parent=569 // loop_pre_header
          _
        $region572: #{tpu_custom_call.1} parent=569 // loop_header
          %s952 = sphi 0, %s956
          %p953 = scmp.ge.s32.totalorder %s952, 1
          %s957 = sphi %s943, %s943
          %s958 = sphi %s944, %s944
        $region573: #{tpu_custom_call.1} parent=569 // loop_header_branch
          %955 = sbr.rel (%p953) target = $region577
        $region574: #{tpu_custom_call.1} parent=569 // loop_body
          %v959 = vld [vmem:[%s957] sm:%s950]
          %960 = vst [vmem:[%s958] sm:%s950] %v959
        $region575: #{tpu_custom_call.1} parent=569 // loop_footer
          %s956 = sadd.s32 1, %s952
        $region576: #{tpu_custom_call.1} parent=569 // loop_footer_branch
          %951 = sbr.rel target = $region572
        $region577: #{tpu_custom_call.1} parent=569 // loop_exit
          _
      $region570: #{tpu_custom_call.1} parent=51 // pred_fallthru
        _
      // Predicated region
      $region589: #{tpu_custom_call.1} parent=51 // pred_check
        _
      $region590: #{tpu_custom_call.1} parent=51 // pred_check_branch
        %977 = sbr.rel (0) target = $region592
      $region591: #{tpu_custom_call.1} parent=51 // pred_region
        %978 = vsyncadd [#allocation3], 16
      $region592: #{tpu_custom_call.1} parent=51 // pred_fallthru
        _
      %s979 = sadd.s32 %s296, 18
      %s980 = sld [smem:[#allocation5 + %s979]]
      %s981 = scalar_lea.vmem %s1, %s980
      %s982 = scalar_lea.vmem [#allocation2], 27
      // Predicated region
      $region593: #{tpu_custom_call.1} parent=51 // pred_check
        _
      $region594: #{tpu_custom_call.1} parent=51 // pred_check_branch
        %984 = sbr.rel target = $region596
      $region595: #{tpu_custom_call.1} parent=51 // pred_region
        // Predicated region
        $region608: #{tpu_custom_call.1} parent=595 // pred_check
          _
        $region609: #{tpu_custom_call.1} parent=595 // pred_check_branch
          %1000 = sbr.rel (0) target = $region611
        $region610: #{tpu_custom_call.1} parent=595 // pred_region
          %s1002 = ssub.s32 2, 1
          loop: start=0, step=1, limit=1
          $region612: #{tpu_custom_call.1} parent=610 // loop_pre_header
            _
          $region613: #{tpu_custom_call.1} parent=610 // loop_header
            %s1004 = sphi 0, %s1008
            %p1005 = scmp.ge.s32.totalorder %s1004, 1
            %s1009 = sphi %s981, %s981
            %s1010 = sphi %s982, %s982
          $region614: #{tpu_custom_call.1} parent=610 // loop_header_branch
            %1007 = sbr.rel (%p1005) target = $region618
          $region615: #{tpu_custom_call.1} parent=610 // loop_body
            %v1011 = vld [vmem:[%s1009] sm:%s1002]
            %1012 = vst [vmem:[%s1010] sm:%s1002] %v1011
          $region616: #{tpu_custom_call.1} parent=610 // loop_footer
            %s1008 = sadd.s32 1, %s1004
          $region617: #{tpu_custom_call.1} parent=610 // loop_footer_branch
            %1003 = sbr.rel target = $region613
          $region618: #{tpu_custom_call.1} parent=610 // loop_exit
            _
        $region611: #{tpu_custom_call.1} parent=595 // pred_fallthru
          _
      $region596: #{tpu_custom_call.1} parent=51 // pred_fallthru
        _
      // Predicated region
      $region597: #{tpu_custom_call.1} parent=51 // pred_check
        _
      $region598: #{tpu_custom_call.1} parent=51 // pred_check_branch
        %986 = sbr.rel (0) target = $region600
      $region599: #{tpu_custom_call.1} parent=51 // pred_region
        %s988 = ssub.s32 2, 1
        loop: start=0, step=1, limit=1
        $region601: #{tpu_custom_call.1} parent=599 // loop_pre_header
          _
        $region602: #{tpu_custom_call.1} parent=599 // loop_header
          %s990 = sphi 0, %s994
          %p991 = scmp.ge.s32.totalorder %s990, 1
          %s995 = sphi %s981, %s981
          %s996 = sphi %s982, %s982
        $region603: #{tpu_custom_call.1} parent=599 // loop_header_branch
          %993 = sbr.rel (%p991) target = $region607
        $region604: #{tpu_custom_call.1} parent=599 // loop_body
          %v997 = vld [vmem:[%s995] sm:%s988]
          %998 = vst [vmem:[%s996] sm:%s988] %v997
        $region605: #{tpu_custom_call.1} parent=599 // loop_footer
          %s994 = sadd.s32 1, %s990
        $region606: #{tpu_custom_call.1} parent=599 // loop_footer_branch
          %989 = sbr.rel target = $region602
        $region607: #{tpu_custom_call.1} parent=599 // loop_exit
          _
      $region600: #{tpu_custom_call.1} parent=51 // pred_fallthru
        _
      // Predicated region
      $region619: #{tpu_custom_call.1} parent=51 // pred_check
        _
      $region620: #{tpu_custom_call.1} parent=51 // pred_check_branch
        %1015 = sbr.rel (0) target = $region622
      $region621: #{tpu_custom_call.1} parent=51 // pred_region
        %1016 = vsyncadd [#allocation3], 16
      $region622: #{tpu_custom_call.1} parent=51 // pred_fallthru
        _
      %s1017 = sadd.s32 %s296, 19
      %s1018 = sld [smem:[#allocation5 + %s1017]]
      %s1019 = scalar_lea.vmem %s1, %s1018
      %s1020 = scalar_lea.vmem [#allocation2], 35
      // Predicated region
      $region623: #{tpu_custom_call.1} parent=51 // pred_check
        _
      $region624: #{tpu_custom_call.1} parent=51 // pred_check_branch
        %1022 = sbr.rel target = $region626
      $region625: #{tpu_custom_call.1} parent=51 // pred_region
        // Predicated region
        $region638: #{tpu_custom_call.1} parent=625 // pred_check
          _
        $region639: #{tpu_custom_call.1} parent=625 // pred_check_branch
          %1038 = sbr.rel (0) target = $region641
        $region640: #{tpu_custom_call.1} parent=625 // pred_region
          %s1040 = ssub.s32 2, 1
          loop: start=0, step=1, limit=1
          $region642: #{tpu_custom_call.1} parent=640 // loop_pre_header
            _
          $region643: #{tpu_custom_call.1} parent=640 // loop_header
            %s1042 = sphi 0, %s1046
            %p1043 = scmp.ge.s32.totalorder %s1042, 1
            %s1047 = sphi %s1019, %s1019
            %s1048 = sphi %s1020, %s1020
          $region644: #{tpu_custom_call.1} parent=640 // loop_header_branch
            %1045 = sbr.rel (%p1043) target = $region648
          $region645: #{tpu_custom_call.1} parent=640 // loop_body
            %v1049 = vld [vmem:[%s1047] sm:%s1040]
            %1050 = vst [vmem:[%s1048] sm:%s1040] %v1049
          $region646: #{tpu_custom_call.1} parent=640 // loop_footer
            %s1046 = sadd.s32 1, %s1042
          $region647: #{tpu_custom_call.1} parent=640 // loop_footer_branch
            %1041 = sbr.rel target = $region643
          $region648: #{tpu_custom_call.1} parent=640 // loop_exit
            _
        $region641: #{tpu_custom_call.1} parent=625 // pred_fallthru
          _
      $region626: #{tpu_custom_call.1} parent=51 // pred_fallthru
        _
      // Predicated region
      $region627: #{tpu_custom_call.1} parent=51 // pred_check
        _
      $region628: #{tpu_custom_call.1} parent=51 // pred_check_branch
        %1024 = sbr.rel (0) target = $region630
      $region629: #{tpu_custom_call.1} parent=51 // pred_region
        %s1026 = ssub.s32 2, 1
        loop: start=0, step=1, limit=1
        $region631: #{tpu_custom_call.1} parent=629 // loop_pre_header
          _
        $region632: #{tpu_custom_call.1} parent=629 // loop_header
          %s1028 = sphi 0, %s1032
          %p1029 = scmp.ge.s32.totalorder %s1028, 1
          %s1033 = sphi %s1019, %s1019
          %s1034 = sphi %s1020, %s1020
        $region633: #{tpu_custom_call.1} parent=629 // loop_header_branch
          %1031 = sbr.rel (%p1029) target = $region637
        $region634: #{tpu_custom_call.1} parent=629 // loop_body
          %v1035 = vld [vmem:[%s1033] sm:%s1026]
          %1036 = vst [vmem:[%s1034] sm:%s1026] %v1035
        $region635: #{tpu_custom_call.1} parent=629 // loop_footer
          %s1032 = sadd.s32 1, %s1028
        $region636: #{tpu_custom_call.1} parent=629 // loop_footer_branch
          %1027 = sbr.rel target = $region632
        $region637: #{tpu_custom_call.1} parent=629 // loop_exit
          _
      $region630: #{tpu_custom_call.1} parent=51 // pred_fallthru
        _
      // Predicated region
      $region649: #{tpu_custom_call.1} parent=51 // pred_check
        _
      $region650: #{tpu_custom_call.1} parent=51 // pred_check_branch
        %1053 = sbr.rel (0) target = $region652
      $region651: #{tpu_custom_call.1} parent=51 // pred_region
        %1054 = vsyncadd [#allocation3], 16
      $region652: #{tpu_custom_call.1} parent=51 // pred_fallthru
        _
      %s1055 = sadd.s32 %s296, 20
      %s1056 = sld [smem:[#allocation5 + %s1055]]
      %s1057 = scalar_lea.vmem %s1, %s1056
      %s1058 = scalar_lea.vmem [#allocation2], 4
      // Predicated region
      $region653: #{tpu_custom_call.1} parent=51 // pred_check
        _
      $region654: #{tpu_custom_call.1} parent=51 // pred_check_branch
        %1060 = sbr.rel target = $region656
      $region655: #{tpu_custom_call.1} parent=51 // pred_region
        // Predicated region
        $region668: #{tpu_custom_call.1} parent=655 // pred_check
          _
        $region669: #{tpu_custom_call.1} parent=655 // pred_check_branch
          %1076 = sbr.rel (0) target = $region671
        $region670: #{tpu_custom_call.1} parent=655 // pred_region
          %s1078 = ssub.s32 2, 1
          loop: start=0, step=1, limit=1
          $region672: #{tpu_custom_call.1} parent=670 // loop_pre_header
            _
          $region673: #{tpu_custom_call.1} parent=670 // loop_header
            %s1080 = sphi 0, %s1084
            %p1081 = scmp.ge.s32.totalorder %s1080, 1
            %s1085 = sphi %s1057, %s1057
            %s1086 = sphi %s1058, %s1058
          $region674: #{tpu_custom_call.1} parent=670 // loop_header_branch
            %1083 = sbr.rel (%p1081) target = $region678
          $region675: #{tpu_custom_call.1} parent=670 // loop_body
            %v1087 = vld [vmem:[%s1085] sm:%s1078]
            %1088 = vst [vmem:[%s1086] sm:%s1078] %v1087
          $region676: #{tpu_custom_call.1} parent=670 // loop_footer
            %s1084 = sadd.s32 1, %s1080
          $region677: #{tpu_custom_call.1} parent=670 // loop_footer_branch
            %1079 = sbr.rel target = $region673
          $region678: #{tpu_custom_call.1} parent=670 // loop_exit
            _
        $region671: #{tpu_custom_call.1} parent=655 // pred_fallthru
          _
      $region656: #{tpu_custom_call.1} parent=51 // pred_fallthru
        _
      // Predicated region
      $region657: #{tpu_custom_call.1} parent=51 // pred_check
        _
      $region658: #{tpu_custom_call.1} parent=51 // pred_check_branch
        %1062 = sbr.rel (0) target = $region660
      $region659: #{tpu_custom_call.1} parent=51 // pred_region
        %s1064 = ssub.s32 2, 1
        loop: start=0, step=1, limit=1
        $region661: #{tpu_custom_call.1} parent=659 // loop_pre_header
          _
        $region662: #{tpu_custom_call.1} parent=659 // loop_header
          %s1066 = sphi 0, %s1070
          %p1067 = scmp.ge.s32.totalorder %s1066, 1
          %s1071 = sphi %s1057, %s1057
          %s1072 = sphi %s1058, %s1058
        $region663: #{tpu_custom_call.1} parent=659 // loop_header_branch
          %1069 = sbr.rel (%p1067) target = $region667
        $region664: #{tpu_custom_call.1} parent=659 // loop_body
          %v1073 = vld [vmem:[%s1071] sm:%s1064]
          %1074 = vst [vmem:[%s1072] sm:%s1064] %v1073
        $region665: #{tpu_custom_call.1} parent=659 // loop_footer
          %s1070 = sadd.s32 1, %s1066
        $region666: #{tpu_custom_call.1} parent=659 // loop_footer_branch
          %1065 = sbr.rel target = $region662
        $region667: #{tpu_custom_call.1} parent=659 // loop_exit
          _
      $region660: #{tpu_custom_call.1} parent=51 // pred_fallthru
        _
      // Predicated region
      $region679: #{tpu_custom_call.1} parent=51 // pred_check
        _
      $region680: #{tpu_custom_call.1} parent=51 // pred_check_branch
        %1091 = sbr.rel (0) target = $region682
      $region681: #{tpu_custom_call.1} parent=51 // pred_region
        %1092 = vsyncadd [#allocation3], 16
      $region682: #{tpu_custom_call.1} parent=51 // pred_fallthru
        _
      %s1093 = sadd.s32 %s296, 21
      %s1094 = sld [smem:[#allocation5 + %s1093]]
      %s1095 = scalar_lea.vmem %s1, %s1094
      %s1096 = scalar_lea.vmem [#allocation2], 12
      // Predicated region
      $region683: #{tpu_custom_call.1} parent=51 // pred_check
        _
      $region684: #{tpu_custom_call.1} parent=51 // pred_check_branch
        %1098 = sbr.rel target = $region686
      $region685: #{tpu_custom_call.1} parent=51 // pred_region
        // Predicated region
        $region698: #{tpu_custom_call.1} parent=685 // pred_check
          _
        $region699: #{tpu_custom_call.1} parent=685 // pred_check_branch
          %1114 = sbr.rel (0) target = $region701
        $region700: #{tpu_custom_call.1} parent=685 // pred_region
          %s1116 = ssub.s32 2, 1
          loop: start=0, step=1, limit=1
          $region702: #{tpu_custom_call.1} parent=700 // loop_pre_header
            _
          $region703: #{tpu_custom_call.1} parent=700 // loop_header
            %s1118 = sphi 0, %s1122
            %p1119 = scmp.ge.s32.totalorder %s1118, 1
            %s1123 = sphi %s1095, %s1095
            %s1124 = sphi %s1096, %s1096
          $region704: #{tpu_custom_call.1} parent=700 // loop_header_branch
            %1121 = sbr.rel (%p1119) target = $region708
          $region705: #{tpu_custom_call.1} parent=700 // loop_body
            %v1125 = vld [vmem:[%s1123] sm:%s1116]
            %1126 = vst [vmem:[%s1124] sm:%s1116] %v1125
          $region706: #{tpu_custom_call.1} parent=700 // loop_footer
            %s1122 = sadd.s32 1, %s1118
          $region707: #{tpu_custom_call.1} parent=700 // loop_footer_branch
            %1117 = sbr.rel target = $region703
          $region708: #{tpu_custom_call.1} parent=700 // loop_exit
            _
        $region701: #{tpu_custom_call.1} parent=685 // pred_fallthru
          _
      $region686: #{tpu_custom_call.1} parent=51 // pred_fallthru
        _
      // Predicated region
      $region687: #{tpu_custom_call.1} parent=51 // pred_check
        _
      $region688: #{tpu_custom_call.1} parent=51 // pred_check_branch
        %1100 = sbr.rel (0) target = $region690
      $region689: #{tpu_custom_call.1} parent=51 // pred_region
        %s1102 = ssub.s32 2, 1
        loop: start=0, step=1, limit=1
        $region691: #{tpu_custom_call.1} parent=689 // loop_pre_header
          _
        $region692: #{tpu_custom_call.1} parent=689 // loop_header
          %s1104 = sphi 0, %s1108
          %p1105 = scmp.ge.s32.totalorder %s1104, 1
          %s1109 = sphi %s1095, %s1095
          %s1110 = sphi %s1096, %s1096
        $region693: #{tpu_custom_call.1} parent=689 // loop_header_branch
          %1107 = sbr.rel (%p1105) target = $region697
        $region694: #{tpu_custom_call.1} parent=689 // loop_body
          %v1111 = vld [vmem:[%s1109] sm:%s1102]
          %1112 = vst [vmem:[%s1110] sm:%s1102] %v1111
        $region695: #{tpu_custom_call.1} parent=689 // loop_footer
          %s1108 = sadd.s32 1, %s1104
        $region696: #{tpu_custom_call.1} parent=689 // loop_footer_branch
          %1103 = sbr.rel target = $region692
        $region697: #{tpu_custom_call.1} parent=689 // loop_exit
          _
      $region690: #{tpu_custom_call.1} parent=51 // pred_fallthru
        _
      // Predicated region
      $region709: #{tpu_custom_call.1} parent=51 // pred_check
        _
      $region710: #{tpu_custom_call.1} parent=51 // pred_check_branch
        %1129 = sbr.rel (0) target = $region712
      $region711: #{tpu_custom_call.1} parent=51 // pred_region
        %1130 = vsyncadd [#allocation3], 16
      $region712: #{tpu_custom_call.1} parent=51 // pred_fallthru
        _
      %s1131 = sadd.s32 %s296, 22
      %s1132 = sld [smem:[#allocation5 + %s1131]]
      %s1133 = scalar_lea.vmem %s1, %s1132
      %s1134 = scalar_lea.vmem [#allocation2], 20
      // Predicated region
      $region713: #{tpu_custom_call.1} parent=51 // pred_check
        _
      $region714: #{tpu_custom_call.1} parent=51 // pred_check_branch
        %1136 = sbr.rel target = $region716
      $region715: #{tpu_custom_call.1} parent=51 // pred_region
        // Predicated region
        $region728: #{tpu_custom_call.1} parent=715 // pred_check
          _
        $region729: #{tpu_custom_call.1} parent=715 // pred_check_branch
          %1152 = sbr.rel (0) target = $region731
        $region730: #{tpu_custom_call.1} parent=715 // pred_region
          %s1154 = ssub.s32 2, 1
          loop: start=0, step=1, limit=1
          $region732: #{tpu_custom_call.1} parent=730 // loop_pre_header
            _
          $region733: #{tpu_custom_call.1} parent=730 // loop_header
            %s1156 = sphi 0, %s1160
            %p1157 = scmp.ge.s32.totalorder %s1156, 1
            %s1161 = sphi %s1133, %s1133
            %s1162 = sphi %s1134, %s1134
          $region734: #{tpu_custom_call.1} parent=730 // loop_header_branch
            %1159 = sbr.rel (%p1157) target = $region738
          $region735: #{tpu_custom_call.1} parent=730 // loop_body
            %v1163 = vld [vmem:[%s1161] sm:%s1154]
            %1164 = vst [vmem:[%s1162] sm:%s1154] %v1163
          $region736: #{tpu_custom_call.1} parent=730 // loop_footer
            %s1160 = sadd.s32 1, %s1156
          $region737: #{tpu_custom_call.1} parent=730 // loop_footer_branch
            %1155 = sbr.rel target = $region733
          $region738: #{tpu_custom_call.1} parent=730 // loop_exit
            _
        $region731: #{tpu_custom_call.1} parent=715 // pred_fallthru
          _
      $region716: #{tpu_custom_call.1} parent=51 // pred_fallthru
        _
      // Predicated region
      $region717: #{tpu_custom_call.1} parent=51 // pred_check
        _
      $region718: #{tpu_custom_call.1} parent=51 // pred_check_branch
        %1138 = sbr.rel (0) target = $region720
      $region719: #{tpu_custom_call.1} parent=51 // pred_region
        %s1140 = ssub.s32 2, 1
        loop: start=0, step=1, limit=1
        $region721: #{tpu_custom_call.1} parent=719 // loop_pre_header
          _
        $region722: #{tpu_custom_call.1} parent=719 // loop_header
          %s1142 = sphi 0, %s1146
          %p1143 = scmp.ge.s32.totalorder %s1142, 1
          %s1147 = sphi %s1133, %s1133
          %s1148 = sphi %s1134, %s1134
        $region723: #{tpu_custom_call.1} parent=719 // loop_header_branch
          %1145 = sbr.rel (%p1143) target = $region727
        $region724: #{tpu_custom_call.1} parent=719 // loop_body
          %v1149 = vld [vmem:[%s1147] sm:%s1140]
          %1150 = vst [vmem:[%s1148] sm:%s1140] %v1149
        $region725: #{tpu_custom_call.1} parent=719 // loop_footer
          %s1146 = sadd.s32 1, %s1142
        $region726: #{tpu_custom_call.1} parent=719 // loop_footer_branch
          %1141 = sbr.rel target = $region722
        $region727: #{tpu_custom_call.1} parent=719 // loop_exit
          _
      $region720: #{tpu_custom_call.1} parent=51 // pred_fallthru
        _
      // Predicated region
      $region739: #{tpu_custom_call.1} parent=51 // pred_check
        _
      $region740: #{tpu_custom_call.1} parent=51 // pred_check_branch
        %1167 = sbr.rel (0) target = $region742
      $region741: #{tpu_custom_call.1} parent=51 // pred_region
        %1168 = vsyncadd [#allocation3], 16
      $region742: #{tpu_custom_call.1} parent=51 // pred_fallthru
        _
      %s1169 = sadd.s32 %s296, 23
      %s1170 = sld [smem:[#allocation5 + %s1169]]
      %s1171 = scalar_lea.vmem %s1, %s1170
      %s1172 = scalar_lea.vmem [#allocation2], 28
      // Predicated region
      $region743: #{tpu_custom_call.1} parent=51 // pred_check
        _
      $region744: #{tpu_custom_call.1} parent=51 // pred_check_branch
        %1174 = sbr.rel target = $region746
      $region745: #{tpu_custom_call.1} parent=51 // pred_region
        // Predicated region
        $region758: #{tpu_custom_call.1} parent=745 // pred_check
          _
        $region759: #{tpu_custom_call.1} parent=745 // pred_check_branch
          %1190 = sbr.rel (0) target = $region761
        $region760: #{tpu_custom_call.1} parent=745 // pred_region
          %s1192 = ssub.s32 2, 1
          loop: start=0, step=1, limit=1
          $region762: #{tpu_custom_call.1} parent=760 // loop_pre_header
            _
          $region763: #{tpu_custom_call.1} parent=760 // loop_header
            %s1194 = sphi 0, %s1198
            %p1195 = scmp.ge.s32.totalorder %s1194, 1
            %s1199 = sphi %s1171, %s1171
            %s1200 = sphi %s1172, %s1172
          $region764: #{tpu_custom_call.1} parent=760 // loop_header_branch
            %1197 = sbr.rel (%p1195) target = $region768
          $region765: #{tpu_custom_call.1} parent=760 // loop_body
            %v1201 = vld [vmem:[%s1199] sm:%s1192]
            %1202 = vst [vmem:[%s1200] sm:%s1192] %v1201
          $region766: #{tpu_custom_call.1} parent=760 // loop_footer
            %s1198 = sadd.s32 1, %s1194
          $region767: #{tpu_custom_call.1} parent=760 // loop_footer_branch
            %1193 = sbr.rel target = $region763
          $region768: #{tpu_custom_call.1} parent=760 // loop_exit
            _
        $region761: #{tpu_custom_call.1} parent=745 // pred_fallthru
          _
      $region746: #{tpu_custom_call.1} parent=51 // pred_fallthru
        _
      // Predicated region
      $region747: #{tpu_custom_call.1} parent=51 // pred_check
        _
      $region748: #{tpu_custom_call.1} parent=51 // pred_check_branch
        %1176 = sbr.rel (0) target = $region750
      $region749: #{tpu_custom_call.1} parent=51 // pred_region
        %s1178 = ssub.s32 2, 1
        loop: start=0, step=1, limit=1
        $region751: #{tpu_custom_call.1} parent=749 // loop_pre_header
          _
        $region752: #{tpu_custom_call.1} parent=749 // loop_header
          %s1180 = sphi 0, %s1184
          %p1181 = scmp.ge.s32.totalorder %s1180, 1
          %s1185 = sphi %s1171, %s1171
          %s1186 = sphi %s1172, %s1172
        $region753: #{tpu_custom_call.1} parent=749 // loop_header_branch
          %1183 = sbr.rel (%p1181) target = $region757
        $region754: #{tpu_custom_call.1} parent=749 // loop_body
          %v1187 = vld [vmem:[%s1185] sm:%s1178]
          %1188 = vst [vmem:[%s1186] sm:%s1178] %v1187
        $region755: #{tpu_custom_call.1} parent=749 // loop_footer
          %s1184 = sadd.s32 1, %s1180
        $region756: #{tpu_custom_call.1} parent=749 // loop_footer_branch
          %1179 = sbr.rel target = $region752
        $region757: #{tpu_custom_call.1} parent=749 // loop_exit
          _
      $region750: #{tpu_custom_call.1} parent=51 // pred_fallthru
        _
      // Predicated region
      $region769: #{tpu_custom_call.1} parent=51 // pred_check
        _
      $region770: #{tpu_custom_call.1} parent=51 // pred_check_branch
        %1205 = sbr.rel (0) target = $region772
      $region771: #{tpu_custom_call.1} parent=51 // pred_region
        %1206 = vsyncadd [#allocation3], 16
      $region772: #{tpu_custom_call.1} parent=51 // pred_fallthru
        _
      %s1207 = sadd.s32 %s296, 24
      %s1208 = sld [smem:[#allocation5 + %s1207]]
      %s1209 = scalar_lea.vmem %s1, %s1208
      %s1210 = scalar_lea.vmem [#allocation2], 36
      // Predicated region
      $region773: #{tpu_custom_call.1} parent=51 // pred_check
        _
      $region774: #{tpu_custom_call.1} parent=51 // pred_check_branch
        %1212 = sbr.rel target = $region776
      $region775: #{tpu_custom_call.1} parent=51 // pred_region
        // Predicated region
        $region788: #{tpu_custom_call.1} parent=775 // pred_check
          _
        $region789: #{tpu_custom_call.1} parent=775 // pred_check_branch
          %1228 = sbr.rel (0) target = $region791
        $region790: #{tpu_custom_call.1} parent=775 // pred_region
          %s1230 = ssub.s32 2, 1
          loop: start=0, step=1, limit=1
          $region792: #{tpu_custom_call.1} parent=790 // loop_pre_header
            _
          $region793: #{tpu_custom_call.1} parent=790 // loop_header
            %s1232 = sphi 0, %s1236
            %p1233 = scmp.ge.s32.totalorder %s1232, 1
            %s1237 = sphi %s1209, %s1209
            %s1238 = sphi %s1210, %s1210
          $region794: #{tpu_custom_call.1} parent=790 // loop_header_branch
            %1235 = sbr.rel (%p1233) target = $region798
          $region795: #{tpu_custom_call.1} parent=790 // loop_body
            %v1239 = vld [vmem:[%s1237] sm:%s1230]
            %1240 = vst [vmem:[%s1238] sm:%s1230] %v1239
          $region796: #{tpu_custom_call.1} parent=790 // loop_footer
            %s1236 = sadd.s32 1, %s1232
          $region797: #{tpu_custom_call.1} parent=790 // loop_footer_branch
            %1231 = sbr.rel target = $region793
          $region798: #{tpu_custom_call.1} parent=790 // loop_exit
            _
        $region791: #{tpu_custom_call.1} parent=775 // pred_fallthru
          _
      $region776: #{tpu_custom_call.1} parent=51 // pred_fallthru
        _
      // Predicated region
      $region777: #{tpu_custom_call.1} parent=51 // pred_check
        _
      $region778: #{tpu_custom_call.1} parent=51 // pred_check_branch
        %1214 = sbr.rel (0) target = $region780
      $region779: #{tpu_custom_call.1} parent=51 // pred_region
        %s1216 = ssub.s32 2, 1
        loop: start=0, step=1, limit=1
        $region781: #{tpu_custom_call.1} parent=779 // loop_pre_header
          _
        $region782: #{tpu_custom_call.1} parent=779 // loop_header
          %s1218 = sphi 0, %s1222
          %p1219 = scmp.ge.s32.totalorder %s1218, 1
          %s1223 = sphi %s1209, %s1209
          %s1224 = sphi %s1210, %s1210
        $region783: #{tpu_custom_call.1} parent=779 // loop_header_branch
          %1221 = sbr.rel (%p1219) target = $region787
        $region784: #{tpu_custom_call.1} parent=779 // loop_body
          %v1225 = vld [vmem:[%s1223] sm:%s1216]
          %1226 = vst [vmem:[%s1224] sm:%s1216] %v1225
        $region785: #{tpu_custom_call.1} parent=779 // loop_footer
          %s1222 = sadd.s32 1, %s1218
        $region786: #{tpu_custom_call.1} parent=779 // loop_footer_branch
          %1217 = sbr.rel target = $region782
        $region787: #{tpu_custom_call.1} parent=779 // loop_exit
          _
      $region780: #{tpu_custom_call.1} parent=51 // pred_fallthru
        _
      // Predicated region
      $region799: #{tpu_custom_call.1} parent=51 // pred_check
        _
      $region800: #{tpu_custom_call.1} parent=51 // pred_check_branch
        %1243 = sbr.rel (0) target = $region802
      $region801: #{tpu_custom_call.1} parent=51 // pred_region
        %1244 = vsyncadd [#allocation3], 16
      $region802: #{tpu_custom_call.1} parent=51 // pred_fallthru
        _
      %s1245 = sadd.s32 %s296, 25
      %s1246 = sld [smem:[#allocation5 + %s1245]]
      %s1247 = scalar_lea.vmem %s1, %s1246
      %s1248 = scalar_lea.vmem [#allocation2], 5
      // Predicated region
      $region803: #{tpu_custom_call.1} parent=51 // pred_check
        _
      $region804: #{tpu_custom_call.1} parent=51 // pred_check_branch
        %1250 = sbr.rel target = $region806
      $region805: #{tpu_custom_call.1} parent=51 // pred_region
        // Predicated region
        $region818: #{tpu_custom_call.1} parent=805 // pred_check
          _
        $region819: #{tpu_custom_call.1} parent=805 // pred_check_branch
          %1266 = sbr.rel (0) target = $region821
        $region820: #{tpu_custom_call.1} parent=805 // pred_region
          %s1268 = ssub.s32 2, 1
          loop: start=0, step=1, limit=1
          $region822: #{tpu_custom_call.1} parent=820 // loop_pre_header
            _
          $region823: #{tpu_custom_call.1} parent=820 // loop_header
            %s1270 = sphi 0, %s1274
            %p1271 = scmp.ge.s32.totalorder %s1270, 1
            %s1275 = sphi %s1247, %s1247
            %s1276 = sphi %s1248, %s1248
          $region824: #{tpu_custom_call.1} parent=820 // loop_header_branch
            %1273 = sbr.rel (%p1271) target = $region828
          $region825: #{tpu_custom_call.1} parent=820 // loop_body
            %v1277 = vld [vmem:[%s1275] sm:%s1268]
            %1278 = vst [vmem:[%s1276] sm:%s1268] %v1277
          $region826: #{tpu_custom_call.1} parent=820 // loop_footer
            %s1274 = sadd.s32 1, %s1270
          $region827: #{tpu_custom_call.1} parent=820 // loop_footer_branch
            %1269 = sbr.rel target = $region823
          $region828: #{tpu_custom_call.1} parent=820 // loop_exit
            _
        $region821: #{tpu_custom_call.1} parent=805 // pred_fallthru
          _
      $region806: #{tpu_custom_call.1} parent=51 // pred_fallthru
        _
      // Predicated region
      $region807: #{tpu_custom_call.1} parent=51 // pred_check
        _
      $region808: #{tpu_custom_call.1} parent=51 // pred_check_branch
        %1252 = sbr.rel (0) target = $region810
      $region809: #{tpu_custom_call.1} parent=51 // pred_region
        %s1254 = ssub.s32 2, 1
        loop: start=0, step=1, limit=1
        $region811: #{tpu_custom_call.1} parent=809 // loop_pre_header
          _
        $region812: #{tpu_custom_call.1} parent=809 // loop_header
          %s1256 = sphi 0, %s1260
          %p1257 = scmp.ge.s32.totalorder %s1256, 1
          %s1261 = sphi %s1247, %s1247
          %s1262 = sphi %s1248, %s1248
        $region813: #{tpu_custom_call.1} parent=809 // loop_header_branch
          %1259 = sbr.rel (%p1257) target = $region817
        $region814: #{tpu_custom_call.1} parent=809 // loop_body
          %v1263 = vld [vmem:[%s1261] sm:%s1254]
          %1264 = vst [vmem:[%s1262] sm:%s1254] %v1263
        $region815: #{tpu_custom_call.1} parent=809 // loop_footer
          %s1260 = sadd.s32 1, %s1256
        $region816: #{tpu_custom_call.1} parent=809 // loop_footer_branch
          %1255 = sbr.rel target = $region812
        $region817: #{tpu_custom_call.1} parent=809 // loop_exit
          _
      $region810: #{tpu_custom_call.1} parent=51 // pred_fallthru
        _
      // Predicated region
      $region829: #{tpu_custom_call.1} parent=51 // pred_check
        _
      $region830: #{tpu_custom_call.1} parent=51 // pred_check_branch
        %1281 = sbr.rel (0) target = $region832
      $region831: #{tpu_custom_call.1} parent=51 // pred_region
        %1282 = vsyncadd [#allocation3], 16
      $region832: #{tpu_custom_call.1} parent=51 // pred_fallthru
        _
      %s1283 = sadd.s32 %s296, 26
      %s1284 = sld [smem:[#allocation5 + %s1283]]
      %s1285 = scalar_lea.vmem %s1, %s1284
      %s1286 = scalar_lea.vmem [#allocation2], 13
      // Predicated region
      $region833: #{tpu_custom_call.1} parent=51 // pred_check
        _
      $region834: #{tpu_custom_call.1} parent=51 // pred_check_branch
        %1288 = sbr.rel target = $region836
      $region835: #{tpu_custom_call.1} parent=51 // pred_region
        // Predicated region
        $region848: #{tpu_custom_call.1} parent=835 // pred_check
          _
        $region849: #{tpu_custom_call.1} parent=835 // pred_check_branch
          %1304 = sbr.rel (0) target = $region851
        $region850: #{tpu_custom_call.1} parent=835 // pred_region
          %s1306 = ssub.s32 2, 1
          loop: start=0, step=1, limit=1
          $region852: #{tpu_custom_call.1} parent=850 // loop_pre_header
            _
          $region853: #{tpu_custom_call.1} parent=850 // loop_header
            %s1308 = sphi 0, %s1312
            %p1309 = scmp.ge.s32.totalorder %s1308, 1
            %s1313 = sphi %s1285, %s1285
            %s1314 = sphi %s1286, %s1286
          $region854: #{tpu_custom_call.1} parent=850 // loop_header_branch
            %1311 = sbr.rel (%p1309) target = $region858
          $region855: #{tpu_custom_call.1} parent=850 // loop_body
            %v1315 = vld [vmem:[%s1313] sm:%s1306]
            %1316 = vst [vmem:[%s1314] sm:%s1306] %v1315
          $region856: #{tpu_custom_call.1} parent=850 // loop_footer
            %s1312 = sadd.s32 1, %s1308
          $region857: #{tpu_custom_call.1} parent=850 // loop_footer_branch
            %1307 = sbr.rel target = $region853
          $region858: #{tpu_custom_call.1} parent=850 // loop_exit
            _
        $region851: #{tpu_custom_call.1} parent=835 // pred_fallthru
          _
      $region836: #{tpu_custom_call.1} parent=51 // pred_fallthru
        _
      // Predicated region
      $region837: #{tpu_custom_call.1} parent=51 // pred_check
        _
      $region838: #{tpu_custom_call.1} parent=51 // pred_check_branch
        %1290 = sbr.rel (0) target = $region840
      $region839: #{tpu_custom_call.1} parent=51 // pred_region
        %s1292 = ssub.s32 2, 1
        loop: start=0, step=1, limit=1
        $region841: #{tpu_custom_call.1} parent=839 // loop_pre_header
          _
        $region842: #{tpu_custom_call.1} parent=839 // loop_header
          %s1294 = sphi 0, %s1298
          %p1295 = scmp.ge.s32.totalorder %s1294, 1
          %s1299 = sphi %s1285, %s1285
          %s1300 = sphi %s1286, %s1286
        $region843: #{tpu_custom_call.1} parent=839 // loop_header_branch
          %1297 = sbr.rel (%p1295) target = $region847
        $region844: #{tpu_custom_call.1} parent=839 // loop_body
          %v1301 = vld [vmem:[%s1299] sm:%s1292]
          %1302 = vst [vmem:[%s1300] sm:%s1292] %v1301
        $region845: #{tpu_custom_call.1} parent=839 // loop_footer
          %s1298 = sadd.s32 1, %s1294
        $region846: #{tpu_custom_call.1} parent=839 // loop_footer_branch
          %1293 = sbr.rel target = $region842
        $region847: #{tpu_custom_call.1} parent=839 // loop_exit
          _
      $region840: #{tpu_custom_call.1} parent=51 // pred_fallthru
        _
      // Predicated region
      $region859: #{tpu_custom_call.1} parent=51 // pred_check
        _
      $region860: #{tpu_custom_call.1} parent=51 // pred_check_branch
        %1319 = sbr.rel (0) target = $region862
      $region861: #{tpu_custom_call.1} parent=51 // pred_region
        %1320 = vsyncadd [#allocation3], 16
      $region862: #{tpu_custom_call.1} parent=51 // pred_fallthru
        _
      %s1321 = sadd.s32 %s296, 27
      %s1322 = sld [smem:[#allocation5 + %s1321]]
      %s1323 = scalar_lea.vmem %s1, %s1322
      %s1324 = scalar_lea.vmem [#allocation2], 21
      // Predicated region
      $region863: #{tpu_custom_call.1} parent=51 // pred_check
        _
      $region864: #{tpu_custom_call.1} parent=51 // pred_check_branch
        %1326 = sbr.rel target = $region866
      $region865: #{tpu_custom_call.1} parent=51 // pred_region
        // Predicated region
        $region878: #{tpu_custom_call.1} parent=865 // pred_check
          _
        $region879: #{tpu_custom_call.1} parent=865 // pred_check_branch
          %1342 = sbr.rel (0) target = $region881
        $region880: #{tpu_custom_call.1} parent=865 // pred_region
          %s1344 = ssub.s32 2, 1
          loop: start=0, step=1, limit=1
          $region882: #{tpu_custom_call.1} parent=880 // loop_pre_header
            _
          $region883: #{tpu_custom_call.1} parent=880 // loop_header
            %s1346 = sphi 0, %s1350
            %p1347 = scmp.ge.s32.totalorder %s1346, 1
            %s1351 = sphi %s1323, %s1323
            %s1352 = sphi %s1324, %s1324
          $region884: #{tpu_custom_call.1} parent=880 // loop_header_branch
            %1349 = sbr.rel (%p1347) target = $region888
          $region885: #{tpu_custom_call.1} parent=880 // loop_body
            %v1353 = vld [vmem:[%s1351] sm:%s1344]
            %1354 = vst [vmem:[%s1352] sm:%s1344] %v1353
          $region886: #{tpu_custom_call.1} parent=880 // loop_footer
            %s1350 = sadd.s32 1, %s1346
          $region887: #{tpu_custom_call.1} parent=880 // loop_footer_branch
            %1345 = sbr.rel target = $region883
          $region888: #{tpu_custom_call.1} parent=880 // loop_exit
            _
        $region881: #{tpu_custom_call.1} parent=865 // pred_fallthru
          _
      $region866: #{tpu_custom_call.1} parent=51 // pred_fallthru
        _
      // Predicated region
      $region867: #{tpu_custom_call.1} parent=51 // pred_check
        _
      $region868: #{tpu_custom_call.1} parent=51 // pred_check_branch
        %1328 = sbr.rel (0) target = $region870
      $region869: #{tpu_custom_call.1} parent=51 // pred_region
        %s1330 = ssub.s32 2, 1
        loop: start=0, step=1, limit=1
        $region871: #{tpu_custom_call.1} parent=869 // loop_pre_header
          _
        $region872: #{tpu_custom_call.1} parent=869 // loop_header
          %s1332 = sphi 0, %s1336
          %p1333 = scmp.ge.s32.totalorder %s1332, 1
          %s1337 = sphi %s1323, %s1323
          %s1338 = sphi %s1324, %s1324
        $region873: #{tpu_custom_call.1} parent=869 // loop_header_branch
          %1335 = sbr.rel (%p1333) target = $region877
        $region874: #{tpu_custom_call.1} parent=869 // loop_body
          %v1339 = vld [vmem:[%s1337] sm:%s1330]
          %1340 = vst [vmem:[%s1338] sm:%s1330] %v1339
        $region875: #{tpu_custom_call.1} parent=869 // loop_footer
          %s1336 = sadd.s32 1, %s1332
        $region876: #{tpu_custom_call.1} parent=869 // loop_footer_branch
          %1331 = sbr.rel target = $region872
        $region877: #{tpu_custom_call.1} parent=869 // loop_exit
          _
      $region870: #{tpu_custom_call.1} parent=51 // pred_fallthru
        _
      // Predicated region
      $region889: #{tpu_custom_call.1} parent=51 // pred_check
        _
      $region890: #{tpu_custom_call.1} parent=51 // pred_check_branch
        %1357 = sbr.rel (0) target = $region892
      $region891: #{tpu_custom_call.1} parent=51 // pred_region
        %1358 = vsyncadd [#allocation3], 16
      $region892: #{tpu_custom_call.1} parent=51 // pred_fallthru
        _
      %s1359 = sadd.s32 %s296, 28
      %s1360 = sld [smem:[#allocation5 + %s1359]]
      %s1361 = scalar_lea.vmem %s1, %s1360
      %s1362 = scalar_lea.vmem [#allocation2], 29
      // Predicated region
      $region893: #{tpu_custom_call.1} parent=51 // pred_check
        _
      $region894: #{tpu_custom_call.1} parent=51 // pred_check_branch
        %1364 = sbr.rel target = $region896
      $region895: #{tpu_custom_call.1} parent=51 // pred_region
        // Predicated region
        $region908: #{tpu_custom_call.1} parent=895 // pred_check
          _
        $region909: #{tpu_custom_call.1} parent=895 // pred_check_branch
          %1380 = sbr.rel (0) target = $region911
        $region910: #{tpu_custom_call.1} parent=895 // pred_region
          %s1382 = ssub.s32 2, 1
          loop: start=0, step=1, limit=1
          $region912: #{tpu_custom_call.1} parent=910 // loop_pre_header
            _
          $region913: #{tpu_custom_call.1} parent=910 // loop_header
            %s1384 = sphi 0, %s1388
            %p1385 = scmp.ge.s32.totalorder %s1384, 1
            %s1389 = sphi %s1361, %s1361
            %s1390 = sphi %s1362, %s1362
          $region914: #{tpu_custom_call.1} parent=910 // loop_header_branch
            %1387 = sbr.rel (%p1385) target = $region918
          $region915: #{tpu_custom_call.1} parent=910 // loop_body
            %v1391 = vld [vmem:[%s1389] sm:%s1382]
            %1392 = vst [vmem:[%s1390] sm:%s1382] %v1391
          $region916: #{tpu_custom_call.1} parent=910 // loop_footer
            %s1388 = sadd.s32 1, %s1384
          $region917: #{tpu_custom_call.1} parent=910 // loop_footer_branch
            %1383 = sbr.rel target = $region913
          $region918: #{tpu_custom_call.1} parent=910 // loop_exit
            _
        $region911: #{tpu_custom_call.1} parent=895 // pred_fallthru
          _
      $region896: #{tpu_custom_call.1} parent=51 // pred_fallthru
        _
      // Predicated region
      $region897: #{tpu_custom_call.1} parent=51 // pred_check
        _
      $region898: #{tpu_custom_call.1} parent=51 // pred_check_branch
        %1366 = sbr.rel (0) target = $region900
      $region899: #{tpu_custom_call.1} parent=51 // pred_region
        %s1368 = ssub.s32 2, 1
        loop: start=0, step=1, limit=1
        $region901: #{tpu_custom_call.1} parent=899 // loop_pre_header
          _
        $region902: #{tpu_custom_call.1} parent=899 // loop_header
          %s1370 = sphi 0, %s1374
          %p1371 = scmp.ge.s32.totalorder %s1370, 1
          %s1375 = sphi %s1361, %s1361
          %s1376 = sphi %s1362, %s1362
        $region903: #{tpu_custom_call.1} parent=899 // loop_header_branch
          %1373 = sbr.rel (%p1371) target = $region907
        $region904: #{tpu_custom_call.1} parent=899 // loop_body
          %v1377 = vld [vmem:[%s1375] sm:%s1368]
          %1378 = vst [vmem:[%s1376] sm:%s1368] %v1377
        $region905: #{tpu_custom_call.1} parent=899 // loop_footer
          %s1374 = sadd.s32 1, %s1370
        $region906: #{tpu_custom_call.1} parent=899 // loop_footer_branch
          %1369 = sbr.rel target = $region902
        $region907: #{tpu_custom_call.1} parent=899 // loop_exit
          _
      $region900: #{tpu_custom_call.1} parent=51 // pred_fallthru
        _
      // Predicated region
      $region919: #{tpu_custom_call.1} parent=51 // pred_check
        _
      $region920: #{tpu_custom_call.1} parent=51 // pred_check_branch
        %1395 = sbr.rel (0) target = $region922
      $region921: #{tpu_custom_call.1} parent=51 // pred_region
        %1396 = vsyncadd [#allocation3], 16
      $region922: #{tpu_custom_call.1} parent=51 // pred_fallthru
        _
      %s1397 = sadd.s32 %s296, 29
      %s1398 = sld [smem:[#allocation5 + %s1397]]
      %s1399 = scalar_lea.vmem %s1, %s1398
      %s1400 = scalar_lea.vmem [#allocation2], 37
      // Predicated region
      $region923: #{tpu_custom_call.1} parent=51 // pred_check
        _
      $region924: #{tpu_custom_call.1} parent=51 // pred_check_branch
        %1402 = sbr.rel target = $region926
      $region925: #{tpu_custom_call.1} parent=51 // pred_region
        // Predicated region
        $region938: #{tpu_custom_call.1} parent=925 // pred_check
          _
        $region939: #{tpu_custom_call.1} parent=925 // pred_check_branch
          %1418 = sbr.rel (0) target = $region941
        $region940: #{tpu_custom_call.1} parent=925 // pred_region
          %s1420 = ssub.s32 2, 1
          loop: start=0, step=1, limit=1
          $region942: #{tpu_custom_call.1} parent=940 // loop_pre_header
            _
          $region943: #{tpu_custom_call.1} parent=940 // loop_header
            %s1422 = sphi 0, %s1426
            %p1423 = scmp.ge.s32.totalorder %s1422, 1
            %s1427 = sphi %s1399, %s1399
            %s1428 = sphi %s1400, %s1400
          $region944: #{tpu_custom_call.1} parent=940 // loop_header_branch
            %1425 = sbr.rel (%p1423) target = $region948
          $region945: #{tpu_custom_call.1} parent=940 // loop_body
            %v1429 = vld [vmem:[%s1427] sm:%s1420]
            %1430 = vst [vmem:[%s1428] sm:%s1420] %v1429
          $region946: #{tpu_custom_call.1} parent=940 // loop_footer
            %s1426 = sadd.s32 1, %s1422
          $region947: #{tpu_custom_call.1} parent=940 // loop_footer_branch
            %1421 = sbr.rel target = $region943
          $region948: #{tpu_custom_call.1} parent=940 // loop_exit
            _
        $region941: #{tpu_custom_call.1} parent=925 // pred_fallthru
          _
      $region926: #{tpu_custom_call.1} parent=51 // pred_fallthru
        _
      // Predicated region
      $region927: #{tpu_custom_call.1} parent=51 // pred_check
        _
      $region928: #{tpu_custom_call.1} parent=51 // pred_check_branch
        %1404 = sbr.rel (0) target = $region930
      $region929: #{tpu_custom_call.1} parent=51 // pred_region
        %s1406 = ssub.s32 2, 1
        loop: start=0, step=1, limit=1
        $region931: #{tpu_custom_call.1} parent=929 // loop_pre_header
          _
        $region932: #{tpu_custom_call.1} parent=929 // loop_header
          %s1408 = sphi 0, %s1412
          %p1409 = scmp.ge.s32.totalorder %s1408, 1
          %s1413 = sphi %s1399, %s1399
          %s1414 = sphi %s1400, %s1400
        $region933: #{tpu_custom_call.1} parent=929 // loop_header_branch
          %1411 = sbr.rel (%p1409) target = $region937
        $region934: #{tpu_custom_call.1} parent=929 // loop_body
          %v1415 = vld [vmem:[%s1413] sm:%s1406]
          %1416 = vst [vmem:[%s1414] sm:%s1406] %v1415
        $region935: #{tpu_custom_call.1} parent=929 // loop_footer
          %s1412 = sadd.s32 1, %s1408
        $region936: #{tpu_custom_call.1} parent=929 // loop_footer_branch
          %1407 = sbr.rel target = $region932
        $region937: #{tpu_custom_call.1} parent=929 // loop_exit
          _
      $region930: #{tpu_custom_call.1} parent=51 // pred_fallthru
        _
      // Predicated region
      $region949: #{tpu_custom_call.1} parent=51 // pred_check
        _
      $region950: #{tpu_custom_call.1} parent=51 // pred_check_branch
        %1433 = sbr.rel (0) target = $region952
      $region951: #{tpu_custom_call.1} parent=51 // pred_region
        %1434 = vsyncadd [#allocation3], 16
      $region952: #{tpu_custom_call.1} parent=51 // pred_fallthru
        _
      %s1435 = sadd.s32 %s296, 30
      %s1436 = sld [smem:[#allocation5 + %s1435]]
      %s1437 = scalar_lea.vmem %s1, %s1436
      %s1438 = scalar_lea.vmem [#allocation2], 6
      // Predicated region
      $region953: #{tpu_custom_call.1} parent=51 // pred_check
        _
      $region954: #{tpu_custom_call.1} parent=51 // pred_check_branch
        %1440 = sbr.rel target = $region956
      $region955: #{tpu_custom_call.1} parent=51 // pred_region
        // Predicated region
        $region968: #{tpu_custom_call.1} parent=955 // pred_check
          _
        $region969: #{tpu_custom_call.1} parent=955 // pred_check_branch
          %1456 = sbr.rel (0) target = $region971
        $region970: #{tpu_custom_call.1} parent=955 // pred_region
          %s1458 = ssub.s32 2, 1
          loop: start=0, step=1, limit=1
          $region972: #{tpu_custom_call.1} parent=970 // loop_pre_header
            _
          $region973: #{tpu_custom_call.1} parent=970 // loop_header
            %s1460 = sphi 0, %s1464
            %p1461 = scmp.ge.s32.totalorder %s1460, 1
            %s1465 = sphi %s1437, %s1437
            %s1466 = sphi %s1438, %s1438
          $region974: #{tpu_custom_call.1} parent=970 // loop_header_branch
            %1463 = sbr.rel (%p1461) target = $region978
          $region975: #{tpu_custom_call.1} parent=970 // loop_body
            %v1467 = vld [vmem:[%s1465] sm:%s1458]
            %1468 = vst [vmem:[%s1466] sm:%s1458] %v1467
          $region976: #{tpu_custom_call.1} parent=970 // loop_footer
            %s1464 = sadd.s32 1, %s1460
          $region977: #{tpu_custom_call.1} parent=970 // loop_footer_branch
            %1459 = sbr.rel target = $region973
          $region978: #{tpu_custom_call.1} parent=970 // loop_exit
            _
        $region971: #{tpu_custom_call.1} parent=955 // pred_fallthru
          _
      $region956: #{tpu_custom_call.1} parent=51 // pred_fallthru
        _
      // Predicated region
      $region957: #{tpu_custom_call.1} parent=51 // pred_check
        _
      $region958: #{tpu_custom_call.1} parent=51 // pred_check_branch
        %1442 = sbr.rel (0) target = $region960
      $region959: #{tpu_custom_call.1} parent=51 // pred_region
        %s1444 = ssub.s32 2, 1
        loop: start=0, step=1, limit=1
        $region961: #{tpu_custom_call.1} parent=959 // loop_pre_header
          _
        $region962: #{tpu_custom_call.1} parent=959 // loop_header
          %s1446 = sphi 0, %s1450
          %p1447 = scmp.ge.s32.totalorder %s1446, 1
          %s1451 = sphi %s1437, %s1437
          %s1452 = sphi %s1438, %s1438
        $region963: #{tpu_custom_call.1} parent=959 // loop_header_branch
          %1449 = sbr.rel (%p1447) target = $region967
        $region964: #{tpu_custom_call.1} parent=959 // loop_body
          %v1453 = vld [vmem:[%s1451] sm:%s1444]
          %1454 = vst [vmem:[%s1452] sm:%s1444] %v1453
        $region965: #{tpu_custom_call.1} parent=959 // loop_footer
          %s1450 = sadd.s32 1, %s1446
        $region966: #{tpu_custom_call.1} parent=959 // loop_footer_branch
          %1445 = sbr.rel target = $region962
        $region967: #{tpu_custom_call.1} parent=959 // loop_exit
          _
      $region960: #{tpu_custom_call.1} parent=51 // pred_fallthru
        _
      // Predicated region
      $region979: #{tpu_custom_call.1} parent=51 // pred_check
        _
      $region980: #{tpu_custom_call.1} parent=51 // pred_check_branch
        %1471 = sbr.rel (0) target = $region982
      $region981: #{tpu_custom_call.1} parent=51 // pred_region
        %1472 = vsyncadd [#allocation3], 16
      $region982: #{tpu_custom_call.1} parent=51 // pred_fallthru
        _
      %s1473 = sadd.s32 %s296, 31
      %s1474 = sld [smem:[#allocation5 + %s1473]]
      %s1475 = scalar_lea.vmem %s1, %s1474
      %s1476 = scalar_lea.vmem [#allocation2], 14
      // Predicated region
      $region983: #{tpu_custom_call.1} parent=51 // pred_check
        _
      $region984: #{tpu_custom_call.1} parent=51 // pred_check_branch
        %1478 = sbr.rel target = $region986
      $region985: #{tpu_custom_call.1} parent=51 // pred_region
        // Predicated region
        $region998: #{tpu_custom_call.1} parent=985 // pred_check
          _
        $region999: #{tpu_custom_call.1} parent=985 // pred_check_branch
          %1494 = sbr.rel (0) target = $region1001
        $region1000: #{tpu_custom_call.1} parent=985 // pred_region
          %s1496 = ssub.s32 2, 1
          loop: start=0, step=1, limit=1
          $region1002: #{tpu_custom_call.1} parent=1000 // loop_pre_header
            _
          $region1003: #{tpu_custom_call.1} parent=1000 // loop_header
            %s1498 = sphi 0, %s1502
            %p1499 = scmp.ge.s32.totalorder %s1498, 1
            %s1503 = sphi %s1475, %s1475
            %s1504 = sphi %s1476, %s1476
          $region1004: #{tpu_custom_call.1} parent=1000 // loop_header_branch
            %1501 = sbr.rel (%p1499) target = $region1008
          $region1005: #{tpu_custom_call.1} parent=1000 // loop_body
            %v1505 = vld [vmem:[%s1503] sm:%s1496]
            %1506 = vst [vmem:[%s1504] sm:%s1496] %v1505
          $region1006: #{tpu_custom_call.1} parent=1000 // loop_footer
            %s1502 = sadd.s32 1, %s1498
          $region1007: #{tpu_custom_call.1} parent=1000 // loop_footer_branch
            %1497 = sbr.rel target = $region1003
          $region1008: #{tpu_custom_call.1} parent=1000 // loop_exit
            _
        $region1001: #{tpu_custom_call.1} parent=985 // pred_fallthru
          _
      $region986: #{tpu_custom_call.1} parent=51 // pred_fallthru
        _
      // Predicated region
      $region987: #{tpu_custom_call.1} parent=51 // pred_check
        _
      $region988: #{tpu_custom_call.1} parent=51 // pred_check_branch
        %1480 = sbr.rel (0) target = $region990
      $region989: #{tpu_custom_call.1} parent=51 // pred_region
        %s1482 = ssub.s32 2, 1
        loop: start=0, step=1, limit=1
        $region991: #{tpu_custom_call.1} parent=989 // loop_pre_header
          _
        $region992: #{tpu_custom_call.1} parent=989 // loop_header
          %s1484 = sphi 0, %s1488
          %p1485 = scmp.ge.s32.totalorder %s1484, 1
          %s1489 = sphi %s1475, %s1475
          %s1490 = sphi %s1476, %s1476
        $region993: #{tpu_custom_call.1} parent=989 // loop_header_branch
          %1487 = sbr.rel (%p1485) target = $region997
        $region994: #{tpu_custom_call.1} parent=989 // loop_body
          %v1491 = vld [vmem:[%s1489] sm:%s1482]
          %1492 = vst [vmem:[%s1490] sm:%s1482] %v1491
        $region995: #{tpu_custom_call.1} parent=989 // loop_footer
          %s1488 = sadd.s32 1, %s1484
        $region996: #{tpu_custom_call.1} parent=989 // loop_footer_branch
          %1483 = sbr.rel target = $region992
        $region997: #{tpu_custom_call.1} parent=989 // loop_exit
          _
      $region990: #{tpu_custom_call.1} parent=51 // pred_fallthru
        _
      // Predicated region
      $region1009: #{tpu_custom_call.1} parent=51 // pred_check
        _
      $region1010: #{tpu_custom_call.1} parent=51 // pred_check_branch
        %1509 = sbr.rel (0) target = $region1012
      $region1011: #{tpu_custom_call.1} parent=51 // pred_region
        %1510 = vsyncadd [#allocation3], 16
      $region1012: #{tpu_custom_call.1} parent=51 // pred_fallthru
        _
      %s1511 = sadd.s32 %s296, 32
      %s1512 = sld [smem:[#allocation5 + %s1511]]
      %s1513 = scalar_lea.vmem %s1, %s1512
      %s1514 = scalar_lea.vmem [#allocation2], 22
      // Predicated region
      $region1013: #{tpu_custom_call.1} parent=51 // pred_check
        _
      $region1014: #{tpu_custom_call.1} parent=51 // pred_check_branch
        %1516 = sbr.rel target = $region1016
      $region1015: #{tpu_custom_call.1} parent=51 // pred_region
        // Predicated region
        $region1028: #{tpu_custom_call.1} parent=1015 // pred_check
          _
        $region1029: #{tpu_custom_call.1} parent=1015 // pred_check_branch
          %1532 = sbr.rel (0) target = $region1031
        $region1030: #{tpu_custom_call.1} parent=1015 // pred_region
          %s1534 = ssub.s32 2, 1
          loop: start=0, step=1, limit=1
          $region1032: #{tpu_custom_call.1} parent=1030 // loop_pre_header
            _
          $region1033: #{tpu_custom_call.1} parent=1030 // loop_header
            %s1536 = sphi 0, %s1540
            %p1537 = scmp.ge.s32.totalorder %s1536, 1
            %s1541 = sphi %s1513, %s1513
            %s1542 = sphi %s1514, %s1514
          $region1034: #{tpu_custom_call.1} parent=1030 // loop_header_branch
            %1539 = sbr.rel (%p1537) target = $region1038
          $region1035: #{tpu_custom_call.1} parent=1030 // loop_body
            %v1543 = vld [vmem:[%s1541] sm:%s1534]
            %1544 = vst [vmem:[%s1542] sm:%s1534] %v1543
          $region1036: #{tpu_custom_call.1} parent=1030 // loop_footer
            %s1540 = sadd.s32 1, %s1536
          $region1037: #{tpu_custom_call.1} parent=1030 // loop_footer_branch
            %1535 = sbr.rel target = $region1033
          $region1038: #{tpu_custom_call.1} parent=1030 // loop_exit
            _
        $region1031: #{tpu_custom_call.1} parent=1015 // pred_fallthru
          _
      $region1016: #{tpu_custom_call.1} parent=51 // pred_fallthru
        _
      // Predicated region
      $region1017: #{tpu_custom_call.1} parent=51 // pred_check
        _
      $region1018: #{tpu_custom_call.1} parent=51 // pred_check_branch
        %1518 = sbr.rel (0) target = $region1020
      $region1019: #{tpu_custom_call.1} parent=51 // pred_region
        %s1520 = ssub.s32 2, 1
        loop: start=0, step=1, limit=1
        $region1021: #{tpu_custom_call.1} parent=1019 // loop_pre_header
          _
        $region1022: #{tpu_custom_call.1} parent=1019 // loop_header
          %s1522 = sphi 0, %s1526
          %p1523 = scmp.ge.s32.totalorder %s1522, 1
          %s1527 = sphi %s1513, %s1513
          %s1528 = sphi %s1514, %s1514
        $region1023: #{tpu_custom_call.1} parent=1019 // loop_header_branch
          %1525 = sbr.rel (%p1523) target = $region1027
        $region1024: #{tpu_custom_call.1} parent=1019 // loop_body
          %v1529 = vld [vmem:[%s1527] sm:%s1520]
          %1530 = vst [vmem:[%s1528] sm:%s1520] %v1529
        $region1025: #{tpu_custom_call.1} parent=1019 // loop_footer
          %s1526 = sadd.s32 1, %s1522
        $region1026: #{tpu_custom_call.1} parent=1019 // loop_footer_branch
          %1521 = sbr.rel target = $region1022
        $region1027: #{tpu_custom_call.1} parent=1019 // loop_exit
          _
      $region1020: #{tpu_custom_call.1} parent=51 // pred_fallthru
        _
      // Predicated region
      $region1039: #{tpu_custom_call.1} parent=51 // pred_check
        _
      $region1040: #{tpu_custom_call.1} parent=51 // pred_check_branch
        %1547 = sbr.rel (0) target = $region1042
      $region1041: #{tpu_custom_call.1} parent=51 // pred_region
        %1548 = vsyncadd [#allocation3], 16
      $region1042: #{tpu_custom_call.1} parent=51 // pred_fallthru
        _
      %s1549 = sadd.s32 %s296, 33
      %s1550 = sld [smem:[#allocation5 + %s1549]]
      %s1551 = scalar_lea.vmem %s1, %s1550
      %s1552 = scalar_lea.vmem [#allocation2], 30
      // Predicated region
      $region1043: #{tpu_custom_call.1} parent=51 // pred_check
        _
      $region1044: #{tpu_custom_call.1} parent=51 // pred_check_branch
        %1554 = sbr.rel target = $region1046
      $region1045: #{tpu_custom_call.1} parent=51 // pred_region
        // Predicated region
        $region1058: #{tpu_custom_call.1} parent=1045 // pred_check
          _
        $region1059: #{tpu_custom_call.1} parent=1045 // pred_check_branch
          %1570 = sbr.rel (0) target = $region1061
        $region1060: #{tpu_custom_call.1} parent=1045 // pred_region
          %s1572 = ssub.s32 2, 1
          loop: start=0, step=1, limit=1
          $region1062: #{tpu_custom_call.1} parent=1060 // loop_pre_header
            _
          $region1063: #{tpu_custom_call.1} parent=1060 // loop_header
            %s1574 = sphi 0, %s1578
            %p1575 = scmp.ge.s32.totalorder %s1574, 1
            %s1579 = sphi %s1551, %s1551
            %s1580 = sphi %s1552, %s1552
          $region1064: #{tpu_custom_call.1} parent=1060 // loop_header_branch
            %1577 = sbr.rel (%p1575) target = $region1068
          $region1065: #{tpu_custom_call.1} parent=1060 // loop_body
            %v1581 = vld [vmem:[%s1579] sm:%s1572]
            %1582 = vst [vmem:[%s1580] sm:%s1572] %v1581
          $region1066: #{tpu_custom_call.1} parent=1060 // loop_footer
            %s1578 = sadd.s32 1, %s1574
          $region1067: #{tpu_custom_call.1} parent=1060 // loop_footer_branch
            %1573 = sbr.rel target = $region1063
          $region1068: #{tpu_custom_call.1} parent=1060 // loop_exit
            _
        $region1061: #{tpu_custom_call.1} parent=1045 // pred_fallthru
          _
      $region1046: #{tpu_custom_call.1} parent=51 // pred_fallthru
        _
      // Predicated region
      $region1047: #{tpu_custom_call.1} parent=51 // pred_check
        _
      $region1048: #{tpu_custom_call.1} parent=51 // pred_check_branch
        %1556 = sbr.rel (0) target = $region1050
      $region1049: #{tpu_custom_call.1} parent=51 // pred_region
        %s1558 = ssub.s32 2, 1
        loop: start=0, step=1, limit=1
        $region1051: #{tpu_custom_call.1} parent=1049 // loop_pre_header
          _
        $region1052: #{tpu_custom_call.1} parent=1049 // loop_header
          %s1560 = sphi 0, %s1564
          %p1561 = scmp.ge.s32.totalorder %s1560, 1
          %s1565 = sphi %s1551, %s1551
          %s1566 = sphi %s1552, %s1552
        $region1053: #{tpu_custom_call.1} parent=1049 // loop_header_branch
          %1563 = sbr.rel (%p1561) target = $region1057
        $region1054: #{tpu_custom_call.1} parent=1049 // loop_body
          %v1567 = vld [vmem:[%s1565] sm:%s1558]
          %1568 = vst [vmem:[%s1566] sm:%s1558] %v1567
        $region1055: #{tpu_custom_call.1} parent=1049 // loop_footer
          %s1564 = sadd.s32 1, %s1560
        $region1056: #{tpu_custom_call.1} parent=1049 // loop_footer_branch
          %1559 = sbr.rel target = $region1052
        $region1057: #{tpu_custom_call.1} parent=1049 // loop_exit
          _
      $region1050: #{tpu_custom_call.1} parent=51 // pred_fallthru
        _
      // Predicated region
      $region1069: #{tpu_custom_call.1} parent=51 // pred_check
        _
      $region1070: #{tpu_custom_call.1} parent=51 // pred_check_branch
        %1585 = sbr.rel (0) target = $region1072
      $region1071: #{tpu_custom_call.1} parent=51 // pred_region
        %1586 = vsyncadd [#allocation3], 16
      $region1072: #{tpu_custom_call.1} parent=51 // pred_fallthru
        _
      %s1587 = sadd.s32 %s296, 34
      %s1588 = sld [smem:[#allocation5 + %s1587]]
      %s1589 = scalar_lea.vmem %s1, %s1588
      %s1590 = scalar_lea.vmem [#allocation2], 38
      // Predicated region
      $region1073: #{tpu_custom_call.1} parent=51 // pred_check
        _
      $region1074: #{tpu_custom_call.1} parent=51 // pred_check_branch
        %1592 = sbr.rel target = $region1076
      $region1075: #{tpu_custom_call.1} parent=51 // pred_region
        // Predicated region
        $region1088: #{tpu_custom_call.1} parent=1075 // pred_check
          _
        $region1089: #{tpu_custom_call.1} parent=1075 // pred_check_branch
          %1608 = sbr.rel (0) target = $region1091
        $region1090: #{tpu_custom_call.1} parent=1075 // pred_region
          %s1610 = ssub.s32 2, 1
          loop: start=0, step=1, limit=1
          $region1092: #{tpu_custom_call.1} parent=1090 // loop_pre_header
            _
          $region1093: #{tpu_custom_call.1} parent=1090 // loop_header
            %s1612 = sphi 0, %s1616
            %p1613 = scmp.ge.s32.totalorder %s1612, 1
            %s1617 = sphi %s1589, %s1589
            %s1618 = sphi %s1590, %s1590
          $region1094: #{tpu_custom_call.1} parent=1090 // loop_header_branch
            %1615 = sbr.rel (%p1613) target = $region1098
          $region1095: #{tpu_custom_call.1} parent=1090 // loop_body
            %v1619 = vld [vmem:[%s1617] sm:%s1610]
            %1620 = vst [vmem:[%s1618] sm:%s1610] %v1619
          $region1096: #{tpu_custom_call.1} parent=1090 // loop_footer
            %s1616 = sadd.s32 1, %s1612
          $region1097: #{tpu_custom_call.1} parent=1090 // loop_footer_branch
            %1611 = sbr.rel target = $region1093
          $region1098: #{tpu_custom_call.1} parent=1090 // loop_exit
            _
        $region1091: #{tpu_custom_call.1} parent=1075 // pred_fallthru
          _
      $region1076: #{tpu_custom_call.1} parent=51 // pred_fallthru
        _
      // Predicated region
      $region1077: #{tpu_custom_call.1} parent=51 // pred_check
        _
      $region1078: #{tpu_custom_call.1} parent=51 // pred_check_branch
        %1594 = sbr.rel (0) target = $region1080
      $region1079: #{tpu_custom_call.1} parent=51 // pred_region
        %s1596 = ssub.s32 2, 1
        loop: start=0, step=1, limit=1
        $region1081: #{tpu_custom_call.1} parent=1079 // loop_pre_header
          _
        $region1082: #{tpu_custom_call.1} parent=1079 // loop_header
          %s1598 = sphi 0, %s1602
          %p1599 = scmp.ge.s32.totalorder %s1598, 1
          %s1603 = sphi %s1589, %s1589
          %s1604 = sphi %s1590, %s1590
        $region1083: #{tpu_custom_call.1} parent=1079 // loop_header_branch
          %1601 = sbr.rel (%p1599) target = $region1087
        $region1084: #{tpu_custom_call.1} parent=1079 // loop_body
          %v1605 = vld [vmem:[%s1603] sm:%s1596]
          %1606 = vst [vmem:[%s1604] sm:%s1596] %v1605
        $region1085: #{tpu_custom_call.1} parent=1079 // loop_footer
          %s1602 = sadd.s32 1, %s1598
        $region1086: #{tpu_custom_call.1} parent=1079 // loop_footer_branch
          %1597 = sbr.rel target = $region1082
        $region1087: #{tpu_custom_call.1} parent=1079 // loop_exit
          _
      $region1080: #{tpu_custom_call.1} parent=51 // pred_fallthru
        _
      // Predicated region
      $region1099: #{tpu_custom_call.1} parent=51 // pred_check
        _
      $region1100: #{tpu_custom_call.1} parent=51 // pred_check_branch
        %1623 = sbr.rel (0) target = $region1102
      $region1101: #{tpu_custom_call.1} parent=51 // pred_region
        %1624 = vsyncadd [#allocation3], 16
      $region1102: #{tpu_custom_call.1} parent=51 // pred_fallthru
        _
      %s1625 = sadd.s32 %s296, 35
      %s1626 = sld [smem:[#allocation5 + %s1625]]
      %s1627 = scalar_lea.vmem %s1, %s1626
      %s1628 = scalar_lea.vmem [#allocation2], 7
      // Predicated region
      $region1103: #{tpu_custom_call.1} parent=51 // pred_check
        _
      $region1104: #{tpu_custom_call.1} parent=51 // pred_check_branch
        %1630 = sbr.rel target = $region1106
      $region1105: #{tpu_custom_call.1} parent=51 // pred_region
        // Predicated region
        $region1118: #{tpu_custom_call.1} parent=1105 // pred_check
          _
        $region1119: #{tpu_custom_call.1} parent=1105 // pred_check_branch
          %1646 = sbr.rel (0) target = $region1121
        $region1120: #{tpu_custom_call.1} parent=1105 // pred_region
          %s1648 = ssub.s32 2, 1
          loop: start=0, step=1, limit=1
          $region1122: #{tpu_custom_call.1} parent=1120 // loop_pre_header
            _
          $region1123: #{tpu_custom_call.1} parent=1120 // loop_header
            %s1650 = sphi 0, %s1654
            %p1651 = scmp.ge.s32.totalorder %s1650, 1
            %s1655 = sphi %s1627, %s1627
            %s1656 = sphi %s1628, %s1628
          $region1124: #{tpu_custom_call.1} parent=1120 // loop_header_branch
            %1653 = sbr.rel (%p1651) target = $region1128
          $region1125: #{tpu_custom_call.1} parent=1120 // loop_body
            %v1657 = vld [vmem:[%s1655] sm:%s1648]
            %1658 = vst [vmem:[%s1656] sm:%s1648] %v1657
          $region1126: #{tpu_custom_call.1} parent=1120 // loop_footer
            %s1654 = sadd.s32 1, %s1650
          $region1127: #{tpu_custom_call.1} parent=1120 // loop_footer_branch
            %1649 = sbr.rel target = $region1123
          $region1128: #{tpu_custom_call.1} parent=1120 // loop_exit
            _
        $region1121: #{tpu_custom_call.1} parent=1105 // pred_fallthru
          _
      $region1106: #{tpu_custom_call.1} parent=51 // pred_fallthru
        _
      // Predicated region
      $region1107: #{tpu_custom_call.1} parent=51 // pred_check
        _
      $region1108: #{tpu_custom_call.1} parent=51 // pred_check_branch
        %1632 = sbr.rel (0) target = $region1110
      $region1109: #{tpu_custom_call.1} parent=51 // pred_region
        %s1634 = ssub.s32 2, 1
        loop: start=0, step=1, limit=1
        $region1111: #{tpu_custom_call.1} parent=1109 // loop_pre_header
          _
        $region1112: #{tpu_custom_call.1} parent=1109 // loop_header
          %s1636 = sphi 0, %s1640
          %p1637 = scmp.ge.s32.totalorder %s1636, 1
          %s1641 = sphi %s1627, %s1627
          %s1642 = sphi %s1628, %s1628
        $region1113: #{tpu_custom_call.1} parent=1109 // loop_header_branch
          %1639 = sbr.rel (%p1637) target = $region1117
        $region1114: #{tpu_custom_call.1} parent=1109 // loop_body
          %v1643 = vld [vmem:[%s1641] sm:%s1634]
          %1644 = vst [vmem:[%s1642] sm:%s1634] %v1643
        $region1115: #{tpu_custom_call.1} parent=1109 // loop_footer
          %s1640 = sadd.s32 1, %s1636
        $region1116: #{tpu_custom_call.1} parent=1109 // loop_footer_branch
          %1635 = sbr.rel target = $region1112
        $region1117: #{tpu_custom_call.1} parent=1109 // loop_exit
          _
      $region1110: #{tpu_custom_call.1} parent=51 // pred_fallthru
        _
      // Predicated region
      $region1129: #{tpu_custom_call.1} parent=51 // pred_check
        _
      $region1130: #{tpu_custom_call.1} parent=51 // pred_check_branch
        %1661 = sbr.rel (0) target = $region1132
      $region1131: #{tpu_custom_call.1} parent=51 // pred_region
        %1662 = vsyncadd [#allocation3], 16
      $region1132: #{tpu_custom_call.1} parent=51 // pred_fallthru
        _
      %s1663 = sadd.s32 %s296, 36
      %s1664 = sld [smem:[#allocation5 + %s1663]]
      %s1665 = scalar_lea.vmem %s1, %s1664
      %s1666 = scalar_lea.vmem [#allocation2], 15
      // Predicated region
      $region1133: #{tpu_custom_call.1} parent=51 // pred_check
        _
      $region1134: #{tpu_custom_call.1} parent=51 // pred_check_branch
        %1668 = sbr.rel target = $region1136
      $region1135: #{tpu_custom_call.1} parent=51 // pred_region
        // Predicated region
        $region1148: #{tpu_custom_call.1} parent=1135 // pred_check
          _
        $region1149: #{tpu_custom_call.1} parent=1135 // pred_check_branch
          %1684 = sbr.rel (0) target = $region1151
        $region1150: #{tpu_custom_call.1} parent=1135 // pred_region
          %s1686 = ssub.s32 2, 1
          loop: start=0, step=1, limit=1
          $region1152: #{tpu_custom_call.1} parent=1150 // loop_pre_header
            _
          $region1153: #{tpu_custom_call.1} parent=1150 // loop_header
            %s1688 = sphi 0, %s1692
            %p1689 = scmp.ge.s32.totalorder %s1688, 1
            %s1693 = sphi %s1665, %s1665
            %s1694 = sphi %s1666, %s1666
          $region1154: #{tpu_custom_call.1} parent=1150 // loop_header_branch
            %1691 = sbr.rel (%p1689) target = $region1158
          $region1155: #{tpu_custom_call.1} parent=1150 // loop_body
            %v1695 = vld [vmem:[%s1693] sm:%s1686]
            %1696 = vst [vmem:[%s1694] sm:%s1686] %v1695
          $region1156: #{tpu_custom_call.1} parent=1150 // loop_footer
            %s1692 = sadd.s32 1, %s1688
          $region1157: #{tpu_custom_call.1} parent=1150 // loop_footer_branch
            %1687 = sbr.rel target = $region1153
          $region1158: #{tpu_custom_call.1} parent=1150 // loop_exit
            _
        $region1151: #{tpu_custom_call.1} parent=1135 // pred_fallthru
          _
      $region1136: #{tpu_custom_call.1} parent=51 // pred_fallthru
        _
      // Predicated region
      $region1137: #{tpu_custom_call.1} parent=51 // pred_check
        _
      $region1138: #{tpu_custom_call.1} parent=51 // pred_check_branch
        %1670 = sbr.rel (0) target = $region1140
      $region1139: #{tpu_custom_call.1} parent=51 // pred_region
        %s1672 = ssub.s32 2, 1
        loop: start=0, step=1, limit=1
        $region1141: #{tpu_custom_call.1} parent=1139 // loop_pre_header
          _
        $region1142: #{tpu_custom_call.1} parent=1139 // loop_header
          %s1674 = sphi 0, %s1678
          %p1675 = scmp.ge.s32.totalorder %s1674, 1
          %s1679 = sphi %s1665, %s1665
          %s1680 = sphi %s1666, %s1666
        $region1143: #{tpu_custom_call.1} parent=1139 // loop_header_branch
          %1677 = sbr.rel (%p1675) target = $region1147
        $region1144: #{tpu_custom_call.1} parent=1139 // loop_body
          %v1681 = vld [vmem:[%s1679] sm:%s1672]
          %1682 = vst [vmem:[%s1680] sm:%s1672] %v1681
        $region1145: #{tpu_custom_call.1} parent=1139 // loop_footer
          %s1678 = sadd.s32 1, %s1674
        $region1146: #{tpu_custom_call.1} parent=1139 // loop_footer_branch
          %1673 = sbr.rel target = $region1142
        $region1147: #{tpu_custom_call.1} parent=1139 // loop_exit
          _
      $region1140: #{tpu_custom_call.1} parent=51 // pred_fallthru
        _
      // Predicated region
      $region1159: #{tpu_custom_call.1} parent=51 // pred_check
        _
      $region1160: #{tpu_custom_call.1} parent=51 // pred_check_branch
        %1699 = sbr.rel (0) target = $region1162
      $region1161: #{tpu_custom_call.1} parent=51 // pred_region
        %1700 = vsyncadd [#allocation3], 16
      $region1162: #{tpu_custom_call.1} parent=51 // pred_fallthru
        _
      %s1701 = sadd.s32 %s296, 37
      %s1702 = sld [smem:[#allocation5 + %s1701]]
      %s1703 = scalar_lea.vmem %s1, %s1702
      %s1704 = scalar_lea.vmem [#allocation2], 23
      // Predicated region
      $region1163: #{tpu_custom_call.1} parent=51 // pred_check
        _
      $region1164: #{tpu_custom_call.1} parent=51 // pred_check_branch
        %1706 = sbr.rel target = $region1166
      $region1165: #{tpu_custom_call.1} parent=51 // pred_region
        // Predicated region
        $region1178: #{tpu_custom_call.1} parent=1165 // pred_check
          _
        $region1179: #{tpu_custom_call.1} parent=1165 // pred_check_branch
          %1722 = sbr.rel (0) target = $region1181
        $region1180: #{tpu_custom_call.1} parent=1165 // pred_region
          %s1724 = ssub.s32 2, 1
          loop: start=0, step=1, limit=1
          $region1182: #{tpu_custom_call.1} parent=1180 // loop_pre_header
            _
          $region1183: #{tpu_custom_call.1} parent=1180 // loop_header
            %s1726 = sphi 0, %s1730
            %p1727 = scmp.ge.s32.totalorder %s1726, 1
            %s1731 = sphi %s1703, %s1703
            %s1732 = sphi %s1704, %s1704
          $region1184: #{tpu_custom_call.1} parent=1180 // loop_header_branch
            %1729 = sbr.rel (%p1727) target = $region1188
          $region1185: #{tpu_custom_call.1} parent=1180 // loop_body
            %v1733 = vld [vmem:[%s1731] sm:%s1724]
            %1734 = vst [vmem:[%s1732] sm:%s1724] %v1733
          $region1186: #{tpu_custom_call.1} parent=1180 // loop_footer
            %s1730 = sadd.s32 1, %s1726
          $region1187: #{tpu_custom_call.1} parent=1180 // loop_footer_branch
            %1725 = sbr.rel target = $region1183
          $region1188: #{tpu_custom_call.1} parent=1180 // loop_exit
            _
        $region1181: #{tpu_custom_call.1} parent=1165 // pred_fallthru
          _
      $region1166: #{tpu_custom_call.1} parent=51 // pred_fallthru
        _
      // Predicated region
      $region1167: #{tpu_custom_call.1} parent=51 // pred_check
        _
      $region1168: #{tpu_custom_call.1} parent=51 // pred_check_branch
        %1708 = sbr.rel (0) target = $region1170
      $region1169: #{tpu_custom_call.1} parent=51 // pred_region
        %s1710 = ssub.s32 2, 1
        loop: start=0, step=1, limit=1
        $region1171: #{tpu_custom_call.1} parent=1169 // loop_pre_header
          _
        $region1172: #{tpu_custom_call.1} parent=1169 // loop_header
          %s1712 = sphi 0, %s1716
          %p1713 = scmp.ge.s32.totalorder %s1712, 1
          %s1717 = sphi %s1703, %s1703
          %s1718 = sphi %s1704, %s1704
        $region1173: #{tpu_custom_call.1} parent=1169 // loop_header_branch
          %1715 = sbr.rel (%p1713) target = $region1177
        $region1174: #{tpu_custom_call.1} parent=1169 // loop_body
          %v1719 = vld [vmem:[%s1717] sm:%s1710]
          %1720 = vst [vmem:[%s1718] sm:%s1710] %v1719
        $region1175: #{tpu_custom_call.1} parent=1169 // loop_footer
          %s1716 = sadd.s32 1, %s1712
        $region1176: #{tpu_custom_call.1} parent=1169 // loop_footer_branch
          %1711 = sbr.rel target = $region1172
        $region1177: #{tpu_custom_call.1} parent=1169 // loop_exit
          _
      $region1170: #{tpu_custom_call.1} parent=51 // pred_fallthru
        _
      // Predicated region
      $region1189: #{tpu_custom_call.1} parent=51 // pred_check
        _
      $region1190: #{tpu_custom_call.1} parent=51 // pred_check_branch
        %1737 = sbr.rel (0) target = $region1192
      $region1191: #{tpu_custom_call.1} parent=51 // pred_region
        %1738 = vsyncadd [#allocation3], 16
      $region1192: #{tpu_custom_call.1} parent=51 // pred_fallthru
        _
      %s1739 = sadd.s32 %s296, 38
      %s1740 = sld [smem:[#allocation5 + %s1739]]
      %s1741 = scalar_lea.vmem %s1, %s1740
      %s1742 = scalar_lea.vmem [#allocation2], 31
      // Predicated region
      $region1193: #{tpu_custom_call.1} parent=51 // pred_check
        _
      $region1194: #{tpu_custom_call.1} parent=51 // pred_check_branch
        %1744 = sbr.rel target = $region1196
      $region1195: #{tpu_custom_call.1} parent=51 // pred_region
        // Predicated region
        $region1208: #{tpu_custom_call.1} parent=1195 // pred_check
          _
        $region1209: #{tpu_custom_call.1} parent=1195 // pred_check_branch
          %1760 = sbr.rel (0) target = $region1211
        $region1210: #{tpu_custom_call.1} parent=1195 // pred_region
          %s1762 = ssub.s32 2, 1
          loop: start=0, step=1, limit=1
          $region1212: #{tpu_custom_call.1} parent=1210 // loop_pre_header
            _
          $region1213: #{tpu_custom_call.1} parent=1210 // loop_header
            %s1764 = sphi 0, %s1768
            %p1765 = scmp.ge.s32.totalorder %s1764, 1
            %s1769 = sphi %s1741, %s1741
            %s1770 = sphi %s1742, %s1742
          $region1214: #{tpu_custom_call.1} parent=1210 // loop_header_branch
            %1767 = sbr.rel (%p1765) target = $region1218
          $region1215: #{tpu_custom_call.1} parent=1210 // loop_body
            %v1771 = vld [vmem:[%s1769] sm:%s1762]
            %1772 = vst [vmem:[%s1770] sm:%s1762] %v1771
          $region1216: #{tpu_custom_call.1} parent=1210 // loop_footer
            %s1768 = sadd.s32 1, %s1764
          $region1217: #{tpu_custom_call.1} parent=1210 // loop_footer_branch
            %1763 = sbr.rel target = $region1213
          $region1218: #{tpu_custom_call.1} parent=1210 // loop_exit
            _
        $region1211: #{tpu_custom_call.1} parent=1195 // pred_fallthru
          _
      $region1196: #{tpu_custom_call.1} parent=51 // pred_fallthru
        _
      // Predicated region
      $region1197: #{tpu_custom_call.1} parent=51 // pred_check
        _
      $region1198: #{tpu_custom_call.1} parent=51 // pred_check_branch
        %1746 = sbr.rel (0) target = $region1200
      $region1199: #{tpu_custom_call.1} parent=51 // pred_region
        %s1748 = ssub.s32 2, 1
        loop: start=0, step=1, limit=1
        $region1201: #{tpu_custom_call.1} parent=1199 // loop_pre_header
          _
        $region1202: #{tpu_custom_call.1} parent=1199 // loop_header
          %s1750 = sphi 0, %s1754
          %p1751 = scmp.ge.s32.totalorder %s1750, 1
          %s1755 = sphi %s1741, %s1741
          %s1756 = sphi %s1742, %s1742
        $region1203: #{tpu_custom_call.1} parent=1199 // loop_header_branch
          %1753 = sbr.rel (%p1751) target = $region1207
        $region1204: #{tpu_custom_call.1} parent=1199 // loop_body
          %v1757 = vld [vmem:[%s1755] sm:%s1748]
          %1758 = vst [vmem:[%s1756] sm:%s1748] %v1757
        $region1205: #{tpu_custom_call.1} parent=1199 // loop_footer
          %s1754 = sadd.s32 1, %s1750
        $region1206: #{tpu_custom_call.1} parent=1199 // loop_footer_branch
          %1749 = sbr.rel target = $region1202
        $region1207: #{tpu_custom_call.1} parent=1199 // loop_exit
          _
      $region1200: #{tpu_custom_call.1} parent=51 // pred_fallthru
        _
      // Predicated region
      $region1219: #{tpu_custom_call.1} parent=51 // pred_check
        _
      $region1220: #{tpu_custom_call.1} parent=51 // pred_check_branch
        %1775 = sbr.rel (0) target = $region1222
      $region1221: #{tpu_custom_call.1} parent=51 // pred_region
        %1776 = vsyncadd [#allocation3], 16
      $region1222: #{tpu_custom_call.1} parent=51 // pred_fallthru
        _
      %s1777 = sadd.s32 %s296, 39
      %s1778 = sld [smem:[#allocation5 + %s1777]]
      %s1779 = scalar_lea.vmem %s1, %s1778
      %s1780 = scalar_lea.vmem [#allocation2], 39
      // Predicated region
      $region1223: #{tpu_custom_call.1} parent=51 // pred_check
        _
      $region1224: #{tpu_custom_call.1} parent=51 // pred_check_branch
        %1782 = sbr.rel target = $region1226
      $region1225: #{tpu_custom_call.1} parent=51 // pred_region
        // Predicated region
        $region1238: #{tpu_custom_call.1} parent=1225 // pred_check
          _
        $region1239: #{tpu_custom_call.1} parent=1225 // pred_check_branch
          %1798 = sbr.rel (0) target = $region1241
        $region1240: #{tpu_custom_call.1} parent=1225 // pred_region
          %s1800 = ssub.s32 2, 1
          loop: start=0, step=1, limit=1
          $region1242: #{tpu_custom_call.1} parent=1240 // loop_pre_header
            _
          $region1243: #{tpu_custom_call.1} parent=1240 // loop_header
            %s1802 = sphi 0, %s1806
            %p1803 = scmp.ge.s32.totalorder %s1802, 1
            %s1807 = sphi %s1779, %s1779
            %s1808 = sphi %s1780, %s1780
          $region1244: #{tpu_custom_call.1} parent=1240 // loop_header_branch
            %1805 = sbr.rel (%p1803) target = $region1248
          $region1245: #{tpu_custom_call.1} parent=1240 // loop_body
            %v1809 = vld [vmem:[%s1807] sm:%s1800]
            %1810 = vst [vmem:[%s1808] sm:%s1800] %v1809
          $region1246: #{tpu_custom_call.1} parent=1240 // loop_footer
            %s1806 = sadd.s32 1, %s1802
          $region1247: #{tpu_custom_call.1} parent=1240 // loop_footer_branch
            %1801 = sbr.rel target = $region1243
          $region1248: #{tpu_custom_call.1} parent=1240 // loop_exit
            _
        $region1241: #{tpu_custom_call.1} parent=1225 // pred_fallthru
          _
      $region1226: #{tpu_custom_call.1} parent=51 // pred_fallthru
        _
      // Predicated region
      $region1227: #{tpu_custom_call.1} parent=51 // pred_check
        _
      $region1228: #{tpu_custom_call.1} parent=51 // pred_check_branch
        %1784 = sbr.rel (0) target = $region1230
      $region1229: #{tpu_custom_call.1} parent=51 // pred_region
        %s1786 = ssub.s32 2, 1
        loop: start=0, step=1, limit=1
        $region1231: #{tpu_custom_call.1} parent=1229 // loop_pre_header
          _
        $region1232: #{tpu_custom_call.1} parent=1229 // loop_header
          %s1788 = sphi 0, %s1792
          %p1789 = scmp.ge.s32.totalorder %s1788, 1
          %s1793 = sphi %s1779, %s1779
          %s1794 = sphi %s1780, %s1780
        $region1233: #{tpu_custom_call.1} parent=1229 // loop_header_branch
          %1791 = sbr.rel (%p1789) target = $region1237
        $region1234: #{tpu_custom_call.1} parent=1229 // loop_body
          %v1795 = vld [vmem:[%s1793] sm:%s1786]
          %1796 = vst [vmem:[%s1794] sm:%s1786] %v1795
        $region1235: #{tpu_custom_call.1} parent=1229 // loop_footer
          %s1792 = sadd.s32 1, %s1788
        $region1236: #{tpu_custom_call.1} parent=1229 // loop_footer_branch
          %1787 = sbr.rel target = $region1232
        $region1237: #{tpu_custom_call.1} parent=1229 // loop_exit
          _
      $region1230: #{tpu_custom_call.1} parent=51 // pred_fallthru
        _
      // Predicated region
      $region1249: #{tpu_custom_call.1} parent=51 // pred_check
        _
      $region1250: #{tpu_custom_call.1} parent=51 // pred_check_branch
        %1813 = sbr.rel (0) target = $region1252
      $region1251: #{tpu_custom_call.1} parent=51 // pred_region
        %1814 = vsyncadd [#allocation3], 16
      $region1252: #{tpu_custom_call.1} parent=51 // pred_fallthru
        _
      %s1815 = smul.u32 1, 1
      %s1816 = sshll.u32 %s1815, 4
      %1817 = dma.done [#allocation3], %s1816
      %s1818 = sshll.u32 %s1815, 4
      %1819 = dma.done [#allocation3], %s1818
      %s1820 = sshll.u32 %s1815, 4
      %1821 = dma.done [#allocation3], %s1820
      %s1822 = sshll.u32 %s1815, 4
      %1823 = dma.done [#allocation3], %s1822
      %s1824 = sshll.u32 %s1815, 4
      %1825 = dma.done [#allocation3], %s1824
      %s1826 = sshll.u32 %s1815, 4
      %1827 = dma.done [#allocation3], %s1826
      %s1828 = sshll.u32 %s1815, 4
      %1829 = dma.done [#allocation3], %s1828
      %s1830 = sshll.u32 %s1815, 4
      %1831 = dma.done [#allocation3], %s1830
      %s1832 = sshll.u32 %s1815, 4
      %1833 = dma.done [#allocation3], %s1832
      %s1834 = sshll.u32 %s1815, 4
      %1835 = dma.done [#allocation3], %s1834
      %s1836 = sshll.u32 %s1815, 4
      %1837 = dma.done [#allocation3], %s1836
      %s1838 = sshll.u32 %s1815, 4
      %1839 = dma.done [#allocation3], %s1838
      %s1840 = sshll.u32 %s1815, 4
      %1841 = dma.done [#allocation3], %s1840
      %s1842 = sshll.u32 %s1815, 4
      %1843 = dma.done [#allocation3], %s1842
      %s1844 = sshll.u32 %s1815, 4
      %1845 = dma.done [#allocation3], %s1844
      %s1846 = sshll.u32 %s1815, 4
      %1847 = dma.done [#allocation3], %s1846
      %s1848 = sshll.u32 %s1815, 4
      %1849 = dma.done [#allocation3], %s1848
      %s1850 = sshll.u32 %s1815, 4
      %1851 = dma.done [#allocation3], %s1850
      %s1852 = sshll.u32 %s1815, 4
      %1853 = dma.done [#allocation3], %s1852
      %s1854 = sshll.u32 %s1815, 4
      %1855 = dma.done [#allocation3], %s1854
      %s1856 = sshll.u32 %s1815, 4
      %1857 = dma.done [#allocation3], %s1856
      %s1858 = sshll.u32 %s1815, 4
      %1859 = dma.done [#allocation3], %s1858
      %s1860 = sshll.u32 %s1815, 4
      %1861 = dma.done [#allocation3], %s1860
      %s1862 = sshll.u32 %s1815, 4
      %1863 = dma.done [#allocation3], %s1862
      %s1864 = sshll.u32 %s1815, 4
      %1865 = dma.done [#allocation3], %s1864
      %s1866 = sshll.u32 %s1815, 4
      %1867 = dma.done [#allocation3], %s1866
      %s1868 = sshll.u32 %s1815, 4
      %1869 = dma.done [#allocation3], %s1868
      %s1870 = sshll.u32 %s1815, 4
      %1871 = dma.done [#allocation3], %s1870
      %s1872 = sshll.u32 %s1815, 4
      %1873 = dma.done [#allocation3], %s1872
      %s1874 = sshll.u32 %s1815, 4
      %1875 = dma.done [#allocation3], %s1874
      %s1876 = sshll.u32 %s1815, 4
      %1877 = dma.done [#allocation3], %s1876
      %s1878 = sshll.u32 %s1815, 4
      %1879 = dma.done [#allocation3], %s1878
      %s1880 = sshll.u32 %s1815, 4
      %1881 = dma.done [#allocation3], %s1880
      %s1882 = sshll.u32 %s1815, 4
      %1883 = dma.done [#allocation3], %s1882
      %s1884 = sshll.u32 %s1815, 4
      %1885 = dma.done [#allocation3], %s1884
      %s1886 = sshll.u32 %s1815, 4
      %1887 = dma.done [#allocation3], %s1886
      %s1888 = sshll.u32 %s1815, 4
      %1889 = dma.done [#allocation3], %s1888
      %s1890 = sshll.u32 %s1815, 4
      %1891 = dma.done [#allocation3], %s1890
      %s1892 = sshll.u32 %s1815, 4
      %1893 = dma.done [#allocation3], %s1892
      %s1894 = sshll.u32 %s1815, 4
      %1895 = dma.done [#allocation3], %s1894
      %v1896 = vld [vmem:[#allocation2] sm:$0xff]
      %v1897 = vld [vmem:[#allocation2 + $0x8] sm:$0xff]
      %v1898 = vld [vmem:[#allocation2 + $0x10] sm:$0xff]
      %v1899 = vld [vmem:[#allocation2 + $0x18] sm:$0xff]
      %v1900 = vld [vmem:[#allocation2 + $0x20] sm:$0xff]
      %v1901 = vadd.f32 %v1896, 0.0
      %1903 = vrot.lane.b32.xlu0 %v1896, 127
      %v1904 = vpop.permute.xlu0 %1903
      %vm1906 = vcmask 64512
      %v1907 = vsel %vm1906, %v1904, 0.0
      %1908 = vadd.xlane.f32.xlu0 %v1907
      %v1909 = vpop.xlane.xlu0 %1908
      %v1910 = vmul.f32 %v1909, %v1909
      %v1911 = vadd.f32 %v1910, 0.0
      %v1912 = vmul.f32 %v1896, %v1896
      %1914 = vrot.lane.b32.xlu0 %v1912, 127
      %v1915 = vpop.permute.xlu0 %1914
      %v1917 = vsel %vm1906, %v1915, 0.0
      %1918 = vadd.xlane.f32.xlu0 %v1917
      %v1919 = vpop.xlane.xlu0 %1918
      %v1920 = vsub.f32 %v1911, %v1919
      %v1921 = vld [vmem:[%s2] sm:$0xff]
      %v1922 = vld [vmem:[%s2 + $0x8] sm:$0x1]
      %v1923 = vadd.f32 %v1901, %v1897
      %1925 = vrot.lane.b32.xlu0 %v1897, 127
      %v1926 = vpop.permute.xlu0 %1925
      %v1928 = vsel %vm1906, %v1926, 0.0
      %1929 = vadd.xlane.f32.xlu0 %v1928
      %v1930 = vpop.xlane.xlu0 %1929
      %v1931 = vmul.f32 %v1930, %v1930
      %v1932 = vadd.f32 %v1920, %v1931
      %v1933 = vmul.f32 %v1897, %v1897
      %1935 = vrot.lane.b32.xlu0 %v1933, 127
      %v1936 = vpop.permute.xlu0 %1935
      %v1938 = vsel %vm1906, %v1936, 0.0
      %1939 = vadd.xlane.f32.xlu0 %v1938
      %v1940 = vpop.xlane.xlu0 %1939
      %v1941 = vsub.f32 %v1932, %v1940
      %s1942 = scalar_lea.vmem %s2, 16
      %v1943 = vld [vmem:[%s1942] sm:$0xff]
      %v1944 = vld [vmem:[%s1942 + $0x8] sm:$0x1]
      %vm1945 = vcmask 72704
      %v1946 = vsel %vm1945, %v1897, 0
      %vm1948 = vcmask 1040384
      %v1950 = vsel %vm1948, %v1944, 0
      %1952 = vmatpush.msra.mxu0 0.0
      %1953 = vmatpush.msra.mxu0 0.0
      %1954 = vmatpush.msra.mxu0 0.0
      %1955 = vmatpush.msra.mxu0 0.0
      %1956 = vmatpush.msra.mxu0 0.0
      %1957 = vmatpush.msra.mxu0 0.0
      %1958 = vmatpush.msra.mxu0 0.0
      %1959 = vmatpush.msra.mxu0 0.0
      %1960 = vmatpush.msra.mxu0 0.0
      %1961 = vmatpush.msra.mxu0 0.0
      %1962 = vmatpush.msra.mxu0 0.0
      %1963 = vmatpush.msra.mxu0 0.0
      %1964 = vmatpush.msra.mxu0 0.0
      %1965 = vmatpush.msra.mxu0 0.0
      %1966 = vmatpush.msra.mxu0 %v1950
      %1967 = vmatpush.msra.mxu0 %v1943
      %1968 = vmatmul.f32.gmra.mxu0 %v1946
      %v1969 = vpop.f32.mrf.mxu0
      %v1970 = vadd.f32 0.0, %v1969
      %1971 = vdwg.mxu0
      %v1972 = vsel %vm1945, %v1896, 0
      %v1975 = vsel %vm1948, %v1922, 0
      %1977 = vmatpush.msra.mxu0 0.0
      %1978 = vmatpush.msra.mxu0 0.0
      %1979 = vmatpush.msra.mxu0 0.0
      %1980 = vmatpush.msra.mxu0 0.0
      %1981 = vmatpush.msra.mxu0 0.0
      %1982 = vmatpush.msra.mxu0 0.0
      %1983 = vmatpush.msra.mxu0 0.0
      %1984 = vmatpush.msra.mxu0 0.0
      %1985 = vmatpush.msra.mxu0 0.0
      %1986 = vmatpush.msra.mxu0 0.0
      %1987 = vmatpush.msra.mxu0 0.0
      %1988 = vmatpush.msra.mxu0 0.0
      %1989 = vmatpush.msra.mxu0 0.0
      %1990 = vmatpush.msra.mxu0 0.0
      %1991 = vmatpush.msra.mxu0 %v1975
      %1992 = vmatpush.msra.mxu0 %v1921
      %1993 = vmatmul.f32.gmra.mxu0 %v1972
      %v1994 = vpop.f32.mrf.mxu0
      %v1995 = vadd.f32 %v1970, %v1994
      %1996 = vdwg.mxu0
      %v1997 = vadd.f32 %v1923, %v1898
      %1999 = vrot.lane.b32.xlu0 %v1898, 127
      %v2000 = vpop.permute.xlu0 %1999
      %v2002 = vsel %vm1906, %v2000, 0.0
      %2003 = vadd.xlane.f32.xlu0 %v2002
      %v2004 = vpop.xlane.xlu0 %2003
      %v2005 = vmul.f32 %v2004, %v2004
      %v2006 = vadd.f32 %v1941, %v2005
      %v2007 = vmul.f32 %v1898, %v1898
      %2009 = vrot.lane.b32.xlu0 %v2007, 127
      %v2010 = vpop.permute.xlu0 %2009
      %v2012 = vsel %vm1906, %v2010, 0.0
      %2013 = vadd.xlane.f32.xlu0 %v2012
      %v2014 = vpop.xlane.xlu0 %2013
      %v2015 = vsub.f32 %v2006, %v2014
      %s2016 = scalar_lea.vmem %s2, 32
      %v2017 = vld [vmem:[%s2016] sm:$0xff]
      %v2018 = vld [vmem:[%s2016 + $0x8] sm:$0x1]
      %v2019 = vsel %vm1945, %v1898, 0
      %v2022 = vsel %vm1948, %v2018, 0
      %2024 = vmatpush.msra.mxu0 0.0
      %2025 = vmatpush.msra.mxu0 0.0
      %2026 = vmatpush.msra.mxu0 0.0
      %2027 = vmatpush.msra.mxu0 0.0
      %2028 = vmatpush.msra.mxu0 0.0
      %2029 = vmatpush.msra.mxu0 0.0
      %2030 = vmatpush.msra.mxu0 0.0
      %2031 = vmatpush.msra.mxu0 0.0
      %2032 = vmatpush.msra.mxu0 0.0
      %2033 = vmatpush.msra.mxu0 0.0
      %2034 = vmatpush.msra.mxu0 0.0
      %2035 = vmatpush.msra.mxu0 0.0
      %2036 = vmatpush.msra.mxu0 0.0
      %2037 = vmatpush.msra.mxu0 0.0
      %2038 = vmatpush.msra.mxu0 %v2022
      %2039 = vmatpush.msra.mxu0 %v2017
      %2040 = vmatmul.f32.gmra.mxu0 %v2019
      %v2041 = vpop.f32.mrf.mxu0
      %v2042 = vadd.f32 0.0, %v2041
      %2043 = vdwg.mxu0
      %v2044 = vadd.f32 %v1995, %v2042
      %v2045 = vadd.f32 %v1997, %v1899
      %2047 = vrot.lane.b32.xlu0 %v1899, 127
      %v2048 = vpop.permute.xlu0 %2047
      %v2050 = vsel %vm1906, %v2048, 0.0
      %2051 = vadd.xlane.f32.xlu0 %v2050
      %v2052 = vpop.xlane.xlu0 %2051
      %v2053 = vmul.f32 %v2052, %v2052
      %v2054 = vadd.f32 %v2015, %v2053
      %v2055 = vmul.f32 %v1899, %v1899
      %2057 = vrot.lane.b32.xlu0 %v2055, 127
      %v2058 = vpop.permute.xlu0 %2057
      %v2060 = vsel %vm1906, %v2058, 0.0
      %2061 = vadd.xlane.f32.xlu0 %v2060
      %v2062 = vpop.xlane.xlu0 %2061
      %v2063 = vsub.f32 %v2054, %v2062
      %s2064 = scalar_lea.vmem %s2, 48
      %v2065 = vld [vmem:[%s2064] sm:$0xff]
      %v2066 = vld [vmem:[%s2064 + $0x8] sm:$0x1]
      %v2067 = vsel %vm1945, %v1899, 0
      %v2070 = vsel %vm1948, %v2066, 0
      %2072 = vmatpush.msra.mxu0 0.0
      %2073 = vmatpush.msra.mxu0 0.0
      %2074 = vmatpush.msra.mxu0 0.0
      %2075 = vmatpush.msra.mxu0 0.0
      %2076 = vmatpush.msra.mxu0 0.0
      %2077 = vmatpush.msra.mxu0 0.0
      %2078 = vmatpush.msra.mxu0 0.0
      %2079 = vmatpush.msra.mxu0 0.0
      %2080 = vmatpush.msra.mxu0 0.0
      %2081 = vmatpush.msra.mxu0 0.0
      %2082 = vmatpush.msra.mxu0 0.0
      %2083 = vmatpush.msra.mxu0 0.0
      %2084 = vmatpush.msra.mxu0 0.0
      %2085 = vmatpush.msra.mxu0 0.0
      %2086 = vmatpush.msra.mxu0 %v2070
      %2087 = vmatpush.msra.mxu0 %v2065
      %2088 = vmatmul.f32.gmra.mxu0 %v2067
      %v2089 = vpop.f32.mrf.mxu0
      %v2090 = vadd.f32 0.0, %v2089
      %2091 = vdwg.mxu0
      %v2092 = vadd.f32 %v2044, %v2090
      %v2093 = vadd.f32 %v2045, %v1900
      %2095 = vrot.lane.b32.xlu0 %v1900, 127
      %v2096 = vpop.permute.xlu0 %2095
      %v2098 = vsel %vm1906, %v2096, 0.0
      %2099 = vadd.xlane.f32.xlu0 %v2098
      %v2100 = vpop.xlane.xlu0 %2099
      %v2101 = vmul.f32 %v2100, %v2100
      %v2102 = vadd.f32 %v2063, %v2101
      %v2103 = vmul.f32 %v1900, %v1900
      %2105 = vrot.lane.b32.xlu0 %v2103, 127
      %v2106 = vpop.permute.xlu0 %2105
      %v2108 = vsel %vm1906, %v2106, 0.0
      %2109 = vadd.xlane.f32.xlu0 %v2108
      %v2110 = vpop.xlane.xlu0 %2109
      %v2111 = vsub.f32 %v2102, %v2110
      %s2112 = scalar_lea.vmem %s2, 64
      %v2113 = vld [vmem:[%s2112] sm:$0xff]
      %v2114 = vld [vmem:[%s2112 + $0x8] sm:$0x1]
      %v2115 = vsel %vm1945, %v1900, 0
      %v2118 = vsel %vm1948, %v2114, 0
      %2120 = vmatpush.msra.mxu0 0.0
      %2121 = vmatpush.msra.mxu0 0.0
      %2122 = vmatpush.msra.mxu0 0.0
      %2123 = vmatpush.msra.mxu0 0.0
      %2124 = vmatpush.msra.mxu0 0.0
      %2125 = vmatpush.msra.mxu0 0.0
      %2126 = vmatpush.msra.mxu0 0.0
      %2127 = vmatpush.msra.mxu0 0.0
      %2128 = vmatpush.msra.mxu0 0.0
      %2129 = vmatpush.msra.mxu0 0.0
      %2130 = vmatpush.msra.mxu0 0.0
      %2131 = vmatpush.msra.mxu0 0.0
      %2132 = vmatpush.msra.mxu0 0.0
      %2133 = vmatpush.msra.mxu0 0.0
      %2134 = vmatpush.msra.mxu0 %v2118
      %2135 = vmatpush.msra.mxu0 %v2113
      %2136 = vmatmul.f32.gmra.mxu0 %v2115
      %v2137 = vpop.f32.mrf.mxu0
      %v2138 = vadd.f32 0.0, %v2137
      %2139 = vdwg.mxu0
      %v2140 = vadd.f32 %v2092, %v2138
      %v2141 = vmul.f32 %v2111, 0.5
      %v2142 = vadd.f32 %v2093, %v2141
      %v2143 = vld [vmem:[%s3] sm:$0x1]
      %v2145 = vperm.slane %v2143, 0
      %v2147 = vadd.f32 %v2140, %v2145
      %v2148 = vmax.f32 %v2147, 0.0
      %v2149 = vpack.c.bf16 %v2148, %v2148
      %v2150 = vld [vmem:[%s4] sm:$0xf]
      %v2151 = vld [vmem:[%s4 + $0x4] sm:$0xf]
      %v2152 = vld [vmem:[%s4 + $0x8] sm:$0xf]
      %v2153 = vld [vmem:[%s4 + $0xc] sm:$0xf]
      %v2154 = vld [vmem:[%s5] sm:$0x1]
      %v2156 = vperm.slane %v2154, 0
      %v2162 = vunpack.c.l.b16 %v2150
      %v2163 = vunpack.c.l.b16 %v2151
      %v2164 = vunpack.c.l.b16 %v2152
      %v2165 = vunpack.c.l.b16 %v2153
      %v2166 = vpack.c.b16 %v2163, %v2162
      %v2167 = vpack.c.b16 %v2165, %v2164
      %vm2170 = vcmask 261120
      %v2172 = vsel %vm2170, %v2149, 0
      %2174 = vmatpush.bf16.msra.mxu0 0
      %2175 = vmatpush.bf16.msra.mxu0 0
      %2176 = vmatpush.bf16.msra.mxu0 0
      %2177 = vmatpush.bf16.msra.mxu0 0
      %2178 = vmatpush.bf16.msra.mxu0 0
      %2179 = vmatpush.bf16.msra.mxu0 0
      %2180 = vmatpush.bf16.msra.mxu0 %v2167
      %2181 = vmatpush.bf16.msra.mxu0 %v2166
      %2182 = vmatmul.bf16.gmra.mxu0 %v2172
      %v2183 = vpop.f32.mrf.mxu0
      %v2184 = vadd.f32 %v2156, %v2183
      %v2185 = vpop.f32.mrf.mxu0
      %2186 = vdwg.mxu0
      %v2187 = vmax.f32 %v2184, 0.0
      %v2188 = vpack.c.bf16 %v2187, %v2187
      %v2189 = vld [vmem:[%s6] sm:$0xf]
      %v2190 = vld [vmem:[%s6 + $0x4] sm:$0xf]
      %v2191 = vld [vmem:[%s6 + $0x8] sm:$0xf]
      %v2192 = vld [vmem:[%s6 + $0xc] sm:$0xf]
      %v2193 = vld [vmem:[%s7] sm:$0x1]
      %v2195 = vperm.slane %v2193, 0
      %v2201 = vunpack.c.l.b16 %v2189
      %v2202 = vunpack.c.l.b16 %v2190
      %v2203 = vunpack.c.l.b16 %v2191
      %v2204 = vunpack.c.l.b16 %v2192
      %v2205 = vpack.c.b16 %v2202, %v2201
      %v2206 = vpack.c.b16 %v2204, %v2203
      %v2210 = vsel %vm2170, %v2188, 0
      %2212 = vmatpush.bf16.msra.mxu0 0
      %2213 = vmatpush.bf16.msra.mxu0 0
      %2214 = vmatpush.bf16.msra.mxu0 0
      %2215 = vmatpush.bf16.msra.mxu0 0
      %2216 = vmatpush.bf16.msra.mxu0 0
      %2217 = vmatpush.bf16.msra.mxu0 0
      %2218 = vmatpush.bf16.msra.mxu0 %v2206
      %2219 = vmatpush.bf16.msra.mxu0 %v2205
      %2220 = vmatmul.bf16.gmra.mxu0 %v2210
      %v2221 = vpop.f32.mrf.mxu0
      %v2222 = vadd.f32 %v2195, %v2221
      %v2223 = vpop.f32.mrf.mxu0
      %2224 = vdwg.mxu0
      %v2225 = vmax.f32 %v2222, 0.0
      %v2226 = vld [vmem:[%s8] sm:$0x1]
      %v2228 = vperm.slane %v2226, 0
      %v2230 = vmul.f32 %v2225, %v2228
      %v2231 = vsel %vm2170, %v2230, 0.0
      %2232 = vadd.xlane.f32.xlu0 %v2231
      %v2233 = vpop.xlane.xlu0 %2232
      %v2234 = vadd.f32 %v2142, %v2233
      %s2235 = sld [smem:[#allocation6]]
      %v2236 = vstv %s2235
      %v2237 = vadd.f32 %v2234, %v2236
      %vm2238 = vcmask 7168
      %2239 = vst.msk [vmem:[%s294] sm:$0xff] %vm2238, %v2237
      %p2240 = scmp.lt.s32.totalorder %s30, 1
      %s2241 = scalar_select %p2240, %s30, 1
      %s2242 = smul.addr %s2241, 8
      %s2243 = scalar_lea.vmem %s10, %s2242
      // Predicated region
      $region1253: #{tpu_custom_call.1} parent=51 // pred_check
        %p2244 = pneg %p216
      $region1254: #{tpu_custom_call.1} parent=51 // pred_check_branch
        %2246 = sbr.rel (%p2244) target = $region1256
      $region1255: #{tpu_custom_call.1} parent=51 // pred_region
        _
      $region1256: #{tpu_custom_call.1} parent=51 // pred_fallthru
        _
    $region52: #{tpu_custom_call.1} parent=5 // pred_fallthru
      _
    %p2247 = scmp.le.s32.totalorder 2, %s25
    // Predicated region
    $region1257: #{tpu_custom_call.1} parent=5 // pred_check
      %p2248 = pneg %p2247
    $region1258: #{tpu_custom_call.1} parent=5 // pred_check_branch
      %2250 = sbr.rel (%p2248) target = $region1260
    $region1259: #{tpu_custom_call.1} parent=5 // pred_region
      %s2251 = ssub.s32 %s25, 2
      // Predicated region
      $region1261: #{tpu_custom_call.1} parent=1259 // pred_check
        %p2252 = pneg %p222
      $region1262: #{tpu_custom_call.1} parent=1259 // pred_check_branch
        %2254 = sbr.rel (%p2252) target = $region1264
      $region1263: #{tpu_custom_call.1} parent=1259 // pred_region
        %p2255 = scmp.lt.s32.totalorder %s31, 1
        %s2256 = scalar_select %p2255, %s31, 1
        %s2257 = smul.addr %s2256, 8
        %s2258 = scalar_lea.vmem %s10, %s2257
      $region1264: #{tpu_custom_call.1} parent=1259 // pred_fallthru
        _
    $region1260: #{tpu_custom_call.1} parent=5 // pred_fallthru
      _
  $region6: #{tpu_custom_call.1} parent=0 // loop_footer
    %s29 = sadd.s32 1, %s25
  $region7: #{tpu_custom_call.1} parent=0 // loop_footer_branch
    %24 = sbr.rel target = $region3
  $region8: #{tpu_custom_call.1} parent=0 // loop_exit
    _
  %2259 = vsyncmov [#allocation3]
  %s2260 = vpop.sfrf %2259
  %p2261 = scmp.eq.s32.totalorder %s2260, 0
  %p2262 = pneg %p2261
  %2264 = shalt.err (%p2262)

</llo_original>
